<compile_context>
chip_gen: v7x
topology: tpu7x:2x2x1
jax: 0.10.0
libtpu: 0.0.40
codegen_flags: <defaults>
</compile_context>

<pallas_src>
import numpy as np

import jax
import jax.numpy as jnp
from jax import lax
from jax.experimental import pallas as pl
from jax.experimental.pallas import tpu as pltpu


_L_IN = 30       # input length (the only length that round-trips this AE)
_L_CODE = 3      # bottleneck size
_N_LAYERS = 10
_CODE_LAYER = 4  # output of this (0-based) layer is the bottleneck `extra_out`

_SUB = 256       # lanes per inner sub-slice (bounds live activation vregs)
_MAX_TILE = 2048 # per-grid-step batch rows (VMEM stays < ~1 MiB incl. buffers)


def _round_up(n, m):
    return -(-n // m) * m


# ----------------------------------------------------------------------------
# Static layout of the single packed weight slab.
# Per layer: augmented dense matrix of shape (m, k) where
#   layers 1..8 : [[W, b], [0, 1]]   (bias column + "ones"-row propagation)
#   layer  0    : [[W], [0]]         (bias applied explicitly, seeds ones row)
#   layer  9    : [[W, b]]           (bias column, no propagation needed)
# plus the layer-0 bias stored both as a column block and as a row block
# (used by the lane-major / sublane-major kernel variants respectively).
# ----------------------------------------------------------------------------
_LAYER_MK = [(53, 30), (41, 53), (49, 41), (17, 49), (4, 17),
             (17, 4), (49, 17), (41, 49), (53, 41), (30, 53)]
_SLAB_W = 64

_W_OFFS = []
_r = 0
for _m, _ in _LAYER_MK:
    _W_OFFS.append(_r)
    _r += _round_up(_m, 16)          # 16-row alignment (bf16 sublane packing)
_B0_COL_OFF = _r                     # (53, 1) layer-0 bias column block
_r += _round_up(_LAYER_MK[0][0], 16)
_B0_ROW_OFF = _r                     # (1, 53) layer-0 bias row block
_r += 16
_SLAB_ROWS = _r


# ----------------------------------------------------------------------------
# Fused kernel: the whole 10-layer network for one batch tile.
# ----------------------------------------------------------------------------
def _make_kernel(lane_major):
    """Build the fused forward kernel.

    lane_major=True : activations are (features, batch) with batch on lanes
      (best MXU orientation); input flip fused into layer 0, outputs
      transposed in-kernel before their stores.
    lane_major=False: activations stay (batch, features); every layer is an
      A @ B^T contraction.  No transposes anywhere (fallback variant).
    """
    m0 = _LAYER_MK[0][0]

    def kernel(x_ref, w_ref, recon_ref, code_ref):
        tile = x_ref.shape[0]
        sub = tile if tile <= _SUB else _SUB
        nt = (((1,), (1,)), ((), ()))        # contract both operands' last dim

        # Statically unrolled sub-slice loop: bounds live activation vregs
        # (h is at most (53, 256) f32) and lets sub-slice j+1's first matmul
        # overlap sub-slice j's result drain.
        for j in range(tile // sub):
            lo, hi = j * sub, (j + 1) * sub
            xs = x_ref[lo:hi, :].astype(jnp.bfloat16)          # (sub, 30)
            h = None
            for i, ((m, k), off) in enumerate(zip(_LAYER_MK, _W_OFFS)):
                w = w_ref[off:off + m, 0:k]                    # bf16 (m, k)
                if i == 0:
                    if lane_major:
                        # y = W0 @ x^T  (transposed contraction, QK^T form)
                        y = lax.dot_general(
                            w, xs, nt, preferred_element_type=jnp.float32)
                        b0 = w_ref[_B0_COL_OFF:_B0_COL_OFF + m0, 0:1]
                    else:
                        y = lax.dot_general(
                            xs, w, nt, preferred_element_type=jnp.float32)
                        b0 = w_ref[_B0_ROW_OFF:_B0_ROW_OFF + 1, 0:m0]
                    # Layer-0 bias; its last entry (1.0) seeds the "ones" row
                    # that carries every later layer's bias through the MXU.
                    y = y + b0.astype(jnp.float32)
                else:
                    hb = h.astype(jnp.bfloat16)
                    if lane_major:
                        y = jnp.dot(w, hb, preferred_element_type=jnp.float32)
                    else:
                        y = lax.dot_general(
                            hb, w, nt, preferred_element_type=jnp.float32)
                if i < _N_LAYERS - 1:
                    h = jnp.maximum(y, 0.0)                    # ReLU (VPU)
                else:
                    h = 0.5 * jnp.tanh(0.5 * y) + 0.5          # sigmoid, 1 EUP op
                if i == _CODE_LAYER:
                    if lane_major:
                        code_ref[lo:hi, :] = jnp.transpose(h[0:_L_CODE, :], (1, 0))
                    else:
                        code_ref[lo:hi, :] = h[:, 0:_L_CODE]
            if lane_major:
                recon_ref[lo:hi, :] = jnp.transpose(h, (1, 0))
            else:
                recon_ref[lo:hi, :] = h

    return kernel


def _pick_batch_tile(batch):
    b = _round_up(max(batch, 1), 128)
    if b <= 256:
        return 128                 # tiny batches: 1-2 lane-aligned grid steps
    if b < 1024:
        # favour >= 2 grid steps (v7x has two TensorCores) over a >= 512 tile
        return max(128, (b // 2) // 256 * 256)
    # Large batches: tile >= 512 feeds all four v5e MXUs and amortizes the
    # ~0.35us/step pipeline overhead; capped at half the padded batch so the
    # "parallel" grid keeps both v7x TensorCores busy, and at _MAX_TILE so
    # per-block VMEM stays tiny on every generation.
    return min(_MAX_TILE, (b // 2) // 512 * 512)


def _forward(params, x, lane_major):
    """x: (B, 1, 30) f32 -> (recon (B, 1, 30), code (B, 3)). One pallas_call."""
    B = x.shape[0]
    x2 = x.reshape(B, _L_IN)                      # degenerate reshape: free
    tile = _pick_batch_tile(B)
    Bp = _round_up(B, tile)
    if Bp != B:                                   # pad, never a ragged block
        x2 = jnp.pad(x2, ((0, Bp - B), (0, 0)))
    slab = params["slab"]

    recon, code = pl.pallas_call(
        _make_kernel(lane_major),
        out_shape=(jax.ShapeDtypeStruct((Bp, _L_IN), jnp.float32),
                   jax.ShapeDtypeStruct((Bp, _L_CODE), jnp.float32)),
        grid=(Bp // tile,),
        in_specs=[pl.BlockSpec((tile, _L_IN), lambda i: (i, 0)),
                  pl.BlockSpec((_SLAB_ROWS, _SLAB_W), lambda i: (0, 0))],
        out_specs=(pl.BlockSpec((tile, _L_IN), lambda i: (i, 0)),
                   pl.BlockSpec((tile, _L_CODE), lambda i: (i, 0))),
        compiler_params=pltpu.CompilerParams(
            dimension_semantics=("parallel",)),
    )(x2, slab)

    if Bp != B:
        recon = recon[:B]
        code = code[:B]
    return recon.reshape(B, 1, _L_IN), code


_LANE_MAJOR_OK = None


def _lane_major_supported():
    """One-time probe: does the batch-on-lanes variant (in-kernel f32
    transposes before the output stores) lower on this backend?"""
    global _LANE_MAJOR_OK
    if _LANE_MAJOR_OK is None:
        try:
            zp = {"slab": jnp.zeros((_SLAB_ROWS, _SLAB_W), jnp.bfloat16)}
            zx = jnp.zeros((4, 1, _L_IN), jnp.float32)
            jax.block_until_ready(_forward(zp, zx, True))
            _LANE_MAJOR_OK = True
        except Exception:
            _LANE_MAJOR_OK = False
    return _LANE_MAJOR_OK


def cae2_forward(params, x):
    return _forward(params, x, _lane_major_supported())


# ----------------------------------------------------------------------------
# One-time parameter lowering: conv/deconv -> dense, biases folded, one slab.
# ----------------------------------------------------------------------------
def _conv1d_as_matrix(w, l_in, stride):
    """PyTorch Conv1d weight (Co, Ci, K) -> dense (Co*Lout, Ci*Lin)."""
    co_n, ci_n, k_n = w.shape
    l_out = (l_in - k_n) // stride + 1
    m = np.zeros((co_n * l_out, ci_n * l_in), np.float32)
    for co in range(co_n):
        for lo in range(l_out):
            for ci in range(ci_n):
                for k in range(k_n):
                    m[co * l_out + lo, ci * l_in + lo * stride + k] = w[co, ci, k]
    return m, l_out


def _conv_transpose1d_as_matrix(w, l_in, stride, output_padding):
    """PyTorch ConvTranspose1d weight (Ci, Co, K) -> dense (Co*Lout, Ci*Lin)."""
    ci_n, co_n, k_n = w.shape
    l_out = (l_in - 1) * stride + k_n + output_padding
    m = np.zeros((co_n * l_out, ci_n * l_in), np.float32)
    for ci in range(ci_n):
        for co in range(co_n):
            for li in range(l_in):
                for k in range(k_n):
                    m[co * l_out + li * stride + k, ci * l_in + li] += w[ci, co, k]
    return m, l_out


def prepare_fused_params(raw):
    """Fold all layers into dense matrices, fold biases into an extra column
    (driven by a propagated ones row), pack everything into one bf16 slab."""
    p = {k: np.asarray(v, np.float32) for k, v in raw.items()}
    ws, bs = [], []

    m, l = _conv1d_as_matrix(p["conv1_w"], _L_IN, 2)
    ws.append(m); bs.append(np.repeat(p["conv1_b"], l))
    m, l = _conv1d_as_matrix(p["conv2_w"], l, 2)
    ws.append(m); bs.append(np.repeat(p["conv2_b"], l))
    m, l = _conv1d_as_matrix(p["conv3_w"], l, 1)
    ws.append(m); bs.append(np.repeat(p["conv3_b"], l))
    for name in ("embedding1", "embedding", "deembedding", "deembedding1"):
        ws.append(p[name + "_w"]); bs.append(p[name + "_b"])
    m, l = _conv_transpose1d_as_matrix(p["deconv3_w"], 3, 1, 0)
    ws.append(m); bs.append(np.repeat(p["deconv3_b"], l))
    m, l = _conv_transpose1d_as_matrix(p["deconv2_w"], l, 2, 0)
    ws.append(m); bs.append(np.repeat(p["deconv2_b"], l))
    m, l = _conv_transpose1d_as_matrix(p["deconv1_w"], l, 2, 1)
    ws.append(m); bs.append(np.repeat(p["deconv1_b"], l))

    slab = np.zeros((_SLAB_ROWS, _SLAB_W), np.float32)
    for i, (w, b) in enumerate(zip(ws, bs)):
        mo, ki = w.shape
        m_aug, k_aug = _LAYER_MK[i]
        exp_m = mo + (1 if i < _N_LAYERS - 1 else 0)
        exp_k = ki + (1 if i >= 1 else 0)
        assert (exp_m, exp_k) == (m_aug, k_aug), (i, exp_m, exp_k, m_aug, k_aug)
        off = _W_OFFS[i]
        slab[off:off + mo, :ki] = w
        if i == 0:
            continue                         # layer-0 bias lives in the b0 blocks
        slab[off:off + mo, ki] = b           # bias column
        if i < _N_LAYERS - 1:
            slab[off + mo, ki] = 1.0         # propagate the ones row
    b0_aug = np.concatenate([bs[0], np.ones((1,), np.float32)])   # (53,)
    slab[_B0_COL_OFF:_B0_COL_OFF + b0_aug.size, 0] = b0_aug
    slab[_B0_ROW_OFF, :b0_aug.size] = b0_aug

    return {"slab": jnp.asarray(slab, jnp.bfloat16)}


# ----------------------------------------------------------------------------
# Deterministic parameter init (PyTorch-style uniform(-1/sqrt(fan_in), ...))
# ----------------------------------------------------------------------------
def _init_params():
    key = jax.random.PRNGKey(0)
    params = {}

    def add(name, shape, fan_in):
        nonlocal key
        key, kw, kb = jax.random.split(key, 3)
        bound = 1.0 / float(np.sqrt(fan_in))
        params[name + "_w"] = jax.random.uniform(
            kw, shape, jnp.float32, -bound, bound)
        out_dim = shape[1] if (len(shape) == 3 and name.startswith("deconv")) else shape[0]
        params[name + "_b"] = jax.random.uniform(
            kb, (out_dim,), jnp.float32, -bound, bound)

    add("conv1", (4, 1, 5), 1 * 5)
    add("conv2", (8, 4, 5), 4 * 5)
    add("conv3", (16, 8, 3), 8 * 3)
    add("embedding1", (16, 48), 48)
    add("embedding", (3, 16), 16)
    add("deembedding", (16, 3), 3)
    add("deembedding1", (48, 16), 16)
    add("deconv3", (16, 8, 3), 8 * 3)   # ConvTranspose1d weight: (Cin, Cout, K)
    add("deconv2", (8, 4, 5), 4 * 5)
    add("deconv1", (4, 1, 5), 1 * 5)
    return params


# ----------------------------------------------------------------------------
# Pure-JAX reference (no Pallas) for the numerical cross-check.
# ----------------------------------------------------------------------------
def _ref_forward(raw, x):
    def conv1d(x, w, b, s):
        out = lax.conv_general_dilated(
            x, w, window_strides=(s,), padding="VALID",
            dimension_numbers=("NCH", "OIH", "NCH"))
        return out + b[None, :, None]

    def conv_t1d(x, w, b, s, op):
        ci, co, k = w.shape
        bsz, c, l = x.shape
        lup = (l - 1) * s + 1
        ups = jnp.zeros((bsz, c, lup), x.dtype).at[:, :, ::s].set(x)
        padded = jnp.pad(ups, ((0, 0), (0, 0), (k - 1, k - 1 + op)))
        wc = jnp.transpose(jnp.flip(w, axis=2), (1, 0, 2))
        return conv1d(padded, wc, b, 1)

    r = jax.nn.relu
    h = r(conv1d(x, raw["conv1_w"], raw["conv1_b"], 2))
    h = r(conv1d(h, raw["conv2_w"], raw["conv2_b"], 2))
    h = r(conv1d(h, raw["conv3_w"], raw["conv3_b"], 1))
    h = h.reshape(h.shape[0], -1)
    h = r(h @ raw["embedding1_w"].T + raw["embedding1_b"])
    h = r(h @ raw["embedding_w"].T + raw["embedding_b"])
    code = h
    h = r(h @ raw["deembedding_w"].T + raw["deembedding_b"])
    h = r(h @ raw["deembedding1_w"].T + raw["deembedding1_b"])
    h = h.reshape(h.shape[0], 16, 3)
    h = r(conv_t1d(h, raw["deconv3_w"], raw["deconv3_b"], 1, 0))
    h = r(conv_t1d(h, raw["deconv2_w"], raw["deconv2_b"], 2, 0))
    h = jax.nn.sigmoid(conv_t1d(h, raw["deconv1_w"], raw["deconv1_b"], 2, 1))
    return h, code


if __name__ == "__main__":
    raw = _init_params()
    params = prepare_fused_params(raw)        # one-time weight lowering

    lane_major = _lane_major_supported()      # resolve kernel variant once

    x = jax.random.uniform(jax.random.PRNGKey(0), (2, 1, _L_IN), jnp.float32)
    fwd = jax.jit(cae2_forward)
    recon, code = fwd(params, x)
    jax.block_until_ready((recon, code))

    assert recon.shape == (2, 1, _L_IN), recon.shape
    assert code.shape == (2, _L_CODE), code.shape
    assert bool(jnp.all(jnp.isfinite(recon)) & jnp.all(jnp.isfinite(code)))
    assert bool(jnp.all(recon >= 0.0) & jnp.all(recon <= 1.0))  # exact sigmoid range

    # Cross-check vs. the pure-JAX reference.  MXU operands are bf16
    # (f32 accumulation), so allow a few e-2 of drift.
    ref_recon, ref_code = jax.jit(_ref_forward)(raw, x)
    assert bool(jnp.allclose(code, ref_code, atol=5e-2, rtol=5e-2))
    assert bool(jnp.allclose(recon, ref_recon, atol=5e-2, rtol=5e-2))

    # Larger, non-tile-multiple batch: exercises batch padding, the multi-step
    # "parallel" grid and the unrolled sub-slice loop -- for both kernel
    # orientations when the lane-major variant is available.
    xb = jax.random.uniform(jax.random.PRNGKey(1), (1100, 1, _L_IN), jnp.float32)
    ref_rb, ref_cb = jax.jit(_ref_forward)(raw, xb)
    fwd2 = jax.jit(_forward, static_argnums=(2,))
    for lm in ((True, False) if lane_major else (False,)):
        rb, cb = fwd2(params, xb, lm)
        jax.block_until_ready((rb, cb))
        assert rb.shape == (1100, 1, _L_IN) and cb.shape == (1100, _L_CODE)
        assert bool(jnp.allclose(cb, ref_cb, atol=5e-2, rtol=5e-2))
        assert bool(jnp.allclose(rb, ref_rb, atol=5e-2, rtol=5e-2))

    print("KERNEL_OK")
</pallas_src>

<mosaic_0001>
module attributes {stable_mosaic.version = 11 : i64} {
  func.func @kernel(%arg0: i32, %arg1: memref<128x30xf32, #tpu.memory_space<vmem>>, %arg2: memref<544x64xbf16, #tpu.memory_space<vmem>>, %arg3: memref<128x30xf32, #tpu.memory_space<vmem>>, %arg4: memref<128x3xf32, #tpu.memory_space<vmem>>) attributes {dimension_semantics = [#tpu.dimension_semantics<parallel>], iteration_bounds = array<i64: 1>, scalar_prefetch = 0 : i64, scratch_operands = 0 : i64, tpu.core_type = #tpu.core_type<tc>, window_params = [{transform_indices = @transform_0, window_bounds = array<i64: 128, 30>}, {pipeline_mode = #tpu.pipeline_mode<synchronous>, transform_indices = @transform_1, window_bounds = array<i64: 544, 64>}, {transform_indices = @transform_2, window_bounds = array<i64: 128, 30>}, {transform_indices = @transform_3, window_bounds = array<i64: 128, 3>}]} {
    %c0 = arith.constant 0 : index
    %c0_0 = arith.constant 0 : index
    %0 = vector.load %arg1[%c0, %c0_0] : memref<128x30xf32, #tpu.memory_space<vmem>>, vector<128x30xf32>
    %1 = arith.truncf %0 : vector<128x30xf32> to vector<128x30xbf16>
    %c0_1 = arith.constant 0 : index
    %c0_2 = arith.constant 0 : index
    %2 = vector.load %arg2[%c0_1, %c0_2] : memref<544x64xbf16, #tpu.memory_space<vmem>>, vector<53x30xbf16>
    %cst = arith.constant dense<0.000000e+00> : vector<53x128xf32>
    %3 = tpu.matmul %2, %1, %cst {dimension_numbers = #tpu.dot_dimension_numbers<[1], [1], [0], [0], [0, 0, 1, 0], [], []>} : vector<53x30xbf16>, vector<128x30xbf16>, vector<53x128xf32> -> vector<53x128xf32>
    %c464 = arith.constant 464 : index
    %c0_3 = arith.constant 0 : index
    %4 = vector.load %arg2[%c464, %c0_3] : memref<544x64xbf16, #tpu.memory_space<vmem>>, vector<53x1xbf16>
    %5 = arith.extf %4 : vector<53x1xbf16> to vector<53x1xf32>
    %6 = vector.broadcast %5 : vector<53x1xf32> to vector<53x128xf32>
    %7 = arith.addf %3, %6 : vector<53x128xf32>
    %cst_4 = arith.constant 0.000000e+00 : f32
    %8 = vector.broadcast %cst_4 : f32 to vector<53x128xf32>
    %9 = arith.maximumf %7, %8 : vector<53x128xf32>
    %c64 = arith.constant 64 : index
    %c0_5 = arith.constant 0 : index
    %10 = vector.load %arg2[%c64, %c0_5] : memref<544x64xbf16, #tpu.memory_space<vmem>>, vector<41x53xbf16>
    %11 = arith.truncf %9 : vector<53x128xf32> to vector<53x128xbf16>
    %cst_6 = arith.constant dense<0.000000e+00> : vector<41x128xf32>
    %12 = tpu.matmul %10, %11, %cst_6 {dimension_numbers = #tpu.dot_dimension_numbers<[1], [0], [0], [1], [0, 0, 1, 1], [], []>} : vector<41x53xbf16>, vector<53x128xbf16>, vector<41x128xf32> -> vector<41x128xf32>
    %cst_7 = arith.constant 0.000000e+00 : f32
    %13 = vector.broadcast %cst_7 : f32 to vector<41x128xf32>
    %14 = arith.maximumf %12, %13 : vector<41x128xf32>
    %c112 = arith.constant 112 : index
    %c0_8 = arith.constant 0 : index
    %15 = vector.load %arg2[%c112, %c0_8] : memref<544x64xbf16, #tpu.memory_space<vmem>>, vector<49x41xbf16>
    %16 = arith.truncf %14 : vector<41x128xf32> to vector<41x128xbf16>
    %cst_9 = arith.constant dense<0.000000e+00> : vector<49x128xf32>
    %17 = tpu.matmul %15, %16, %cst_9 {dimension_numbers = #tpu.dot_dimension_numbers<[1], [0], [0], [1], [0, 0, 1, 1], [], []>} : vector<49x41xbf16>, vector<41x128xbf16>, vector<49x128xf32> -> vector<49x128xf32>
    %cst_10 = arith.constant 0.000000e+00 : f32
    %18 = vector.broadcast %cst_10 : f32 to vector<49x128xf32>
    %19 = arith.maximumf %17, %18 : vector<49x128xf32>
    %c176 = arith.constant 176 : index
    %c0_11 = arith.constant 0 : index
    %20 = vector.load %arg2[%c176, %c0_11] : memref<544x64xbf16, #tpu.memory_space<vmem>>, vector<17x49xbf16>
    %21 = arith.truncf %19 : vector<49x128xf32> to vector<49x128xbf16>
    %cst_12 = arith.constant dense<0.000000e+00> : vector<17x128xf32>
    %22 = tpu.matmul %20, %21, %cst_12 {dimension_numbers = #tpu.dot_dimension_numbers<[1], [0], [0], [1], [0, 0, 1, 1], [], []>} : vector<17x49xbf16>, vector<49x128xbf16>, vector<17x128xf32> -> vector<17x128xf32>
    %cst_13 = arith.constant 0.000000e+00 : f32
    %23 = vector.broadcast %cst_13 : f32 to vector<17x128xf32>
    %24 = arith.maximumf %22, %23 : vector<17x128xf32>
    %c208 = arith.constant 208 : index
    %c0_14 = arith.constant 0 : index
    %25 = vector.load %arg2[%c208, %c0_14] : memref<544x64xbf16, #tpu.memory_space<vmem>>, vector<4x17xbf16>
    %26 = arith.truncf %24 : vector<17x128xf32> to vector<17x128xbf16>
    %cst_15 = arith.constant dense<0.000000e+00> : vector<4x128xf32>
    %27 = tpu.matmul %25, %26, %cst_15 {dimension_numbers = #tpu.dot_dimension_numbers<[1], [0], [0], [1], [0, 0, 1, 1], [], []>} : vector<4x17xbf16>, vector<17x128xbf16>, vector<4x128xf32> -> vector<4x128xf32>
    %cst_16 = arith.constant 0.000000e+00 : f32
    %28 = vector.broadcast %cst_16 : f32 to vector<4x128xf32>
    %29 = arith.maximumf %27, %28 : vector<4x128xf32>
    %30 = vector.extract_strided_slice %29 {offsets = [0, 0], sizes = [3, 128], strides = [1, 1]} : vector<4x128xf32> to vector<3x128xf32>
    %31 = tpu.transpose %30, [1, 0] : vector<3x128xf32> -> vector<128x3xf32>
    %c0_17 = arith.constant 0 : index
    %c0_18 = arith.constant 0 : index
    %32 = vector.load %arg4[%c0_17, %c0_18] : memref<128x3xf32, #tpu.memory_space<vmem>>, vector<128x3xf32>
    tpu.vector_store %arg4[%c0_17, %c0_18], %31 {strides = array<i32>} : memref<128x3xf32, #tpu.memory_space<vmem>>, vector<128x3xf32>,
    %c224 = arith.constant 224 : index
    %c0_19 = arith.constant 0 : index
    %33 = vector.load %arg2[%c224, %c0_19] : memref<544x64xbf16, #tpu.memory_space<vmem>>, vector<17x4xbf16>
    %34 = arith.truncf %29 : vector<4x128xf32> to vector<4x128xbf16>
    %cst_20 = arith.constant dense<0.000000e+00> : vector<17x128xf32>
    %35 = tpu.matmul %33, %34, %cst_20 {dimension_numbers = #tpu.dot_dimension_numbers<[1], [0], [0], [1], [0, 0, 1, 1], [], []>} : vector<17x4xbf16>, vector<4x128xbf16>, vector<17x128xf32> -> vector<17x128xf32>
    %cst_21 = arith.constant 0.000000e+00 : f32
    %36 = vector.broadcast %cst_21 : f32 to vector<17x128xf32>
    %37 = arith.maximumf %35, %36 : vector<17x128xf32>
    %c256 = arith.constant 256 : index
    %c0_22 = arith.constant 0 : index
    %38 = vector.load %arg2[%c256, %c0_22] : memref<544x64xbf16, #tpu.memory_space<vmem>>, vector<49x17xbf16>
    %39 = arith.truncf %37 : vector<17x128xf32> to vector<17x128xbf16>
    %cst_23 = arith.constant dense<0.000000e+00> : vector<49x128xf32>
    %40 = tpu.matmul %38, %39, %cst_23 {dimension_numbers = #tpu.dot_dimension_numbers<[1], [0], [0], [1], [0, 0, 1, 1], [], []>} : vector<49x17xbf16>, vector<17x128xbf16>, vector<49x128xf32> -> vector<49x128xf32>
    %cst_24 = arith.constant 0.000000e+00 : f32
    %41 = vector.broadcast %cst_24 : f32 to vector<49x128xf32>
    %42 = arith.maximumf %40, %41 : vector<49x128xf32>
    %c320 = arith.constant 320 : index
    %c0_25 = arith.constant 0 : index
    %43 = vector.load %arg2[%c320, %c0_25] : memref<544x64xbf16, #tpu.memory_space<vmem>>, vector<41x49xbf16>
    %44 = arith.truncf %42 : vector<49x128xf32> to vector<49x128xbf16>
    %cst_26 = arith.constant dense<0.000000e+00> : vector<41x128xf32>
    %45 = tpu.matmul %43, %44, %cst_26 {dimension_numbers = #tpu.dot_dimension_numbers<[1], [0], [0], [1], [0, 0, 1, 1], [], []>} : vector<41x49xbf16>, vector<49x128xbf16>, vector<41x128xf32> -> vector<41x128xf32>
    %cst_27 = arith.constant 0.000000e+00 : f32
    %46 = vector.broadcast %cst_27 : f32 to vector<41x128xf32>
    %47 = arith.maximumf %45, %46 : vector<41x128xf32>
    %c368 = arith.constant 368 : index
    %c0_28 = arith.constant 0 : index
    %48 = vector.load %arg2[%c368, %c0_28] : memref<544x64xbf16, #tpu.memory_space<vmem>>, vector<53x41xbf16>
    %49 = arith.truncf %47 : vector<41x128xf32> to vector<41x128xbf16>
    %cst_29 = arith.constant dense<0.000000e+00> : vector<53x128xf32>
    %50 = tpu.matmul %48, %49, %cst_29 {dimension_numbers = #tpu.dot_dimension_numbers<[1], [0], [0], [1], [0, 0, 1, 1], [], []>} : vector<53x41xbf16>, vector<41x128xbf16>, vector<53x128xf32> -> vector<53x128xf32>
    %cst_30 = arith.constant 0.000000e+00 : f32
    %51 = vector.broadcast %cst_30 : f32 to vector<53x128xf32>
    %52 = arith.maximumf %50, %51 : vector<53x128xf32>
    %c432 = arith.constant 432 : index
    %c0_31 = arith.constant 0 : index
    %53 = vector.load %arg2[%c432, %c0_31] : memref<544x64xbf16, #tpu.memory_space<vmem>>, vector<30x53xbf16>
    %54 = arith.truncf %52 : vector<53x128xf32> to vector<53x128xbf16>
    %cst_32 = arith.constant dense<0.000000e+00> : vector<30x128xf32>
    %55 = tpu.matmul %53, %54, %cst_32 {dimension_numbers = #tpu.dot_dimension_numbers<[1], [0], [0], [1], [0, 0, 1, 1], [], []>} : vector<30x53xbf16>, vector<53x128xbf16>, vector<30x128xf32> -> vector<30x128xf32>
    %cst_33 = arith.constant 5.000000e-01 : f32
    %56 = vector.broadcast %cst_33 : f32 to vector<30x128xf32>
    %57 = arith.mulf %56, %55 : vector<30x128xf32>
    %58 = math.tanh %57 : vector<30x128xf32>
    %cst_34 = arith.constant 5.000000e-01 : f32
    %59 = vector.broadcast %cst_34 : f32 to vector<30x128xf32>
    %60 = arith.mulf %59, %58 : vector<30x128xf32>
    %cst_35 = arith.constant 5.000000e-01 : f32
    %61 = vector.broadcast %cst_35 : f32 to vector<30x128xf32>
    %62 = arith.addf %60, %61 : vector<30x128xf32>
    %63 = tpu.transpose %62, [1, 0] : vector<30x128xf32> -> vector<128x30xf32>
    %c0_36 = arith.constant 0 : index
    %c0_37 = arith.constant 0 : index
    %64 = vector.load %arg3[%c0_36, %c0_37] : memref<128x30xf32, #tpu.memory_space<vmem>>, vector<128x30xf32>
    tpu.vector_store %arg3[%c0_36, %c0_37], %63 {strides = array<i32>} : memref<128x30xf32, #tpu.memory_space<vmem>>, vector<128x30xf32>,
    return
  }
  func.func @transform_0(%arg0: i32) -> (i32, i32) {
    %c0_i32 = arith.constant 0 : i32
    %c0_i32_0 = arith.constant 0 : i32
    return %arg0, %c0_i32 : i32, i32
  }
  func.func @transform_1(%arg0: i32) -> (i32, i32) {
    %c0_i32 = arith.constant 0 : i32
    %c0_i32_0 = arith.constant 0 : i32
    %c0_i32_1 = arith.constant 0 : i32
    return %c0_i32, %c0_i32_0 : i32, i32
  }
  func.func @transform_2(%arg0: i32) -> (i32, i32) {
    %c0_i32 = arith.constant 0 : i32
    %c0_i32_0 = arith.constant 0 : i32
    return %arg0, %c0_i32 : i32, i32
  }
  func.func @transform_3(%arg0: i32) -> (i32, i32) {
    %c0_i32 = arith.constant 0 : i32
    %c0_i32_0 = arith.constant 0 : i32
    return %arg0, %c0_i32 : i32, i32
  }
}

module attributes {stable_mosaic.version = 11 : i64} {
  func.func @kernel(%arg0: i32, %arg1: memref<128x30xf32, #tpu.memory_space<vmem>>, %arg2: memref<544x64xbf16, #tpu.memory_space<vmem>>, %arg3: memref<128x30xf32, #tpu.memory_space<vmem>>, %arg4: memref<128x3xf32, #tpu.memory_space<vmem>>) attributes {dimension_semantics = [#tpu.dimension_semantics<parallel>], iteration_bounds = array<i64: 1>, scalar_prefetch = 0 : i64, scratch_operands = 0 : i64, tpu.core_type = #tpu.core_type<tc>, window_params = [{transform_indices = @transform_0, window_bounds = array<i64: 128, 30>}, {pipeline_mode = #tpu.pipeline_mode<synchronous>, transform_indices = @transform_1, window_bounds = array<i64: 544, 64>}, {transform_indices = @transform_2, window_bounds = array<i64: 128, 30>}, {transform_indices = @transform_3, window_bounds = array<i64: 128, 3>}]} {
    %c0 = arith.constant 0 : index
    %c0_0 = arith.constant 0 : index
    %0 = vector.load %arg1[%c0, %c0_0] : memref<128x30xf32, #tpu.memory_space<vmem>>, vector<128x30xf32>
    %1 = arith.truncf %0 : vector<128x30xf32> to vector<128x30xbf16>
    %c0_1 = arith.constant 0 : index
    %c0_2 = arith.constant 0 : index
    %2 = vector.load %arg2[%c0_1, %c0_2] : memref<544x64xbf16, #tpu.memory_space<vmem>>, vector<53x30xbf16>
    %cst = arith.constant dense<0.000000e+00> : vector<128x53xf32>
    %3 = tpu.matmul %1, %2, %cst {dimension_numbers = #tpu.dot_dimension_numbers<[1], [1], [0], [0], [0, 0, 1, 0], [], []>} : vector<128x30xbf16>, vector<53x30xbf16>, vector<128x53xf32> -> vector<128x53xf32>
    %c528 = arith.constant 528 : index
    %c0_3 = arith.constant 0 : index
    %4 = vector.load %arg2[%c528, %c0_3] : memref<544x64xbf16, #tpu.memory_space<vmem>>, vector<1x53xbf16>
    %5 = arith.extf %4 : vector<1x53xbf16> to vector<1x53xf32>
    %6 = vector.broadcast %5 : vector<1x53xf32> to vector<128x53xf32>
    %7 = arith.addf %3, %6 : vector<128x53xf32>
    %cst_4 = arith.constant 0.000000e+00 : f32
    %8 = vector.broadcast %cst_4 : f32 to vector<128x53xf32>
    %9 = arith.maximumf %7, %8 : vector<128x53xf32>
    %c64 = arith.constant 64 : index
    %c0_5 = arith.constant 0 : index
    %10 = vector.load %arg2[%c64, %c0_5] : memref<544x64xbf16, #tpu.memory_space<vmem>>, vector<41x53xbf16>
    %11 = arith.truncf %9 : vector<128x53xf32> to vector<128x53xbf16>
    %cst_6 = arith.constant dense<0.000000e+00> : vector<128x41xf32>
    %12 = tpu.matmul %11, %10, %cst_6 {dimension_numbers = #tpu.dot_dimension_numbers<[1], [1], [0], [0], [0, 0, 1, 0], [], []>} : vector<128x53xbf16>, vector<41x53xbf16>, vector<128x41xf32> -> vector<128x41xf32>
    %cst_7 = arith.constant 0.000000e+00 : f32
    %13 = vector.broadcast %cst_7 : f32 to vector<128x41xf32>
    %14 = arith.maximumf %12, %13 : vector<128x41xf32>
    %c112 = arith.constant 112 : index
    %c0_8 = arith.constant 0 : index
    %15 = vector.load %arg2[%c112, %c0_8] : memref<544x64xbf16, #tpu.memory_space<vmem>>, vector<49x41xbf16>
    %16 = arith.truncf %14 : vector<128x41xf32> to vector<128x41xbf16>
    %cst_9 = arith.constant dense<0.000000e+00> : vector<128x49xf32>
    %17 = tpu.matmul %16, %15, %cst_9 {dimension_numbers = #tpu.dot_dimension_numbers<[1], [1], [0], [0], [0, 0, 1, 0], [], []>} : vector<128x41xbf16>, vector<49x41xbf16>, vector<128x49xf32> -> vector<128x49xf32>
    %cst_10 = arith.constant 0.000000e+00 : f32
    %18 = vector.broadcast %cst_10 : f32 to vector<128x49xf32>
    %19 = arith.maximumf %17, %18 : vector<128x49xf32>
    %c176 = arith.constant 176 : index
    %c0_11 = arith.constant 0 : index
    %20 = vector.load %arg2[%c176, %c0_11] : memref<544x64xbf16, #tpu.memory_space<vmem>>, vector<17x49xbf16>
    %21 = arith.truncf %19 : vector<128x49xf32> to vector<128x49xbf16>
    %cst_12 = arith.constant dense<0.000000e+00> : vector<128x17xf32>
    %22 = tpu.matmul %21, %20, %cst_12 {dimension_numbers = #tpu.dot_dimension_numbers<[1], [1], [0], [0], [0, 0, 1, 0], [], []>} : vector<128x49xbf16>, vector<17x49xbf16>, vector<128x17xf32> -> vector<128x17xf32>
    %cst_13 = arith.constant 0.000000e+00 : f32
    %23 = vector.broadcast %cst_13 : f32 to vector<128x17xf32>
    %24 = arith.maximumf %22, %23 : vector<128x17xf32>
    %c208 = arith.constant 208 : index
    %c0_14 = arith.constant 0 : index
    %25 = vector.load %arg2[%c208, %c0_14] : memref<544x64xbf16, #tpu.memory_space<vmem>>, vector<4x17xbf16>
    %26 = arith.truncf %24 : vector<128x17xf32> to vector<128x17xbf16>
    %cst_15 = arith.constant dense<0.000000e+00> : vector<128x4xf32>
    %27 = tpu.matmul %26, %25, %cst_15 {dimension_numbers = #tpu.dot_dimension_numbers<[1], [1], [0], [0], [0, 0, 1, 0], [], []>} : vector<128x17xbf16>, vector<4x17xbf16>, vector<128x4xf32> -> vector<128x4xf32>
    %cst_16 = arith.constant 0.000000e+00 : f32
    %28 = vector.broadcast %cst_16 : f32 to vector<128x4xf32>
    %29 = arith.maximumf %27, %28 : vector<128x4xf32>
    %30 = vector.extract_strided_slice %29 {offsets = [0, 0], sizes = [128, 3], strides = [1, 1]} : vector<128x4xf32> to vector<128x3xf32>
    %c0_17 = arith.constant 0 : index
    %c0_18 = arith.constant 0 : index
    %31 = vector.load %arg4[%c0_17, %c0_18] : memref<128x3xf32, #tpu.memory_space<vmem>>, vector<128x3xf32>
    tpu.vector_store %arg4[%c0_17, %c0_18], %30 {strides = array<i32>} : memref<128x3xf32, #tpu.memory_space<vmem>>, vector<128x3xf32>,
    %c224 = arith.constant 224 : index
    %c0_19 = arith.constant 0 : index
    %32 = vector.load %arg2[%c224, %c0_19] : memref<544x64xbf16, #tpu.memory_space<vmem>>, vector<17x4xbf16>
    %33 = arith.truncf %29 : vector<128x4xf32> to vector<128x4xbf16>
    %cst_20 = arith.constant dense<0.000000e+00> : vector<128x17xf32>
    %34 = tpu.matmul %33, %32, %cst_20 {dimension_numbers = #tpu.dot_dimension_numbers<[1], [1], [0], [0], [0, 0, 1, 0], [], []>} : vector<128x4xbf16>, vector<17x4xbf16>, vector<128x17xf32> -> vector<128x17xf32>
    %cst_21 = arith.constant 0.000000e+00 : f32
    %35 = vector.broadcast %cst_21 : f32 to vector<128x17xf32>
    %36 = arith.maximumf %34, %35 : vector<128x17xf32>
    %c256 = arith.constant 256 : index
    %c0_22 = arith.constant 0 : index
    %37 = vector.load %arg2[%c256, %c0_22] : memref<544x64xbf16, #tpu.memory_space<vmem>>, vector<49x17xbf16>
    %38 = arith.truncf %36 : vector<128x17xf32> to vector<128x17xbf16>
    %cst_23 = arith.constant dense<0.000000e+00> : vector<128x49xf32>
    %39 = tpu.matmul %38, %37, %cst_23 {dimension_numbers = #tpu.dot_dimension_numbers<[1], [1], [0], [0], [0, 0, 1, 0], [], []>} : vector<128x17xbf16>, vector<49x17xbf16>, vector<128x49xf32> -> vector<128x49xf32>
    %cst_24 = arith.constant 0.000000e+00 : f32
    %40 = vector.broadcast %cst_24 : f32 to vector<128x49xf32>
    %41 = arith.maximumf %39, %40 : vector<128x49xf32>
    %c320 = arith.constant 320 : index
    %c0_25 = arith.constant 0 : index
    %42 = vector.load %arg2[%c320, %c0_25] : memref<544x64xbf16, #tpu.memory_space<vmem>>, vector<41x49xbf16>
    %43 = arith.truncf %41 : vector<128x49xf32> to vector<128x49xbf16>
    %cst_26 = arith.constant dense<0.000000e+00> : vector<128x41xf32>
    %44 = tpu.matmul %43, %42, %cst_26 {dimension_numbers = #tpu.dot_dimension_numbers<[1], [1], [0], [0], [0, 0, 1, 0], [], []>} : vector<128x49xbf16>, vector<41x49xbf16>, vector<128x41xf32> -> vector<128x41xf32>
    %cst_27 = arith.constant 0.000000e+00 : f32
    %45 = vector.broadcast %cst_27 : f32 to vector<128x41xf32>
    %46 = arith.maximumf %44, %45 : vector<128x41xf32>
    %c368 = arith.constant 368 : index
    %c0_28 = arith.constant 0 : index
    %47 = vector.load %arg2[%c368, %c0_28] : memref<544x64xbf16, #tpu.memory_space<vmem>>, vector<53x41xbf16>
    %48 = arith.truncf %46 : vector<128x41xf32> to vector<128x41xbf16>
    %cst_29 = arith.constant dense<0.000000e+00> : vector<128x53xf32>
    %49 = tpu.matmul %48, %47, %cst_29 {dimension_numbers = #tpu.dot_dimension_numbers<[1], [1], [0], [0], [0, 0, 1, 0], [], []>} : vector<128x41xbf16>, vector<53x41xbf16>, vector<128x53xf32> -> vector<128x53xf32>
    %cst_30 = arith.constant 0.000000e+00 : f32
    %50 = vector.broadcast %cst_30 : f32 to vector<128x53xf32>
    %51 = arith.maximumf %49, %50 : vector<128x53xf32>
    %c432 = arith.constant 432 : index
    %c0_31 = arith.constant 0 : index
    %52 = vector.load %arg2[%c432, %c0_31] : memref<544x64xbf16, #tpu.memory_space<vmem>>, vector<30x53xbf16>
    %53 = arith.truncf %51 : vector<128x53xf32> to vector<128x53xbf16>
    %cst_32 = arith.constant dense<0.000000e+00> : vector<128x30xf32>
    %54 = tpu.matmul %53, %52, %cst_32 {dimension_numbers = #tpu.dot_dimension_numbers<[1], [1], [0], [0], [0, 0, 1, 0], [], []>} : vector<128x53xbf16>, vector<30x53xbf16>, vector<128x30xf32> -> vector<128x30xf32>
    %cst_33 = arith.constant 5.000000e-01 : f32
    %55 = vector.broadcast %cst_33 : f32 to vector<128x30xf32>
    %56 = arith.mulf %55, %54 : vector<128x30xf32>
    %57 = math.tanh %56 : vector<128x30xf32>
    %cst_34 = arith.constant 5.000000e-01 : f32
    %58 = vector.broadcast %cst_34 : f32 to vector<128x30xf32>
    %59 = arith.mulf %58, %57 : vector<128x30xf32>
    %cst_35 = arith.constant 5.000000e-01 : f32
    %60 = vector.broadcast %cst_35 : f32 to vector<128x30xf32>
    %61 = arith.addf %59, %60 : vector<128x30xf32>
    %c0_36 = arith.constant 0 : index
    %c0_37 = arith.constant 0 : index
    %62 = vector.load %arg3[%c0_36, %c0_37] : memref<128x30xf32, #tpu.memory_space<vmem>>, vector<128x30xf32>
    tpu.vector_store %arg3[%c0_36, %c0_37], %61 {strides = array<i32>} : memref<128x30xf32, #tpu.memory_space<vmem>>, vector<128x30xf32>,
    return
  }
  func.func @transform_0(%arg0: i32) -> (i32, i32) {
    %c0_i32 = arith.constant 0 : i32
    %c0_i32_0 = arith.constant 0 : i32
    return %arg0, %c0_i32 : i32, i32
  }
  func.func @transform_1(%arg0: i32) -> (i32, i32) {
    %c0_i32 = arith.constant 0 : i32
    %c0_i32_0 = arith.constant 0 : i32
    %c0_i32_1 = arith.constant 0 : i32
    return %c0_i32, %c0_i32_0 : i32, i32
  }
  func.func @transform_2(%arg0: i32) -> (i32, i32) {
    %c0_i32 = arith.constant 0 : i32
    %c0_i32_0 = arith.constant 0 : i32
    return %arg0, %c0_i32 : i32, i32
  }
  func.func @transform_3(%arg0: i32) -> (i32, i32) {
    %c0_i32 = arith.constant 0 : i32
    %c0_i32_0 = arith.constant 0 : i32
    return %arg0, %c0_i32 : i32, i32
  }
}

</mosaic_0001>

<llo_original>
// kernel: tpu_custom_call.1
$region0: #{tpu_custom_call.1}
  #allocation0 [shape = 'u32[]', space=smem, size = 0x4, offset = 0x4, fixed_abs, tag = 'smem constant byte address 0x4 - core index']
  #allocation1 [shape = 'u32[144,128]{1,0:T(1,128)}', space=vmem, size = 0x12000, scoped, tag = 'internal scratch']
  %s0 = inlined_call_operand.vmem [shape: f32[128,30], index: 0, kind: input, shape index: {}]
  %s1 = inlined_call_operand.vmem [shape: bf16[544,64], index: 1, kind: input, shape index: {}]
  %s2 = inlined_call_operand.vmem [shape: f32[128,30], index: 2, kind: output, shape index: {0}]
  %s3 = inlined_call_operand.vmem [shape: f32[128,3], index: 3, kind: output, shape index: {1}]
  %4 = xla_tuple %s2, %s3
  %s5 = sld [smem:[#allocation0]]
  $region26: #{tpu_custom_call.1} parent=0
    _
  %s7 = ssub.s32 1, %s5
  %s8 = scalar_select 0, %s7, %s5
  // Predicated region
  $region2: #{tpu_custom_call.1} parent=0 // pred_check
    _
  $region3: #{tpu_custom_call.1} parent=0 // pred_check_branch
    %10 = sbr.rel (0) target = $region5
  $region4: #{tpu_custom_call.1} parent=0 // pred_region
    _
  $region5: #{tpu_custom_call.1} parent=0 // pred_fallthru
    _
  // Predicated region
  $region6: #{tpu_custom_call.1} parent=0 // pred_check
    _
  $region7: #{tpu_custom_call.1} parent=0 // pred_check_branch
    %12 = sbr.rel (0) target = $region9
  $region8: #{tpu_custom_call.1} parent=0 // pred_region
    _
  $region9: #{tpu_custom_call.1} parent=0 // pred_fallthru
    _
  %v14 = vld [vmem:[%s0] sm:$0xff]
  %v15 = vld [vmem:[%s0 + $0x8] sm:$0xff]
  %v16 = vld [vmem:[%s0 + $0x10] sm:$0xff]
  %v17 = vld [vmem:[%s0 + $0x18] sm:$0xff]
  %v18 = vld [vmem:[%s0 + $0x20] sm:$0xff]
  %v19 = vld [vmem:[%s0 + $0x28] sm:$0xff]
  %v20 = vld [vmem:[%s0 + $0x30] sm:$0xff]
  %v21 = vld [vmem:[%s0 + $0x38] sm:$0xff]
  %v22 = vld [vmem:[%s0 + $0x40] sm:$0xff]
  %v23 = vld [vmem:[%s0 + $0x48] sm:$0xff]
  %v24 = vld [vmem:[%s0 + $0x50] sm:$0xff]
  %v25 = vld [vmem:[%s0 + $0x58] sm:$0xff]
  %v26 = vld [vmem:[%s0 + $0x60] sm:$0xff]
  %v27 = vld [vmem:[%s0 + $0x68] sm:$0xff]
  %v28 = vld [vmem:[%s0 + $0x70] sm:$0xff]
  %v29 = vld [vmem:[%s0 + $0x78] sm:$0xff]
  %v30 = vpack.c.bf16 %v15, %v14
  %v31 = vpack.c.bf16 %v17, %v16
  %v32 = vpack.c.bf16 %v19, %v18
  %v33 = vpack.c.bf16 %v21, %v20
  %v34 = vpack.c.bf16 %v23, %v22
  %v35 = vpack.c.bf16 %v25, %v24
  %v36 = vpack.c.bf16 %v27, %v26
  %v37 = vpack.c.bf16 %v29, %v28
  %v38 = vld [vmem:[%s1] sm:$0xf]
  %v39 = vld [vmem:[%s1 + $0x4] sm:$0xf]
  %v40 = vld [vmem:[%s1 + $0x8] sm:$0xf]
  %v41 = vld [vmem:[%s1 + $0xc] sm:$0xf]
  %v42 = vld [vmem:[%s1 + $0x10] sm:$0xf]
  %v43 = vld [vmem:[%s1 + $0x14] sm:$0xf]
  %v44 = vld [vmem:[%s1 + $0x18] sm:$0x7]
  %v45 = vld [vmem:[%s1 + $0xe8] sm:$0xf]
  %v46 = vld [vmem:[%s1 + $0xec] sm:$0xf]
  %v47 = vld [vmem:[%s1 + $0xf0] sm:$0xf]
  %v48 = vld [vmem:[%s1 + $0xf4] sm:$0xf]
  %v49 = vld [vmem:[%s1 + $0xf8] sm:$0xf]
  %v50 = vld [vmem:[%s1 + $0xfc] sm:$0xf]
  %v51 = vld [vmem:[%s1 + $0x100] sm:$0x7]
  %v52 = vunpack.c.l.bf16 %v45
  %v53 = vunpack.c.l.bf16 %v46
  %v54 = vunpack.c.l.bf16 %v47
  %v55 = vunpack.c.l.bf16 %v48
  %v56 = vunpack.c.l.bf16 %v49
  %v57 = vunpack.c.l.bf16 %v50
  %v58 = vunpack.c.l.bf16 %v51
  %60 = vset.pattern.permute.xlu0 0
  %61 = vperm.xlu0 %60, %v52
  %v62 = vpop.permute.xlu0 %61
  %65 = vset.pattern.permute.xlu0 0
  %66 = vperm.xlu0 %65, %v53
  %v67 = vpop.permute.xlu0 %66
  %70 = vset.pattern.permute.xlu0 0
  %71 = vperm.xlu0 %70, %v54
  %v72 = vpop.permute.xlu0 %71
  %75 = vset.pattern.permute.xlu0 0
  %76 = vperm.xlu0 %75, %v55
  %v77 = vpop.permute.xlu0 %76
  %80 = vset.pattern.permute.xlu0 0
  %81 = vperm.xlu0 %80, %v56
  %v82 = vpop.permute.xlu0 %81
  %85 = vset.pattern.permute.xlu0 0
  %86 = vperm.xlu0 %85, %v57
  %v87 = vpop.permute.xlu0 %86
  %90 = vset.pattern.permute.xlu0 0
  %91 = vperm.xlu0 %90, %v58
  %v92 = vpop.permute.xlu0 %91
  %v101 = vunpack.c.l.b16 %v38
  %v102 = vunpack.c.l.b16 %v39
  %v103 = vunpack.c.l.b16 %v40
  %v104 = vunpack.c.l.b16 %v41
  %v105 = vunpack.c.l.b16 %v42
  %v106 = vunpack.c.l.b16 %v43
  %v107 = vunpack.c.l.b16 %v44
  %v108 = vpack.c.b16 %v102, %v101
  %v109 = vpack.c.b16 %v104, %v103
  %v110 = vpack.c.b16 %v106, %v105
  %v111 = vpack.c.b16 %v107, %v107
  %vm112 = vcmask 244736
  %v114 = vsel %vm112, %v108, 0
  %v117 = vsel %vm112, %v109, 0
  %v120 = vsel %vm112, %v110, 0
  %v123 = vsel %vm112, %v111, 0
  %v126 = vsel %vm112, %v30, 0
  %v129 = vsel %vm112, %v31, 0
  %v132 = vsel %vm112, %v32, 0
  %v135 = vsel %vm112, %v33, 0
  %v138 = vsel %vm112, %v34, 0
  %v141 = vsel %vm112, %v35, 0
  %v144 = vsel %vm112, %v36, 0
  %v147 = vsel %vm112, %v37, 0
  %149 = vmatprep.subr.bf16.mxu0 0
  %150 = vmatpush1.bf16.xpose.msra.mxu0 %v126
  %151 = vmatprep.subr.bf16.mxu0 0
  %152 = vmatpush1.bf16.xpose.msra.mxu0 %v129
  %153 = vmatprep.subr.bf16.mxu0 0
  %154 = vmatpush1.bf16.xpose.msra.mxu0 %v132
  %155 = vmatprep.subr.bf16.mxu0 0
  %156 = vmatpush1.bf16.xpose.msra.mxu0 %v135
  %157 = vmatprep.subr.bf16.mxu0 0
  %158 = vmatpush1.bf16.xpose.msra.mxu0 %v138
  %159 = vmatprep.subr.bf16.mxu0 0
  %160 = vmatpush1.bf16.xpose.msra.mxu0 %v141
  %161 = vmatprep.subr.bf16.mxu0 0
  %162 = vmatpush1.bf16.xpose.msra.mxu0 %v144
  %163 = vmatprep.subr.bf16.mxu0 0
  %164 = vmatpush1.bf16.xpose.msra.mxu0 %v147
  %165 = vmatprep.subr.bf16.mxu0 0
  %166 = vmatpush1.bf16.xpose.msra.mxu0 0
  %167 = vmatprep.subr.bf16.mxu0 0
  %168 = vmatpush1.bf16.xpose.msra.mxu0 0
  %169 = vmatprep.subr.bf16.mxu0 0
  %170 = vmatpush1.bf16.xpose.msra.mxu0 0
  %171 = vmatprep.subr.bf16.mxu0 0
  %172 = vmatpush1.bf16.xpose.msra.mxu0 0
  %173 = vmatprep.subr.bf16.mxu0 0
  %174 = vmatpush1.bf16.xpose.msra.mxu0 0
  %175 = vmatprep.subr.bf16.mxu0 0
  %176 = vmatpush1.bf16.xpose.msra.mxu0 0
  %177 = vmatprep.subr.bf16.mxu0 0
  %178 = vmatpush1.bf16.xpose.msra.mxu0 0
  %179 = vmatprep.subr.bf16.mxu0 0
  %180 = vmatpush1.bf16.xpose.msra.mxu0 0
  %181 = vmatprep.mubr.bf16.mxu0 0
  %182 = vmatmul.mubr.bf16.gmra.mrb[0].mxu0 %v114
  %v183 = vpop.f32.mrb[0].mxu0
  %v184 = vadd.f32 %v62, %v183
  %v185 = vpop.f32.mrb[0].mxu0
  %v186 = vpop.f32.mrb[0].mxu0
  %v187 = vadd.f32 %v67, %v186
  %v188 = vpop.f32.mrb[0].mxu0
  %189 = vmatprep.mubr.bf16.mxu0 0
  %190 = vmatmul.mubr.bf16.gmra.mrb[0].mxu0 %v117
  %v191 = vpop.f32.mrb[0].mxu0
  %v192 = vadd.f32 %v72, %v191
  %v193 = vpop.f32.mrb[0].mxu0
  %v194 = vpop.f32.mrb[0].mxu0
  %v195 = vadd.f32 %v77, %v194
  %v196 = vpop.f32.mrb[0].mxu0
  %197 = vmatprep.mubr.bf16.mxu0 0
  %198 = vmatmul.mubr.bf16.gmra.mrb[0].mxu0 %v120
  %v199 = vpop.f32.mrb[0].mxu0
  %v200 = vadd.f32 %v82, %v199
  %v201 = vpop.f32.mrb[0].mxu0
  %v202 = vpop.f32.mrb[0].mxu0
  %v203 = vadd.f32 %v87, %v202
  %v204 = vpop.f32.mrb[0].mxu0
  %205 = vmatprep.mubr.bf16.mxu0 0
  %206 = vmatmul.mubr.bf16.gmra.mrb[0].mxu0 %v123
  %v207 = vpop.f32.mrb[0].mxu0
  %v208 = vadd.f32 %v92, %v207
  %v209 = vpop.f32.mrb[0].mxu0
  %v210 = vpop.f32.mrb[0].mxu0
  %v211 = vpop.f32.mrb[0].mxu0
  %212 = vdwg.mxu0
  %v213 = vmax.f32 %v184, 0.0
  %v214 = vmax.f32 %v187, 0.0
  %v215 = vmax.f32 %v192, 0.0
  %v216 = vmax.f32 %v195, 0.0
  %v217 = vmax.f32 %v200, 0.0
  %v218 = vmax.f32 %v203, 0.0
  %v219 = vmax.f32 %v208, 0.0
  %v220 = vld [vmem:[%s1 + $0x20] sm:$0xf]
  %v221 = vld [vmem:[%s1 + $0x24] sm:$0xf]
  %v222 = vld [vmem:[%s1 + $0x28] sm:$0xf]
  %v223 = vld [vmem:[%s1 + $0x2c] sm:$0xf]
  %v224 = vld [vmem:[%s1 + $0x30] sm:$0xf]
  %v225 = vld [vmem:[%s1 + $0x34] sm:$0x1]
  %v226 = vpack.c.bf16 %v214, %v213
  %v227 = vpack.c.bf16 %v216, %v215
  %v228 = vpack.c.bf16 %v218, %v217
  %v229 = vpack.c.bf16 %v219, %v219
  %v236 = vunpack.c.l.b16 %v220
  %v237 = vunpack.c.l.b16 %v221
  %v238 = vunpack.c.l.b16 %v222
  %v239 = vunpack.c.l.b16 %v223
  %v240 = vunpack.c.l.b16 %v224
  %v241 = vunpack.c.l.b16 %v225
  %v242 = vpack.c.b16 %v237, %v236
  %v243 = vpack.c.b16 %v239, %v238
  %v244 = vpack.c.b16 %v241, %v240
  %vm245 = vcmask 433152
  %v247 = vsel %vm245, %v242, 0
  %v250 = vsel %vm245, %v243, 0
  %v253 = vsel %vm245, %v244, 0
  %vm255 = vcmask 1041408
  %vm256 = vcmask 1042432
  %v257 = vsel %vm255, 4294967295, 65535
  %v258 = vsel %vm256, %v257, 0
  %v260 = vand.u32 %v229, %v258
  %262 = vmatprep.subr.bf16.mxu0 0
  %263 = vmatpush1.bf16.msra.mxu0 %v226
  %264 = vmatprep.subr.bf16.mxu0 0
  %265 = vmatpush1.bf16.msra.mxu0 %v227
  %266 = vmatprep.subr.bf16.mxu0 0
  %267 = vmatpush1.bf16.msra.mxu0 %v228
  %268 = vmatprep.subr.bf16.mxu0 0
  %269 = vmatpush1.bf16.msra.mxu0 %v260
  %270 = vmatprep.subr.bf16.mxu0 0
  %271 = vmatpush1.bf16.msra.mxu0 0
  %272 = vmatprep.subr.bf16.mxu0 0
  %273 = vmatpush1.bf16.msra.mxu0 0
  %274 = vmatprep.subr.bf16.mxu0 0
  %275 = vmatpush1.bf16.msra.mxu0 0
  %276 = vmatprep.subr.bf16.mxu0 0
  %277 = vmatpush1.bf16.msra.mxu0 0
  %278 = vmatprep.subr.bf16.mxu0 0
  %279 = vmatpush1.bf16.msra.mxu0 0
  %280 = vmatprep.subr.bf16.mxu0 0
  %281 = vmatpush1.bf16.msra.mxu0 0
  %282 = vmatprep.subr.bf16.mxu0 0
  %283 = vmatpush1.bf16.msra.mxu0 0
  %284 = vmatprep.subr.bf16.mxu0 0
  %285 = vmatpush1.bf16.msra.mxu0 0
  %286 = vmatprep.subr.bf16.mxu0 0
  %287 = vmatpush1.bf16.msra.mxu0 0
  %288 = vmatprep.subr.bf16.mxu0 0
  %289 = vmatpush1.bf16.msra.mxu0 0
  %290 = vmatprep.subr.bf16.mxu0 0
  %291 = vmatpush1.bf16.msra.mxu0 0
  %292 = vmatprep.subr.bf16.mxu0 0
  %293 = vmatpush1.bf16.msra.mxu0 0
  %294 = vmatprep.mubr.bf16.mxu0 0
  %295 = vmatmul.mubr.bf16.gmra.mrb[0].mxu0 %v247
  %v296 = vpop.f32.mrb[0].mxu0
  %v297 = vadd.f32 0.0, %v296
  %v298 = vpop.f32.mrb[0].mxu0
  %v299 = vpop.f32.mrb[0].mxu0
  %v300 = vadd.f32 0.0, %v299
  %v301 = vpop.f32.mrb[0].mxu0
  %302 = vmatprep.mubr.bf16.mxu0 0
  %303 = vmatmul.mubr.bf16.gmra.mrb[0].mxu0 %v250
  %v304 = vpop.f32.mrb[0].mxu0
  %v305 = vadd.f32 0.0, %v304
  %v306 = vpop.f32.mrb[0].mxu0
  %v307 = vpop.f32.mrb[0].mxu0
  %v308 = vadd.f32 0.0, %v307
  %v309 = vpop.f32.mrb[0].mxu0
  %310 = vmatprep.mubr.bf16.mxu0 0
  %311 = vmatmul.mubr.bf16.gmra.mrb[0].mxu0 %v253
  %v312 = vpop.f32.mrb[0].mxu0
  %v313 = vadd.f32 0.0, %v312
  %v314 = vpop.f32.mrb[0].mxu0
  %v315 = vpop.f32.mrb[0].mxu0
  %v316 = vadd.f32 0.0, %v315
  %v317 = vpop.f32.mrb[0].mxu0
  %318 = vdwg.mxu0
  %v319 = vmax.f32 %v297, 0.0
  %v320 = vmax.f32 %v300, 0.0
  %v321 = vmax.f32 %v305, 0.0
  %v322 = vmax.f32 %v308, 0.0
  %v323 = vmax.f32 %v313, 0.0
  %v324 = vmax.f32 %v316, 0.0
  %v325 = vld [vmem:[%s1 + $0x38] sm:$0xf]
  %v326 = vld [vmem:[%s1 + $0x3c] sm:$0xf]
  %v327 = vld [vmem:[%s1 + $0x40] sm:$0xf]
  %v328 = vld [vmem:[%s1 + $0x44] sm:$0xf]
  %v329 = vld [vmem:[%s1 + $0x48] sm:$0xf]
  %v330 = vld [vmem:[%s1 + $0x4c] sm:$0xf]
  %v331 = vld [vmem:[%s1 + $0x50] sm:$0x1]
  %v332 = vpack.c.bf16 %v320, %v319
  %v333 = vpack.c.bf16 %v322, %v321
  %v334 = vpack.c.bf16 %v324, %v323
  %v342 = vunpack.c.l.b16 %v325
  %v343 = vunpack.c.l.b16 %v326
  %v344 = vunpack.c.l.b16 %v327
  %v345 = vunpack.c.l.b16 %v328
  %v346 = vunpack.c.l.b16 %v329
  %v347 = vunpack.c.l.b16 %v330
  %v348 = vunpack.c.l.b16 %v331
  %v349 = vpack.c.b16 %v343, %v342
  %v350 = vpack.c.b16 %v345, %v344
  %v351 = vpack.c.b16 %v347, %v346
  %v352 = vpack.c.b16 %v348, %v348
  %vm353 = vcmask 334848
  %v355 = vsel %vm353, %v349, 0
  %v358 = vsel %vm353, %v350, 0
  %v361 = vsel %vm353, %v351, 0
  %v364 = vsel %vm353, %v352, 0
  %vm366 = vcmask 1043456
  %vm367 = vcmask 1044480
  %v368 = vsel %vm366, 4294967295, 65535
  %v369 = vsel %vm367, %v368, 0
  %v371 = vand.u32 %v334, %v369
  %373 = vmatprep.subr.bf16.mxu0 0
  %374 = vmatpush1.bf16.msra.mxu0 %v332
  %375 = vmatprep.subr.bf16.mxu0 0
  %376 = vmatpush1.bf16.msra.mxu0 %v333
  %377 = vmatprep.subr.bf16.mxu0 0
  %378 = vmatpush1.bf16.msra.mxu0 %v371
  %379 = vmatprep.subr.bf16.mxu0 0
  %380 = vmatpush1.bf16.msra.mxu0 0
  %381 = vmatprep.subr.bf16.mxu0 0
  %382 = vmatpush1.bf16.msra.mxu0 0
  %383 = vmatprep.subr.bf16.mxu0 0
  %384 = vmatpush1.bf16.msra.mxu0 0
  %385 = vmatprep.subr.bf16.mxu0 0
  %386 = vmatpush1.bf16.msra.mxu0 0
  %387 = vmatprep.subr.bf16.mxu0 0
  %388 = vmatpush1.bf16.msra.mxu0 0
  %389 = vmatprep.subr.bf16.mxu0 0
  %390 = vmatpush1.bf16.msra.mxu0 0
  %391 = vmatprep.subr.bf16.mxu0 0
  %392 = vmatpush1.bf16.msra.mxu0 0
  %393 = vmatprep.subr.bf16.mxu0 0
  %394 = vmatpush1.bf16.msra.mxu0 0
  %395 = vmatprep.subr.bf16.mxu0 0
  %396 = vmatpush1.bf16.msra.mxu0 0
  %397 = vmatprep.subr.bf16.mxu0 0
  %398 = vmatpush1.bf16.msra.mxu0 0
  %399 = vmatprep.subr.bf16.mxu0 0
  %400 = vmatpush1.bf16.msra.mxu0 0
  %401 = vmatprep.subr.bf16.mxu0 0
  %402 = vmatpush1.bf16.msra.mxu0 0
  %403 = vmatprep.subr.bf16.mxu0 0
  %404 = vmatpush1.bf16.msra.mxu0 0
  %405 = vmatprep.mubr.bf16.mxu0 0
  %406 = vmatmul.mubr.bf16.gmra.mrb[0].mxu0 %v355
  %v407 = vpop.f32.mrb[0].mxu0
  %v408 = vadd.f32 0.0, %v407
  %v409 = vpop.f32.mrb[0].mxu0
  %v410 = vpop.f32.mrb[0].mxu0
  %v411 = vadd.f32 0.0, %v410
  %v412 = vpop.f32.mrb[0].mxu0
  %413 = vmatprep.mubr.bf16.mxu0 0
  %414 = vmatmul.mubr.bf16.gmra.mrb[0].mxu0 %v358
  %v415 = vpop.f32.mrb[0].mxu0
  %v416 = vadd.f32 0.0, %v415
  %v417 = vpop.f32.mrb[0].mxu0
  %v418 = vpop.f32.mrb[0].mxu0
  %v419 = vadd.f32 0.0, %v418
  %v420 = vpop.f32.mrb[0].mxu0
  %421 = vmatprep.mubr.bf16.mxu0 0
  %422 = vmatmul.mubr.bf16.gmra.mrb[0].mxu0 %v361
  %v423 = vpop.f32.mrb[0].mxu0
  %v424 = vadd.f32 0.0, %v423
  %v425 = vpop.f32.mrb[0].mxu0
  %v426 = vpop.f32.mrb[0].mxu0
  %v427 = vadd.f32 0.0, %v426
  %v428 = vpop.f32.mrb[0].mxu0
  %429 = vmatprep.mubr.bf16.mxu0 0
  %430 = vmatmul.mubr.bf16.gmra.mrb[0].mxu0 %v364
  %v431 = vpop.f32.mrb[0].mxu0
  %v432 = vadd.f32 0.0, %v431
  %v433 = vpop.f32.mrb[0].mxu0
  %v434 = vpop.f32.mrb[0].mxu0
  %v435 = vpop.f32.mrb[0].mxu0
  %436 = vdwg.mxu0
  %v437 = vmax.f32 %v408, 0.0
  %v438 = vmax.f32 %v411, 0.0
  %v439 = vmax.f32 %v416, 0.0
  %v440 = vmax.f32 %v419, 0.0
  %v441 = vmax.f32 %v424, 0.0
  %v442 = vmax.f32 %v427, 0.0
  %v443 = vmax.f32 %v432, 0.0
  %v444 = vld [vmem:[%s1 + $0x58] sm:$0xf]
  %v445 = vld [vmem:[%s1 + $0x5c] sm:$0xf]
  %v446 = vld [vmem:[%s1 + $0x60] sm:$0x1]
  %v447 = vpack.c.bf16 %v438, %v437
  %v448 = vpack.c.bf16 %v440, %v439
  %v449 = vpack.c.bf16 %v442, %v441
  %v450 = vpack.c.bf16 %v443, %v443
  %v454 = vunpack.c.l.b16 %v444
  %v455 = vunpack.c.l.b16 %v445
  %v456 = vunpack.c.l.b16 %v446
  %v457 = vpack.c.b16 %v455, %v454
  %v458 = vpack.c.b16 %v456, %v456
  %vm459 = vcmask 400384
  %v461 = vsel %vm459, %v457, 0
  %v464 = vsel %vm459, %v458, 0
  %vm466 = vcmask 1040384
  %v467 = vsel 0, 4294967295, 65535
  %v468 = vsel %vm466, %v467, 0
  %v470 = vand.u32 %v450, %v468
  %472 = vmatprep.subr.bf16.mxu0 0
  %473 = vmatpush1.bf16.msra.mxu0 %v447
  %474 = vmatprep.subr.bf16.mxu0 0
  %475 = vmatpush1.bf16.msra.mxu0 %v448
  %476 = vmatprep.subr.bf16.mxu0 0
  %477 = vmatpush1.bf16.msra.mxu0 %v449
  %478 = vmatprep.subr.bf16.mxu0 0
  %479 = vmatpush1.bf16.msra.mxu0 %v470
  %480 = vmatprep.subr.bf16.mxu0 0
  %481 = vmatpush1.bf16.msra.mxu0 0
  %482 = vmatprep.subr.bf16.mxu0 0
  %483 = vmatpush1.bf16.msra.mxu0 0
  %484 = vmatprep.subr.bf16.mxu0 0
  %485 = vmatpush1.bf16.msra.mxu0 0
  %486 = vmatprep.subr.bf16.mxu0 0
  %487 = vmatpush1.bf16.msra.mxu0 0
  %488 = vmatprep.subr.bf16.mxu0 0
  %489 = vmatpush1.bf16.msra.mxu0 0
  %490 = vmatprep.subr.bf16.mxu0 0
  %491 = vmatpush1.bf16.msra.mxu0 0
  %492 = vmatprep.subr.bf16.mxu0 0
  %493 = vmatpush1.bf16.msra.mxu0 0
  %494 = vmatprep.subr.bf16.mxu0 0
  %495 = vmatpush1.bf16.msra.mxu0 0
  %496 = vmatprep.subr.bf16.mxu0 0
  %497 = vmatpush1.bf16.msra.mxu0 0
  %498 = vmatprep.subr.bf16.mxu0 0
  %499 = vmatpush1.bf16.msra.mxu0 0
  %500 = vmatprep.subr.bf16.mxu0 0
  %501 = vmatpush1.bf16.msra.mxu0 0
  %502 = vmatprep.subr.bf16.mxu0 0
  %503 = vmatpush1.bf16.msra.mxu0 0
  %504 = vmatprep.mubr.bf16.mxu0 0
  %505 = vmatmul.mubr.bf16.gmra.mrb[0].mxu0 %v461
  %v506 = vpop.f32.mrb[0].mxu0
  %v507 = vadd.f32 0.0, %v506
  %v508 = vpop.f32.mrb[0].mxu0
  %v509 = vpop.f32.mrb[0].mxu0
  %v510 = vadd.f32 0.0, %v509
  %v511 = vpop.f32.mrb[0].mxu0
  %512 = vmatprep.mubr.bf16.mxu0 0
  %513 = vmatmul.mubr.bf16.gmra.mrb[0].mxu0 %v464
  %v514 = vpop.f32.mrb[0].mxu0
  %v515 = vadd.f32 0.0, %v514
  %v516 = vpop.f32.mrb[0].mxu0
  %v517 = vpop.f32.mrb[0].mxu0
  %v518 = vpop.f32.mrb[0].mxu0
  %519 = vdwg.mxu0
  %v520 = vmax.f32 %v507, 0.0
  %v521 = vmax.f32 %v510, 0.0
  %v522 = vmax.f32 %v515, 0.0
  %v523 = vld [vmem:[%s1 + $0x68] sm:$0x3]
  %v524 = vpack.c.bf16 %v521, %v520
  %v525 = vpack.c.bf16 %v522, %v522
  %vm526 = vcmask 138240
  %v528 = vsel %vm526, %v523, 0
  %v531 = vand.u32 %v525, %v468
  %533 = vmatprep.subr.bf16.mxu0 0
  %534 = vmatpush1.bf16.msra.mxu0 %v524
  %535 = vmatprep.subr.bf16.mxu0 0
  %536 = vmatpush1.bf16.msra.mxu0 %v531
  %537 = vmatprep.subr.bf16.mxu0 0
  %538 = vmatpush1.bf16.msra.mxu0 0
  %539 = vmatprep.subr.bf16.mxu0 0
  %540 = vmatpush1.bf16.msra.mxu0 0
  %541 = vmatprep.subr.bf16.mxu0 0
  %542 = vmatpush1.bf16.msra.mxu0 0
  %543 = vmatprep.subr.bf16.mxu0 0
  %544 = vmatpush1.bf16.msra.mxu0 0
  %545 = vmatprep.subr.bf16.mxu0 0
  %546 = vmatpush1.bf16.msra.mxu0 0
  %547 = vmatprep.subr.bf16.mxu0 0
  %548 = vmatpush1.bf16.msra.mxu0 0
  %549 = vmatprep.subr.bf16.mxu0 0
  %550 = vmatpush1.bf16.msra.mxu0 0
  %551 = vmatprep.subr.bf16.mxu0 0
  %552 = vmatpush1.bf16.msra.mxu0 0
  %553 = vmatprep.subr.bf16.mxu0 0
  %554 = vmatpush1.bf16.msra.mxu0 0
  %555 = vmatprep.subr.bf16.mxu0 0
  %556 = vmatpush1.bf16.msra.mxu0 0
  %557 = vmatprep.subr.bf16.mxu0 0
  %558 = vmatpush1.bf16.msra.mxu0 0
  %559 = vmatprep.subr.bf16.mxu0 0
  %560 = vmatpush1.bf16.msra.mxu0 0
  %561 = vmatprep.subr.bf16.mxu0 0
  %562 = vmatpush1.bf16.msra.mxu0 0
  %563 = vmatprep.subr.bf16.mxu0 0
  %564 = vmatpush1.bf16.msra.mxu0 0
  %565 = vmatprep.mubr.bf16.mxu0 0
  %566 = vmatmul.mubr.bf16.gmra.mrb[0].mxu0 %v528
  %v567 = vpop.f32.mrb[0].mxu0
  %v568 = vadd.f32 0.0, %v567
  %v569 = vpop.f32.mrb[0].mxu0
  %v570 = vpop.f32.mrb[0].mxu0
  %v571 = vpop.f32.mrb[0].mxu0
  %572 = vdwg.mxu0
  %v573 = vmax.f32 %v568, 0.0
  %574 = vxpose.xlu0.b32.start [1/16] %v573, 128
  %575 = vxpose.xlu0.b32.cont [2/16] 0.0, 128
  %576 = vxpose.xlu0.b32.cont [3/16] 0.0, 128
  %577 = vxpose.xlu0.b32.cont [4/16] 0.0, 128
  %578 = vxpose.xlu0.b32.cont [5/16] 0.0, 128
  %579 = vxpose.xlu0.b32.cont [6/16] 0.0, 128
  %580 = vxpose.xlu0.b32.cont [7/16] 0.0, 128
  %581 = vxpose.xlu0.b32.cont [8/16] 0.0, 128
  %582 = vxpose.xlu0.b32.cont [9/16] 0.0, 128
  %583 = vxpose.xlu0.b32.cont [10/16] 0.0, 128
  %584 = vxpose.xlu0.b32.cont [11/16] 0.0, 128
  %585 = vxpose.xlu0.b32.cont [12/16] 0.0, 128
  %586 = vxpose.xlu0.b32.cont [13/16] 0.0, 128
  %587 = vxpose.xlu0.b32.cont [14/16] 0.0, 128
  %588 = vxpose.xlu0.b32.cont [15/16] 0.0, 128
  %589 = vxpose.xlu0.b32.end [16/16] 0.0, 128
  %v590 = vpop.trf.xlu0
  %v591 = vpop.trf.xlu0
  %v592 = vpop.trf.xlu0
  %v593 = vpop.trf.xlu0
  %v594 = vpop.trf.xlu0
  %v595 = vpop.trf.xlu0
  %v596 = vpop.trf.xlu0
  %v597 = vpop.trf.xlu0
  %v598 = vpop.trf.xlu0
  %v599 = vpop.trf.xlu0
  %v600 = vpop.trf.xlu0
  %v601 = vpop.trf.xlu0
  %v602 = vpop.trf.xlu0
  %v603 = vpop.trf.xlu0
  %v604 = vpop.trf.xlu0
  %v605 = vpop.trf.xlu0
  %vm606 = vcmask 23552
  %607 = vst.msk [vmem:[%s3] sm:$0xff] %vm606, %v590
  %608 = vst.msk [vmem:[%s3 + $0x8] sm:$0xff] %vm606, %v591
  %609 = vst.msk [vmem:[%s3 + $0x10] sm:$0xff] %vm606, %v592
  %610 = vst.msk [vmem:[%s3 + $0x18] sm:$0xff] %vm606, %v593
  %611 = vst.msk [vmem:[%s3 + $0x20] sm:$0xff] %vm606, %v594
  %612 = vst.msk [vmem:[%s3 + $0x28] sm:$0xff] %vm606, %v595
  %613 = vst.msk [vmem:[%s3 + $0x30] sm:$0xff] %vm606, %v596
  %614 = vst.msk [vmem:[%s3 + $0x38] sm:$0xff] %vm606, %v597
  %615 = vst.msk [vmem:[%s3 + $0x40] sm:$0xff] %vm606, %v598
  %616 = vst.msk [vmem:[%s3 + $0x48] sm:$0xff] %vm606, %v599
  %617 = vst.msk [vmem:[%s3 + $0x50] sm:$0xff] %vm606, %v600
  %618 = vst.msk [vmem:[%s3 + $0x58] sm:$0xff] %vm606, %v601
  %619 = vst.msk [vmem:[%s3 + $0x60] sm:$0xff] %vm606, %v602
  %620 = vst.msk [vmem:[%s3 + $0x68] sm:$0xff] %vm606, %v603
  %621 = vst.msk [vmem:[%s3 + $0x70] sm:$0xff] %vm606, %v604
  %622 = vst.msk [vmem:[%s3 + $0x78] sm:$0xff] %vm606, %v605
  %v623 = vld [vmem:[%s1 + $0x70] sm:$0xf]
  %v624 = vld [vmem:[%s1 + $0x74] sm:$0xf]
  %v625 = vld [vmem:[%s1 + $0x78] sm:$0x1]
  %v626 = vpack.c.bf16 %v573, %v573
  %v630 = vunpack.c.l.b16 %v623
  %v631 = vunpack.c.l.b16 %v624
  %v632 = vunpack.c.l.b16 %v625
  %v633 = vpack.c.b16 %v631, %v630
  %v634 = vpack.c.b16 %v632, %v632
  %vm635 = vcmask 31744
  %v637 = vsel %vm635, %v633, 0
  %v640 = vsel %vm635, %v634, 0
  %v643 = vsel %vm255, %v626, 0
  %645 = vmatprep.subr.bf16.mxu0 0
  %646 = vmatpush1.bf16.msra.mxu0 %v643
  %647 = vmatprep.subr.bf16.mxu0 0
  %648 = vmatpush1.bf16.msra.mxu0 0
  %649 = vmatprep.subr.bf16.mxu0 0
  %650 = vmatpush1.bf16.msra.mxu0 0
  %651 = vmatprep.subr.bf16.mxu0 0
  %652 = vmatpush1.bf16.msra.mxu0 0
  %653 = vmatprep.subr.bf16.mxu0 0
  %654 = vmatpush1.bf16.msra.mxu0 0
  %655 = vmatprep.subr.bf16.mxu0 0
  %656 = vmatpush1.bf16.msra.mxu0 0
  %657 = vmatprep.subr.bf16.mxu0 0
  %658 = vmatpush1.bf16.msra.mxu0 0
  %659 = vmatprep.subr.bf16.mxu0 0
  %660 = vmatpush1.bf16.msra.mxu0 0
  %661 = vmatprep.subr.bf16.mxu0 0
  %662 = vmatpush1.bf16.msra.mxu0 0
  %663 = vmatprep.subr.bf16.mxu0 0
  %664 = vmatpush1.bf16.msra.mxu0 0
  %665 = vmatprep.subr.bf16.mxu0 0
  %666 = vmatpush1.bf16.msra.mxu0 0
  %667 = vmatprep.subr.bf16.mxu0 0
  %668 = vmatpush1.bf16.msra.mxu0 0
  %669 = vmatprep.subr.bf16.mxu0 0
  %670 = vmatpush1.bf16.msra.mxu0 0
  %671 = vmatprep.subr.bf16.mxu0 0
  %672 = vmatpush1.bf16.msra.mxu0 0
  %673 = vmatprep.subr.bf16.mxu0 0
  %674 = vmatpush1.bf16.msra.mxu0 0
  %675 = vmatprep.subr.bf16.mxu0 0
  %676 = vmatpush1.bf16.msra.mxu0 0
  %677 = vmatprep.mubr.bf16.mxu0 0
  %678 = vmatmul.mubr.bf16.gmra.mrb[0].mxu0 %v637
  %v679 = vpop.f32.mrb[0].mxu0
  %v680 = vadd.f32 0.0, %v679
  %v681 = vpop.f32.mrb[0].mxu0
  %v682 = vpop.f32.mrb[0].mxu0
  %v683 = vadd.f32 0.0, %v682
  %v684 = vpop.f32.mrb[0].mxu0
  %685 = vmatprep.mubr.bf16.mxu0 0
  %686 = vmatmul.mubr.bf16.gmra.mrb[0].mxu0 %v640
  %v687 = vpop.f32.mrb[0].mxu0
  %v688 = vadd.f32 0.0, %v687
  %v689 = vpop.f32.mrb[0].mxu0
  %v690 = vpop.f32.mrb[0].mxu0
  %v691 = vpop.f32.mrb[0].mxu0
  %692 = vdwg.mxu0
  %v693 = vmax.f32 %v680, 0.0
  %v694 = vmax.f32 %v683, 0.0
  %v695 = vmax.f32 %v688, 0.0
  %v696 = vld [vmem:[%s1 + $0x80] sm:$0xf]
  %v697 = vld [vmem:[%s1 + $0x84] sm:$0xf]
  %v698 = vld [vmem:[%s1 + $0x88] sm:$0xf]
  %v699 = vld [vmem:[%s1 + $0x8c] sm:$0xf]
  %v700 = vld [vmem:[%s1 + $0x90] sm:$0xf]
  %v701 = vld [vmem:[%s1 + $0x94] sm:$0xf]
  %v702 = vld [vmem:[%s1 + $0x98] sm:$0x1]
  %v703 = vpack.c.bf16 %v694, %v693
  %v704 = vpack.c.bf16 %v695, %v695
  %v712 = vunpack.c.l.b16 %v696
  %v713 = vunpack.c.l.b16 %v697
  %v714 = vunpack.c.l.b16 %v698
  %v715 = vunpack.c.l.b16 %v699
  %v716 = vunpack.c.l.b16 %v700
  %v717 = vunpack.c.l.b16 %v701
  %v718 = vunpack.c.l.b16 %v702
  %v719 = vpack.c.b16 %v713, %v712
  %v720 = vpack.c.b16 %v715, %v714
  %v721 = vpack.c.b16 %v717, %v716
  %v722 = vpack.c.b16 %v718, %v718
  %v724 = vsel %vm526, %v719, 0
  %v727 = vsel %vm526, %v720, 0
  %v730 = vsel %vm526, %v721, 0
  %v733 = vsel %vm526, %v722, 0
  %v736 = vand.u32 %v704, %v468
  %738 = vmatprep.subr.bf16.mxu0 0
  %739 = vmatpush1.bf16.msra.mxu0 %v703
  %740 = vmatprep.subr.bf16.mxu0 0
  %741 = vmatpush1.bf16.msra.mxu0 %v736
  %742 = vmatprep.subr.bf16.mxu0 0
  %743 = vmatpush1.bf16.msra.mxu0 0
  %744 = vmatprep.subr.bf16.mxu0 0
  %745 = vmatpush1.bf16.msra.mxu0 0
  %746 = vmatprep.subr.bf16.mxu0 0
  %747 = vmatpush1.bf16.msra.mxu0 0
  %748 = vmatprep.subr.bf16.mxu0 0
  %749 = vmatpush1.bf16.msra.mxu0 0
  %750 = vmatprep.subr.bf16.mxu0 0
  %751 = vmatpush1.bf16.msra.mxu0 0
  %752 = vmatprep.subr.bf16.mxu0 0
  %753 = vmatpush1.bf16.msra.mxu0 0
  %754 = vmatprep.subr.bf16.mxu0 0
  %755 = vmatpush1.bf16.msra.mxu0 0
  %756 = vmatprep.subr.bf16.mxu0 0
  %757 = vmatpush1.bf16.msra.mxu0 0
  %758 = vmatprep.subr.bf16.mxu0 0
  %759 = vmatpush1.bf16.msra.mxu0 0
  %760 = vmatprep.subr.bf16.mxu0 0
  %761 = vmatpush1.bf16.msra.mxu0 0
  %762 = vmatprep.subr.bf16.mxu0 0
  %763 = vmatpush1.bf16.msra.mxu0 0
  %764 = vmatprep.subr.bf16.mxu0 0
  %765 = vmatpush1.bf16.msra.mxu0 0
  %766 = vmatprep.subr.bf16.mxu0 0
  %767 = vmatpush1.bf16.msra.mxu0 0
  %768 = vmatprep.subr.bf16.mxu0 0
  %769 = vmatpush1.bf16.msra.mxu0 0
  %770 = vmatprep.mubr.bf16.mxu0 0
  %771 = vmatmul.mubr.bf16.gmra.mrb[0].mxu0 %v724
  %v772 = vpop.f32.mrb[0].mxu0
  %v773 = vadd.f32 0.0, %v772
  %v774 = vpop.f32.mrb[0].mxu0
  %v775 = vpop.f32.mrb[0].mxu0
  %v776 = vadd.f32 0.0, %v775
  %v777 = vpop.f32.mrb[0].mxu0
  %778 = vmatprep.mubr.bf16.mxu0 0
  %779 = vmatmul.mubr.bf16.gmra.mrb[0].mxu0 %v727
  %v780 = vpop.f32.mrb[0].mxu0
  %v781 = vadd.f32 0.0, %v780
  %v782 = vpop.f32.mrb[0].mxu0
  %v783 = vpop.f32.mrb[0].mxu0
  %v784 = vadd.f32 0.0, %v783
  %v785 = vpop.f32.mrb[0].mxu0
  %786 = vmatprep.mubr.bf16.mxu0 0
  %787 = vmatmul.mubr.bf16.gmra.mrb[0].mxu0 %v730
  %v788 = vpop.f32.mrb[0].mxu0
  %v789 = vadd.f32 0.0, %v788
  %v790 = vpop.f32.mrb[0].mxu0
  %v791 = vpop.f32.mrb[0].mxu0
  %v792 = vadd.f32 0.0, %v791
  %v793 = vpop.f32.mrb[0].mxu0
  %794 = vmatprep.mubr.bf16.mxu0 0
  %795 = vmatmul.mubr.bf16.gmra.mrb[0].mxu0 %v733
  %v796 = vpop.f32.mrb[0].mxu0
  %v797 = vadd.f32 0.0, %v796
  %v798 = vpop.f32.mrb[0].mxu0
  %v799 = vpop.f32.mrb[0].mxu0
  %v800 = vpop.f32.mrb[0].mxu0
  %801 = vdwg.mxu0
  %v802 = vmax.f32 %v773, 0.0
  %v803 = vmax.f32 %v776, 0.0
  %v804 = vmax.f32 %v781, 0.0
  %v805 = vmax.f32 %v784, 0.0
  %v806 = vmax.f32 %v789, 0.0
  %v807 = vmax.f32 %v792, 0.0
  %v808 = vmax.f32 %v797, 0.0
  %v809 = vld [vmem:[%s1 + $0xa0] sm:$0xf]
  %v810 = vld [vmem:[%s1 + $0xa4] sm:$0xf]
  %v811 = vld [vmem:[%s1 + $0xa8] sm:$0xf]
  %v812 = vld [vmem:[%s1 + $0xac] sm:$0xf]
  %v813 = vld [vmem:[%s1 + $0xb0] sm:$0xf]
  %v814 = vld [vmem:[%s1 + $0xb4] sm:$0x1]
  %v815 = vpack.c.bf16 %v803, %v802
  %v816 = vpack.c.bf16 %v805, %v804
  %v817 = vpack.c.bf16 %v807, %v806
  %v818 = vpack.c.bf16 %v808, %v808
  %v825 = vunpack.c.l.b16 %v809
  %v826 = vunpack.c.l.b16 %v810
  %v827 = vunpack.c.l.b16 %v811
  %v828 = vunpack.c.l.b16 %v812
  %v829 = vunpack.c.l.b16 %v813
  %v830 = vunpack.c.l.b16 %v814
  %v831 = vpack.c.b16 %v826, %v825
  %v832 = vpack.c.b16 %v828, %v827
  %v833 = vpack.c.b16 %v830, %v829
  %v835 = vsel %vm459, %v831, 0
  %v838 = vsel %vm459, %v832, 0
  %v841 = vsel %vm459, %v833, 0
  %v844 = vand.u32 %v818, %v468
  %846 = vmatprep.subr.bf16.mxu0 0
  %847 = vmatpush1.bf16.msra.mxu0 %v815
  %848 = vmatprep.subr.bf16.mxu0 0
  %849 = vmatpush1.bf16.msra.mxu0 %v816
  %850 = vmatprep.subr.bf16.mxu0 0
  %851 = vmatpush1.bf16.msra.mxu0 %v817
  %852 = vmatprep.subr.bf16.mxu0 0
  %853 = vmatpush1.bf16.msra.mxu0 %v844
  %854 = vmatprep.subr.bf16.mxu0 0
  %855 = vmatpush1.bf16.msra.mxu0 0
  %856 = vmatprep.subr.bf16.mxu0 0
  %857 = vmatpush1.bf16.msra.mxu0 0
  %858 = vmatprep.subr.bf16.mxu0 0
  %859 = vmatpush1.bf16.msra.mxu0 0
  %860 = vmatprep.subr.bf16.mxu0 0
  %861 = vmatpush1.bf16.msra.mxu0 0
  %862 = vmatprep.subr.bf16.mxu0 0
  %863 = vmatpush1.bf16.msra.mxu0 0
  %864 = vmatprep.subr.bf16.mxu0 0
  %865 = vmatpush1.bf16.msra.mxu0 0
  %866 = vmatprep.subr.bf16.mxu0 0
  %867 = vmatpush1.bf16.msra.mxu0 0
  %868 = vmatprep.subr.bf16.mxu0 0
  %869 = vmatpush1.bf16.msra.mxu0 0
  %870 = vmatprep.subr.bf16.mxu0 0
  %871 = vmatpush1.bf16.msra.mxu0 0
  %872 = vmatprep.subr.bf16.mxu0 0
  %873 = vmatpush1.bf16.msra.mxu0 0
  %874 = vmatprep.subr.bf16.mxu0 0
  %875 = vmatpush1.bf16.msra.mxu0 0
  %876 = vmatprep.subr.bf16.mxu0 0
  %877 = vmatpush1.bf16.msra.mxu0 0
  %878 = vmatprep.mubr.bf16.mxu0 0
  %879 = vmatmul.mubr.bf16.gmra.mrb[0].mxu0 %v835
  %v880 = vpop.f32.mrb[0].mxu0
  %v881 = vadd.f32 0.0, %v880
  %v882 = vpop.f32.mrb[0].mxu0
  %v883 = vpop.f32.mrb[0].mxu0
  %v884 = vadd.f32 0.0, %v883
  %v885 = vpop.f32.mrb[0].mxu0
  %886 = vmatprep.mubr.bf16.mxu0 0
  %887 = vmatmul.mubr.bf16.gmra.mrb[0].mxu0 %v838
  %v888 = vpop.f32.mrb[0].mxu0
  %v889 = vadd.f32 0.0, %v888
  %v890 = vpop.f32.mrb[0].mxu0
  %v891 = vpop.f32.mrb[0].mxu0
  %v892 = vadd.f32 0.0, %v891
  %v893 = vpop.f32.mrb[0].mxu0
  %894 = vmatprep.mubr.bf16.mxu0 0
  %895 = vmatmul.mubr.bf16.gmra.mrb[0].mxu0 %v841
  %v896 = vpop.f32.mrb[0].mxu0
  %v897 = vadd.f32 0.0, %v896
  %v898 = vpop.f32.mrb[0].mxu0
  %v899 = vpop.f32.mrb[0].mxu0
  %v900 = vadd.f32 0.0, %v899
  %v901 = vpop.f32.mrb[0].mxu0
  %902 = vdwg.mxu0
  %v903 = vmax.f32 %v881, 0.0
  %v904 = vmax.f32 %v884, 0.0
  %v905 = vmax.f32 %v889, 0.0
  %v906 = vmax.f32 %v892, 0.0
  %v907 = vmax.f32 %v897, 0.0
  %v908 = vmax.f32 %v900, 0.0
  %v909 = vld [vmem:[%s1 + $0xb8] sm:$0xf]
  %v910 = vld [vmem:[%s1 + $0xbc] sm:$0xf]
  %v911 = vld [vmem:[%s1 + $0xc0] sm:$0xf]
  %v912 = vld [vmem:[%s1 + $0xc4] sm:$0xf]
  %v913 = vld [vmem:[%s1 + $0xc8] sm:$0xf]
  %v914 = vld [vmem:[%s1 + $0xcc] sm:$0xf]
  %v915 = vld [vmem:[%s1 + $0xd0] sm:$0x7]
  %v916 = vpack.c.bf16 %v904, %v903
  %v917 = vpack.c.bf16 %v906, %v905
  %v918 = vpack.c.bf16 %v908, %v907
  %v926 = vunpack.c.l.b16 %v909
  %v927 = vunpack.c.l.b16 %v910
  %v928 = vunpack.c.l.b16 %v911
  %v929 = vunpack.c.l.b16 %v912
  %v930 = vunpack.c.l.b16 %v913
  %v931 = vunpack.c.l.b16 %v914
  %v932 = vunpack.c.l.b16 %v915
  %v933 = vpack.c.b16 %v927, %v926
  %v934 = vpack.c.b16 %v929, %v928
  %v935 = vpack.c.b16 %v931, %v930
  %v936 = vpack.c.b16 %v932, %v932
  %v938 = vsel %vm353, %v933, 0
  %v941 = vsel %vm353, %v934, 0
  %v944 = vsel %vm353, %v935, 0
  %v947 = vsel %vm353, %v936, 0
  %v950 = vand.u32 %v918, %v369
  %952 = vmatprep.subr.bf16.mxu0 0
  %953 = vmatpush1.bf16.msra.mxu0 %v916
  %954 = vmatprep.subr.bf16.mxu0 0
  %955 = vmatpush1.bf16.msra.mxu0 %v917
  %956 = vmatprep.subr.bf16.mxu0 0
  %957 = vmatpush1.bf16.msra.mxu0 %v950
  %958 = vmatprep.subr.bf16.mxu0 0
  %959 = vmatpush1.bf16.msra.mxu0 0
  %960 = vmatprep.subr.bf16.mxu0 0
  %961 = vmatpush1.bf16.msra.mxu0 0
  %962 = vmatprep.subr.bf16.mxu0 0
  %963 = vmatpush1.bf16.msra.mxu0 0
  %964 = vmatprep.subr.bf16.mxu0 0
  %965 = vmatpush1.bf16.msra.mxu0 0
  %966 = vmatprep.subr.bf16.mxu0 0
  %967 = vmatpush1.bf16.msra.mxu0 0
  %968 = vmatprep.subr.bf16.mxu0 0
  %969 = vmatpush1.bf16.msra.mxu0 0
  %970 = vmatprep.subr.bf16.mxu0 0
  %971 = vmatpush1.bf16.msra.mxu0 0
  %972 = vmatprep.subr.bf16.mxu0 0
  %973 = vmatpush1.bf16.msra.mxu0 0
  %974 = vmatprep.subr.bf16.mxu0 0
  %975 = vmatpush1.bf16.msra.mxu0 0
  %976 = vmatprep.subr.bf16.mxu0 0
  %977 = vmatpush1.bf16.msra.mxu0 0
  %978 = vmatprep.subr.bf16.mxu0 0
  %979 = vmatpush1.bf16.msra.mxu0 0
  %980 = vmatprep.subr.bf16.mxu0 0
  %981 = vmatpush1.bf16.msra.mxu0 0
  %982 = vmatprep.subr.bf16.mxu0 0
  %983 = vmatpush1.bf16.msra.mxu0 0
  %984 = vmatprep.mubr.bf16.mxu0 0
  %985 = vmatmul.mubr.bf16.gmra.mrb[0].mxu0 %v938
  %v986 = vpop.f32.mrb[0].mxu0
  %v987 = vadd.f32 0.0, %v986
  %v988 = vpop.f32.mrb[0].mxu0
  %v989 = vpop.f32.mrb[0].mxu0
  %v990 = vadd.f32 0.0, %v989
  %v991 = vpop.f32.mrb[0].mxu0
  %992 = vmatprep.mubr.bf16.mxu0 0
  %993 = vmatmul.mubr.bf16.gmra.mrb[0].mxu0 %v941
  %v994 = vpop.f32.mrb[0].mxu0
  %v995 = vadd.f32 0.0, %v994
  %v996 = vpop.f32.mrb[0].mxu0
  %v997 = vpop.f32.mrb[0].mxu0
  %v998 = vadd.f32 0.0, %v997
  %v999 = vpop.f32.mrb[0].mxu0
  %1000 = vmatprep.mubr.bf16.mxu0 0
  %1001 = vmatmul.mubr.bf16.gmra.mrb[0].mxu0 %v944
  %v1002 = vpop.f32.mrb[0].mxu0
  %v1003 = vadd.f32 0.0, %v1002
  %v1004 = vpop.f32.mrb[0].mxu0
  %v1005 = vpop.f32.mrb[0].mxu0
  %v1006 = vadd.f32 0.0, %v1005
  %v1007 = vpop.f32.mrb[0].mxu0
  %1008 = vmatprep.mubr.bf16.mxu0 0
  %1009 = vmatmul.mubr.bf16.gmra.mrb[0].mxu0 %v947
  %v1010 = vpop.f32.mrb[0].mxu0
  %v1011 = vadd.f32 0.0, %v1010
  %v1012 = vpop.f32.mrb[0].mxu0
  %v1013 = vpop.f32.mrb[0].mxu0
  %v1014 = vpop.f32.mrb[0].mxu0
  %1015 = vdwg.mxu0
  %v1016 = vmax.f32 %v987, 0.0
  %v1017 = vmax.f32 %v990, 0.0
  %v1018 = vmax.f32 %v995, 0.0
  %v1019 = vmax.f32 %v998, 0.0
  %v1020 = vmax.f32 %v1003, 0.0
  %v1021 = vmax.f32 %v1006, 0.0
  %v1022 = vmax.f32 %v1011, 0.0
  %v1023 = vld [vmem:[%s1 + $0xd8] sm:$0xf]
  %v1024 = vld [vmem:[%s1 + $0xdc] sm:$0xf]
  %v1025 = vld [vmem:[%s1 + $0xe0] sm:$0xf]
  %v1026 = vld [vmem:[%s1 + $0xe4] sm:$0x7]
  %v1027 = vpack.c.bf16 %v1017, %v1016
  %v1028 = vpack.c.bf16 %v1019, %v1018
  %v1029 = vpack.c.bf16 %v1021, %v1020
  %v1030 = vpack.c.bf16 %v1022, %v1022
  %v1035 = vunpack.c.l.b16 %v1023
  %v1036 = vunpack.c.l.b16 %v1024
  %v1037 = vunpack.c.l.b16 %v1025
  %v1038 = vunpack.c.l.b16 %v1026
  %v1039 = vpack.c.b16 %v1036, %v1035
  %v1040 = vpack.c.b16 %v1038, %v1037
  %v1042 = vsel %vm245, %v1039, 0
  %v1045 = vsel %vm245, %v1040, 0
  %v1048 = vand.u32 %v1030, %v258
  %1050 = vmatprep.subr.bf16.mxu0 0
  %1051 = vmatpush1.bf16.msra.mxu0 %v1027
  %1052 = vmatprep.subr.bf16.mxu0 0
  %1053 = vmatpush1.bf16.msra.mxu0 %v1028
  %1054 = vmatprep.subr.bf16.mxu0 0
  %1055 = vmatpush1.bf16.msra.mxu0 %v1029
  %1056 = vmatprep.subr.bf16.mxu0 0
  %1057 = vmatpush1.bf16.msra.mxu0 %v1048
  %1058 = vmatprep.subr.bf16.mxu0 0
  %1059 = vmatpush1.bf16.msra.mxu0 0
  %1060 = vmatprep.subr.bf16.mxu0 0
  %1061 = vmatpush1.bf16.msra.mxu0 0
  %1062 = vmatprep.subr.bf16.mxu0 0
  %1063 = vmatpush1.bf16.msra.mxu0 0
  %1064 = vmatprep.subr.bf16.mxu0 0
  %1065 = vmatpush1.bf16.msra.mxu0 0
  %1066 = vmatprep.subr.bf16.mxu0 0
  %1067 = vmatpush1.bf16.msra.mxu0 0
  %1068 = vmatprep.subr.bf16.mxu0 0
  %1069 = vmatpush1.bf16.msra.mxu0 0
  %1070 = vmatprep.subr.bf16.mxu0 0
  %1071 = vmatpush1.bf16.msra.mxu0 0
  %1072 = vmatprep.subr.bf16.mxu0 0
  %1073 = vmatpush1.bf16.msra.mxu0 0
  %1074 = vmatprep.subr.bf16.mxu0 0
  %1075 = vmatpush1.bf16.msra.mxu0 0
  %1076 = vmatprep.subr.bf16.mxu0 0
  %1077 = vmatpush1.bf16.msra.mxu0 0
  %1078 = vmatprep.subr.bf16.mxu0 0
  %1079 = vmatpush1.bf16.msra.mxu0 0
  %1080 = vmatprep.subr.bf16.mxu0 0
  %1081 = vmatpush1.bf16.msra.mxu0 0
  %1082 = vmatprep.mubr.bf16.mxu0 0
  %1083 = vmatmul.mubr.bf16.gmra.mrb[0].mxu0 %v1042
  %v1084 = vpop.f32.mrb[0].mxu0
  %v1085 = vadd.f32 0.0, %v1084
  %v1086 = vpop.f32.mrb[0].mxu0
  %v1087 = vpop.f32.mrb[0].mxu0
  %v1088 = vadd.f32 0.0, %v1087
  %v1089 = vpop.f32.mrb[0].mxu0
  %1090 = vmatprep.mubr.bf16.mxu0 0
  %1091 = vmatmul.mubr.bf16.gmra.mrb[0].mxu0 %v1045
  %v1092 = vpop.f32.mrb[0].mxu0
  %v1093 = vadd.f32 0.0, %v1092
  %v1094 = vpop.f32.mrb[0].mxu0
  %v1095 = vpop.f32.mrb[0].mxu0
  %v1096 = vadd.f32 0.0, %v1095
  %v1097 = vpop.f32.mrb[0].mxu0
  %1098 = vdwg.mxu0
  %v1099 = vmul.f32 %v1085, 0.5
  %v1100 = vmul.f32 %v1088, 0.5
  %v1101 = vmul.f32 %v1093, 0.5
  %v1102 = vmul.f32 %v1096, 0.5
  %v1103 = vtanh.pop %v1099
  %v1104 = vtanh.pop %v1100
  %v1105 = vtanh.pop %v1101
  %v1106 = vtanh.pop %v1102
  %v1107 = vmul.f32 %v1103, 0.5
  %v1108 = vmul.f32 %v1104, 0.5
  %v1109 = vmul.f32 %v1105, 0.5
  %v1110 = vmul.f32 %v1106, 0.5
  %v1111 = vadd.f32 %v1107, 0.5
  %v1112 = vadd.f32 %v1108, 0.5
  %v1113 = vadd.f32 %v1109, 0.5
  %v1114 = vadd.f32 %v1110, 0.5
  %1115 = vxpose.xlu0.b32.start [1/16] %v1111, 128
  %1116 = vxpose.xlu0.b32.cont [2/16] %v1112, 128
  %1117 = vxpose.xlu0.b32.cont [3/16] %v1113, 128
  %1118 = vxpose.xlu0.b32.cont [4/16] %v1114, 128
  %1119 = vxpose.xlu0.b32.cont [5/16] 0.0, 128
  %1120 = vxpose.xlu0.b32.cont [6/16] 0.0, 128
  %1121 = vxpose.xlu0.b32.cont [7/16] 0.0, 128
  %1122 = vxpose.xlu0.b32.cont [8/16] 0.0, 128
  %1123 = vxpose.xlu0.b32.cont [9/16] 0.0, 128
  %1124 = vxpose.xlu0.b32.cont [10/16] 0.0, 128
  %1125 = vxpose.xlu0.b32.cont [11/16] 0.0, 128
  %1126 = vxpose.xlu0.b32.cont [12/16] 0.0, 128
  %1127 = vxpose.xlu0.b32.cont [13/16] 0.0, 128
  %1128 = vxpose.xlu0.b32.cont [14/16] 0.0, 128
  %1129 = vxpose.xlu0.b32.cont [15/16] 0.0, 128
  %1130 = vxpose.xlu0.b32.end [16/16] 0.0, 128
  %v1131 = vpop.trf.xlu0
  %v1132 = vpop.trf.xlu0
  %v1133 = vpop.trf.xlu0
  %v1134 = vpop.trf.xlu0
  %v1135 = vpop.trf.xlu0
  %v1136 = vpop.trf.xlu0
  %v1137 = vpop.trf.xlu0
  %v1138 = vpop.trf.xlu0
  %v1139 = vpop.trf.xlu0
  %v1140 = vpop.trf.xlu0
  %v1141 = vpop.trf.xlu0
  %v1142 = vpop.trf.xlu0
  %v1143 = vpop.trf.xlu0
  %v1144 = vpop.trf.xlu0
  %v1145 = vpop.trf.xlu0
  %v1146 = vpop.trf.xlu0
  %1147 = vst.msk [vmem:[%s2] sm:$0xff] %vm112, %v1131
  %1148 = vst.msk [vmem:[%s2 + $0x8] sm:$0xff] %vm112, %v1132
  %1149 = vst.msk [vmem:[%s2 + $0x10] sm:$0xff] %vm112, %v1133
  %1150 = vst.msk [vmem:[%s2 + $0x18] sm:$0xff] %vm112, %v1134
  %1151 = vst.msk [vmem:[%s2 + $0x20] sm:$0xff] %vm112, %v1135
  %1152 = vst.msk [vmem:[%s2 + $0x28] sm:$0xff] %vm112, %v1136
  %1153 = vst.msk [vmem:[%s2 + $0x30] sm:$0xff] %vm112, %v1137
  %1154 = vst.msk [vmem:[%s2 + $0x38] sm:$0xff] %vm112, %v1138
  %1155 = vst.msk [vmem:[%s2 + $0x40] sm:$0xff] %vm112, %v1139
  %1156 = vst.msk [vmem:[%s2 + $0x48] sm:$0xff] %vm112, %v1140
  %1157 = vst.msk [vmem:[%s2 + $0x50] sm:$0xff] %vm112, %v1141
  %1158 = vst.msk [vmem:[%s2 + $0x58] sm:$0xff] %vm112, %v1142
  %1159 = vst.msk [vmem:[%s2 + $0x60] sm:$0xff] %vm112, %v1143
  %1160 = vst.msk [vmem:[%s2 + $0x68] sm:$0xff] %vm112, %v1144
  %1161 = vst.msk [vmem:[%s2 + $0x70] sm:$0xff] %vm112, %v1145
  %1162 = vst.msk [vmem:[%s2 + $0x78] sm:$0xff] %vm112, %v1146
  // Predicated region
  $region10: #{tpu_custom_call.1} parent=0 // pred_check
    _
  $region11: #{tpu_custom_call.1} parent=0 // pred_check_branch
    %1164 = sbr.rel (0) target = $region13
  $region12: #{tpu_custom_call.1} parent=0 // pred_region
    _
  $region13: #{tpu_custom_call.1} parent=0 // pred_fallthru
    _
  // Predicated region
  $region14: #{tpu_custom_call.1} parent=0 // pred_check
    _
  $region15: #{tpu_custom_call.1} parent=0 // pred_check_branch
    %1166 = sbr.rel (0) target = $region17
  $region16: #{tpu_custom_call.1} parent=0 // pred_region
    _
  $region17: #{tpu_custom_call.1} parent=0 // pred_fallthru
    _
  // Predicated region
  $region18: #{tpu_custom_call.1} parent=0 // pred_check
    _
  $region19: #{tpu_custom_call.1} parent=0 // pred_check_branch
    %1168 = sbr.rel (0) target = $region21
  $region20: #{tpu_custom_call.1} parent=0 // pred_region
    _
  $region21: #{tpu_custom_call.1} parent=0 // pred_fallthru
    _
  // Predicated region
  $region22: #{tpu_custom_call.1} parent=0 // pred_check
    _
  $region23: #{tpu_custom_call.1} parent=0 // pred_check_branch
    %1170 = sbr.rel (0) target = $region25
  $region24: #{tpu_custom_call.1} parent=0 // pred_region
    _
  $region25: #{tpu_custom_call.1} parent=0 // pred_fallthru
    _

// kernel: cae2_forward.1
$region0: #{cae2_forward.1}
  #allocation0 [shape = 'u32[]', space=smem, size = 0x4, offset = 0x4, fixed_abs, tag = 'smem constant byte address 0x4 - core index']
  #allocation1 [shape = 'u32[144,128]{1,0:T(1,128)}', space=vmem, size = 0x12000, scoped, tag = 'internal scratch']
  %s0 = inlined_call_operand.vmem [shape: f32[128,30], index: 0, kind: input, shape index: {}]
  %s1 = inlined_call_operand.vmem [shape: bf16[544,64], index: 1, kind: input, shape index: {}]
  %s2 = inlined_call_operand.vmem [shape: f32[128,30], index: 2, kind: output, shape index: {0}]
  %s3 = inlined_call_operand.vmem [shape: f32[128,3], index: 3, kind: output, shape index: {1}]
  %4 = xla_tuple %s2, %s3
  %s5 = sld [smem:[#allocation0]]
  $region26: #{cae2_forward.1} parent=0
    _
  %s7 = ssub.s32 1, %s5
  %s8 = scalar_select 0, %s7, %s5
  // Predicated region
  $region2: #{cae2_forward.1} parent=0 // pred_check
    _
  $region3: #{cae2_forward.1} parent=0 // pred_check_branch
    %10 = sbr.rel (0) target = $region5
  $region4: #{cae2_forward.1} parent=0 // pred_region
    _
  $region5: #{cae2_forward.1} parent=0 // pred_fallthru
    _
  // Predicated region
  $region6: #{cae2_forward.1} parent=0 // pred_check
    _
  $region7: #{cae2_forward.1} parent=0 // pred_check_branch
    %12 = sbr.rel (0) target = $region9
  $region8: #{cae2_forward.1} parent=0 // pred_region
    _
  $region9: #{cae2_forward.1} parent=0 // pred_fallthru
    _
  %v14 = vld [vmem:[%s0] sm:$0xff]
  %v15 = vld [vmem:[%s0 + $0x8] sm:$0xff]
  %v16 = vld [vmem:[%s0 + $0x10] sm:$0xff]
  %v17 = vld [vmem:[%s0 + $0x18] sm:$0xff]
  %v18 = vld [vmem:[%s0 + $0x20] sm:$0xff]
  %v19 = vld [vmem:[%s0 + $0x28] sm:$0xff]
  %v20 = vld [vmem:[%s0 + $0x30] sm:$0xff]
  %v21 = vld [vmem:[%s0 + $0x38] sm:$0xff]
  %v22 = vld [vmem:[%s0 + $0x40] sm:$0xff]
  %v23 = vld [vmem:[%s0 + $0x48] sm:$0xff]
  %v24 = vld [vmem:[%s0 + $0x50] sm:$0xff]
  %v25 = vld [vmem:[%s0 + $0x58] sm:$0xff]
  %v26 = vld [vmem:[%s0 + $0x60] sm:$0xff]
  %v27 = vld [vmem:[%s0 + $0x68] sm:$0xff]
  %v28 = vld [vmem:[%s0 + $0x70] sm:$0xff]
  %v29 = vld [vmem:[%s0 + $0x78] sm:$0xff]
  %v30 = vpack.c.bf16 %v15, %v14
  %v31 = vpack.c.bf16 %v17, %v16
  %v32 = vpack.c.bf16 %v19, %v18
  %v33 = vpack.c.bf16 %v21, %v20
  %v34 = vpack.c.bf16 %v23, %v22
  %v35 = vpack.c.bf16 %v25, %v24
  %v36 = vpack.c.bf16 %v27, %v26
  %v37 = vpack.c.bf16 %v29, %v28
  %v38 = vld [vmem:[%s1] sm:$0xf]
  %v39 = vld [vmem:[%s1 + $0x4] sm:$0xf]
  %v40 = vld [vmem:[%s1 + $0x8] sm:$0xf]
  %v41 = vld [vmem:[%s1 + $0xc] sm:$0xf]
  %v42 = vld [vmem:[%s1 + $0x10] sm:$0xf]
  %v43 = vld [vmem:[%s1 + $0x14] sm:$0xf]
  %v44 = vld [vmem:[%s1 + $0x18] sm:$0x7]
  %v45 = vld [vmem:[%s1 + $0x108] sm:$0x1]
  %v46 = vunpack.c.l.bf16 %v45
  %v47 = vlaneseq
  %v48 = vshrl.u32 %v47, 7
  %v49 = vsub.s32 0, %v48
  %v50 = vrot.slane %v46, %v49
  %v58 = vunpack.c.l.b16 %v38
  %v59 = vunpack.c.l.b16 %v39
  %v60 = vunpack.c.l.b16 %v40
  %v61 = vunpack.c.l.b16 %v41
  %v62 = vunpack.c.l.b16 %v42
  %v63 = vunpack.c.l.b16 %v43
  %v64 = vunpack.c.l.b16 %v44
  %v65 = vpack.c.b16 %v59, %v58
  %v66 = vpack.c.b16 %v61, %v60
  %v67 = vpack.c.b16 %v63, %v62
  %v68 = vpack.c.b16 %v64, %v64
  %vm69 = vcmask 244736
  %v71 = vsel %vm69, %v30, 0
  %v74 = vsel %vm69, %v31, 0
  %v77 = vsel %vm69, %v32, 0
  %v80 = vsel %vm69, %v33, 0
  %v83 = vsel %vm69, %v34, 0
  %v86 = vsel %vm69, %v35, 0
  %v89 = vsel %vm69, %v36, 0
  %v92 = vsel %vm69, %v37, 0
  %v95 = vsel %vm69, %v65, 0
  %v98 = vsel %vm69, %v66, 0
  %v101 = vsel %vm69, %v67, 0
  %v104 = vsel %vm69, %v68, 0
  %106 = vmatprep.subr.bf16.mxu0 0
  %107 = vmatpush1.bf16.xpose.msra.mxu0 %v95
  %108 = vmatprep.subr.bf16.mxu0 0
  %109 = vmatpush1.bf16.xpose.msra.mxu0 %v98
  %110 = vmatprep.subr.bf16.mxu0 0
  %111 = vmatpush1.bf16.xpose.msra.mxu0 %v101
  %112 = vmatprep.subr.bf16.mxu0 0
  %113 = vmatpush1.bf16.xpose.msra.mxu0 %v104
  %114 = vmatprep.subr.bf16.mxu0 0
  %115 = vmatpush1.bf16.xpose.msra.mxu0 0
  %116 = vmatprep.subr.bf16.mxu0 0
  %117 = vmatpush1.bf16.xpose.msra.mxu0 0
  %118 = vmatprep.subr.bf16.mxu0 0
  %119 = vmatpush1.bf16.xpose.msra.mxu0 0
  %120 = vmatprep.subr.bf16.mxu0 0
  %121 = vmatpush1.bf16.xpose.msra.mxu0 0
  %122 = vmatprep.subr.bf16.mxu0 0
  %123 = vmatpush1.bf16.xpose.msra.mxu0 0
  %124 = vmatprep.subr.bf16.mxu0 0
  %125 = vmatpush1.bf16.xpose.msra.mxu0 0
  %126 = vmatprep.subr.bf16.mxu0 0
  %127 = vmatpush1.bf16.xpose.msra.mxu0 0
  %128 = vmatprep.subr.bf16.mxu0 0
  %129 = vmatpush1.bf16.xpose.msra.mxu0 0
  %130 = vmatprep.subr.bf16.mxu0 0
  %131 = vmatpush1.bf16.xpose.msra.mxu0 0
  %132 = vmatprep.subr.bf16.mxu0 0
  %133 = vmatpush1.bf16.xpose.msra.mxu0 0
  %134 = vmatprep.subr.bf16.mxu0 0
  %135 = vmatpush1.bf16.xpose.msra.mxu0 0
  %136 = vmatprep.subr.bf16.mxu0 0
  %137 = vmatpush1.bf16.xpose.msra.mxu0 0
  %138 = vmatprep.mubr.bf16.mxu0 0
  %139 = vmatmul.mubr.bf16.gmra.mrb[0].mxu0 %v71
  %v140 = vpop.f32.mrb[0].mxu0
  %v141 = vadd.f32 %v50, %v140
  %v142 = vpop.f32.mrb[0].mxu0
  %v143 = vpop.f32.mrb[0].mxu0
  %v144 = vadd.f32 %v50, %v143
  %v145 = vpop.f32.mrb[0].mxu0
  %146 = vmatprep.mubr.bf16.mxu0 0
  %147 = vmatmul.mubr.bf16.gmra.mrb[0].mxu0 %v74
  %v148 = vpop.f32.mrb[0].mxu0
  %v149 = vadd.f32 %v50, %v148
  %v150 = vpop.f32.mrb[0].mxu0
  %v151 = vpop.f32.mrb[0].mxu0
  %v152 = vadd.f32 %v50, %v151
  %v153 = vpop.f32.mrb[0].mxu0
  %154 = vmatprep.mubr.bf16.mxu0 0
  %155 = vmatmul.mubr.bf16.gmra.mrb[0].mxu0 %v77
  %v156 = vpop.f32.mrb[0].mxu0
  %v157 = vadd.f32 %v50, %v156
  %v158 = vpop.f32.mrb[0].mxu0
  %v159 = vpop.f32.mrb[0].mxu0
  %v160 = vadd.f32 %v50, %v159
  %v161 = vpop.f32.mrb[0].mxu0
  %162 = vmatprep.mubr.bf16.mxu0 0
  %163 = vmatmul.mubr.bf16.gmra.mrb[0].mxu0 %v80
  %v164 = vpop.f32.mrb[0].mxu0
  %v165 = vadd.f32 %v50, %v164
  %v166 = vpop.f32.mrb[0].mxu0
  %v167 = vpop.f32.mrb[0].mxu0
  %v168 = vadd.f32 %v50, %v167
  %v169 = vpop.f32.mrb[0].mxu0
  %170 = vmatprep.mubr.bf16.mxu0 0
  %171 = vmatmul.mubr.bf16.gmra.mrb[0].mxu0 %v83
  %v172 = vpop.f32.mrb[0].mxu0
  %v173 = vadd.f32 %v50, %v172
  %v174 = vpop.f32.mrb[0].mxu0
  %v175 = vpop.f32.mrb[0].mxu0
  %v176 = vadd.f32 %v50, %v175
  %v177 = vpop.f32.mrb[0].mxu0
  %178 = vmatprep.mubr.bf16.mxu0 0
  %179 = vmatmul.mubr.bf16.gmra.mrb[0].mxu0 %v86
  %v180 = vpop.f32.mrb[0].mxu0
  %v181 = vadd.f32 %v50, %v180
  %v182 = vpop.f32.mrb[0].mxu0
  %v183 = vpop.f32.mrb[0].mxu0
  %v184 = vadd.f32 %v50, %v183
  %v185 = vpop.f32.mrb[0].mxu0
  %186 = vmatprep.mubr.bf16.mxu0 0
  %187 = vmatmul.mubr.bf16.gmra.mrb[0].mxu0 %v89
  %v188 = vpop.f32.mrb[0].mxu0
  %v189 = vadd.f32 %v50, %v188
  %v190 = vpop.f32.mrb[0].mxu0
  %v191 = vpop.f32.mrb[0].mxu0
  %v192 = vadd.f32 %v50, %v191
  %v193 = vpop.f32.mrb[0].mxu0
  %194 = vmatprep.mubr.bf16.mxu0 0
  %195 = vmatmul.mubr.bf16.gmra.mrb[0].mxu0 %v92
  %v196 = vpop.f32.mrb[0].mxu0
  %v197 = vadd.f32 %v50, %v196
  %v198 = vpop.f32.mrb[0].mxu0
  %v199 = vpop.f32.mrb[0].mxu0
  %v200 = vadd.f32 %v50, %v199
  %v201 = vpop.f32.mrb[0].mxu0
  %202 = vdwg.mxu0
  %v203 = vmax.f32 %v141, 0.0
  %v204 = vmax.f32 %v144, 0.0
  %v205 = vmax.f32 %v149, 0.0
  %v206 = vmax.f32 %v152, 0.0
  %v207 = vmax.f32 %v157, 0.0
  %v208 = vmax.f32 %v160, 0.0
  %v209 = vmax.f32 %v165, 0.0
  %v210 = vmax.f32 %v168, 0.0
  %v211 = vmax.f32 %v173, 0.0
  %v212 = vmax.f32 %v176, 0.0
  %v213 = vmax.f32 %v181, 0.0
  %v214 = vmax.f32 %v184, 0.0
  %v215 = vmax.f32 %v189, 0.0
  %v216 = vmax.f32 %v192, 0.0
  %v217 = vmax.f32 %v197, 0.0
  %v218 = vmax.f32 %v200, 0.0
  %v219 = vld [vmem:[%s1 + $0x20] sm:$0xf]
  %v220 = vld [vmem:[%s1 + $0x24] sm:$0xf]
  %v221 = vld [vmem:[%s1 + $0x28] sm:$0xf]
  %v222 = vld [vmem:[%s1 + $0x2c] sm:$0xf]
  %v223 = vld [vmem:[%s1 + $0x30] sm:$0xf]
  %v224 = vld [vmem:[%s1 + $0x34] sm:$0x1]
  %v225 = vpack.c.bf16 %v204, %v203
  %v226 = vpack.c.bf16 %v206, %v205
  %v227 = vpack.c.bf16 %v208, %v207
  %v228 = vpack.c.bf16 %v210, %v209
  %v229 = vpack.c.bf16 %v212, %v211
  %v230 = vpack.c.bf16 %v214, %v213
  %v231 = vpack.c.bf16 %v216, %v215
  %v232 = vpack.c.bf16 %v218, %v217
  %v239 = vunpack.c.l.b16 %v219
  %v240 = vunpack.c.l.b16 %v220
  %v241 = vunpack.c.l.b16 %v221
  %v242 = vunpack.c.l.b16 %v222
  %v243 = vunpack.c.l.b16 %v223
  %v244 = vunpack.c.l.b16 %v224
  %v245 = vpack.c.b16 %v240, %v239
  %v246 = vpack.c.b16 %v242, %v241
  %v247 = vpack.c.b16 %v244, %v243
  %vm248 = vcmask 433152
  %v250 = vsel %vm248, %v225, 0
  %v253 = vsel %vm248, %v226, 0
  %v256 = vsel %vm248, %v227, 0
  %v259 = vsel %vm248, %v228, 0
  %v262 = vsel %vm248, %v229, 0
  %v265 = vsel %vm248, %v230, 0
  %v268 = vsel %vm248, %v231, 0
  %v271 = vsel %vm248, %v232, 0
  %v274 = vsel %vm248, %v245, 0
  %v277 = vsel %vm248, %v246, 0
  %v280 = vsel %vm248, %v247, 0
  %282 = vmatprep.subr.bf16.mxu0 0
  %283 = vmatpush1.bf16.xpose.msra.mxu0 %v274
  %284 = vmatprep.subr.bf16.mxu0 0
  %285 = vmatpush1.bf16.xpose.msra.mxu0 %v277
  %286 = vmatprep.subr.bf16.mxu0 0
  %287 = vmatpush1.bf16.xpose.msra.mxu0 %v280
  %288 = vmatprep.subr.bf16.mxu0 0
  %289 = vmatpush1.bf16.xpose.msra.mxu0 0
  %290 = vmatprep.subr.bf16.mxu0 0
  %291 = vmatpush1.bf16.xpose.msra.mxu0 0
  %292 = vmatprep.subr.bf16.mxu0 0
  %293 = vmatpush1.bf16.xpose.msra.mxu0 0
  %294 = vmatprep.subr.bf16.mxu0 0
  %295 = vmatpush1.bf16.xpose.msra.mxu0 0
  %296 = vmatprep.subr.bf16.mxu0 0
  %297 = vmatpush1.bf16.xpose.msra.mxu0 0
  %298 = vmatprep.subr.bf16.mxu0 0
  %299 = vmatpush1.bf16.xpose.msra.mxu0 0
  %300 = vmatprep.subr.bf16.mxu0 0
  %301 = vmatpush1.bf16.xpose.msra.mxu0 0
  %302 = vmatprep.subr.bf16.mxu0 0
  %303 = vmatpush1.bf16.xpose.msra.mxu0 0
  %304 = vmatprep.subr.bf16.mxu0 0
  %305 = vmatpush1.bf16.xpose.msra.mxu0 0
  %306 = vmatprep.subr.bf16.mxu0 0
  %307 = vmatpush1.bf16.xpose.msra.mxu0 0
  %308 = vmatprep.subr.bf16.mxu0 0
  %309 = vmatpush1.bf16.xpose.msra.mxu0 0
  %310 = vmatprep.subr.bf16.mxu0 0
  %311 = vmatpush1.bf16.xpose.msra.mxu0 0
  %312 = vmatprep.subr.bf16.mxu0 0
  %313 = vmatpush1.bf16.xpose.msra.mxu0 0
  %314 = vmatprep.mubr.bf16.mxu0 0
  %315 = vmatmul.mubr.bf16.gmra.mrb[0].mxu0 %v250
  %v316 = vpop.f32.mrb[0].mxu0
  %v317 = vadd.f32 0.0, %v316
  %v318 = vpop.f32.mrb[0].mxu0
  %v319 = vpop.f32.mrb[0].mxu0
  %v320 = vadd.f32 0.0, %v319
  %v321 = vpop.f32.mrb[0].mxu0
  %322 = vmatprep.mubr.bf16.mxu0 0
  %323 = vmatmul.mubr.bf16.gmra.mrb[0].mxu0 %v253
  %v324 = vpop.f32.mrb[0].mxu0
  %v325 = vadd.f32 0.0, %v324
  %v326 = vpop.f32.mrb[0].mxu0
  %v327 = vpop.f32.mrb[0].mxu0
  %v328 = vadd.f32 0.0, %v327
  %v329 = vpop.f32.mrb[0].mxu0
  %330 = vmatprep.mubr.bf16.mxu0 0
  %331 = vmatmul.mubr.bf16.gmra.mrb[0].mxu0 %v256
  %v332 = vpop.f32.mrb[0].mxu0
  %v333 = vadd.f32 0.0, %v332
  %v334 = vpop.f32.mrb[0].mxu0
  %v335 = vpop.f32.mrb[0].mxu0
  %v336 = vadd.f32 0.0, %v335
  %v337 = vpop.f32.mrb[0].mxu0
  %338 = vmatprep.mubr.bf16.mxu0 0
  %339 = vmatmul.mubr.bf16.gmra.mrb[0].mxu0 %v259
  %v340 = vpop.f32.mrb[0].mxu0
  %v341 = vadd.f32 0.0, %v340
  %v342 = vpop.f32.mrb[0].mxu0
  %v343 = vpop.f32.mrb[0].mxu0
  %v344 = vadd.f32 0.0, %v343
  %v345 = vpop.f32.mrb[0].mxu0
  %346 = vmatprep.mubr.bf16.mxu0 0
  %347 = vmatmul.mubr.bf16.gmra.mrb[0].mxu0 %v262
  %v348 = vpop.f32.mrb[0].mxu0
  %v349 = vadd.f32 0.0, %v348
  %v350 = vpop.f32.mrb[0].mxu0
  %v351 = vpop.f32.mrb[0].mxu0
  %v352 = vadd.f32 0.0, %v351
  %v353 = vpop.f32.mrb[0].mxu0
  %354 = vmatprep.mubr.bf16.mxu0 0
  %355 = vmatmul.mubr.bf16.gmra.mrb[0].mxu0 %v265
  %v356 = vpop.f32.mrb[0].mxu0
  %v357 = vadd.f32 0.0, %v356
  %v358 = vpop.f32.mrb[0].mxu0
  %v359 = vpop.f32.mrb[0].mxu0
  %v360 = vadd.f32 0.0, %v359
  %v361 = vpop.f32.mrb[0].mxu0
  %362 = vmatprep.mubr.bf16.mxu0 0
  %363 = vmatmul.mubr.bf16.gmra.mrb[0].mxu0 %v268
  %v364 = vpop.f32.mrb[0].mxu0
  %v365 = vadd.f32 0.0, %v364
  %v366 = vpop.f32.mrb[0].mxu0
  %v367 = vpop.f32.mrb[0].mxu0
  %v368 = vadd.f32 0.0, %v367
  %v369 = vpop.f32.mrb[0].mxu0
  %370 = vmatprep.mubr.bf16.mxu0 0
  %371 = vmatmul.mubr.bf16.gmra.mrb[0].mxu0 %v271
  %v372 = vpop.f32.mrb[0].mxu0
  %v373 = vadd.f32 0.0, %v372
  %v374 = vpop.f32.mrb[0].mxu0
  %v375 = vpop.f32.mrb[0].mxu0
  %v376 = vadd.f32 0.0, %v375
  %v377 = vpop.f32.mrb[0].mxu0
  %378 = vdwg.mxu0
  %v379 = vmax.f32 %v317, 0.0
  %v380 = vmax.f32 %v320, 0.0
  %v381 = vmax.f32 %v325, 0.0
  %v382 = vmax.f32 %v328, 0.0
  %v383 = vmax.f32 %v333, 0.0
  %v384 = vmax.f32 %v336, 0.0
  %v385 = vmax.f32 %v341, 0.0
  %v386 = vmax.f32 %v344, 0.0
  %v387 = vmax.f32 %v349, 0.0
  %v388 = vmax.f32 %v352, 0.0
  %v389 = vmax.f32 %v357, 0.0
  %v390 = vmax.f32 %v360, 0.0
  %v391 = vmax.f32 %v365, 0.0
  %v392 = vmax.f32 %v368, 0.0
  %v393 = vmax.f32 %v373, 0.0
  %v394 = vmax.f32 %v376, 0.0
  %v395 = vld [vmem:[%s1 + $0x38] sm:$0xf]
  %v396 = vld [vmem:[%s1 + $0x3c] sm:$0xf]
  %v397 = vld [vmem:[%s1 + $0x40] sm:$0xf]
  %v398 = vld [vmem:[%s1 + $0x44] sm:$0xf]
  %v399 = vld [vmem:[%s1 + $0x48] sm:$0xf]
  %v400 = vld [vmem:[%s1 + $0x4c] sm:$0xf]
  %v401 = vld [vmem:[%s1 + $0x50] sm:$0x1]
  %v402 = vpack.c.bf16 %v380, %v379
  %v403 = vpack.c.bf16 %v382, %v381
  %v404 = vpack.c.bf16 %v384, %v383
  %v405 = vpack.c.bf16 %v386, %v385
  %v406 = vpack.c.bf16 %v388, %v387
  %v407 = vpack.c.bf16 %v390, %v389
  %v408 = vpack.c.bf16 %v392, %v391
  %v409 = vpack.c.bf16 %v394, %v393
  %v417 = vunpack.c.l.b16 %v395
  %v418 = vunpack.c.l.b16 %v396
  %v419 = vunpack.c.l.b16 %v397
  %v420 = vunpack.c.l.b16 %v398
  %v421 = vunpack.c.l.b16 %v399
  %v422 = vunpack.c.l.b16 %v400
  %v423 = vunpack.c.l.b16 %v401
  %v424 = vpack.c.b16 %v418, %v417
  %v425 = vpack.c.b16 %v420, %v419
  %v426 = vpack.c.b16 %v422, %v421
  %v427 = vpack.c.b16 %v423, %v423
  %vm428 = vcmask 334848
  %v430 = vsel %vm428, %v402, 0
  %v433 = vsel %vm428, %v403, 0
  %v436 = vsel %vm428, %v404, 0
  %v439 = vsel %vm428, %v405, 0
  %v442 = vsel %vm428, %v406, 0
  %v445 = vsel %vm428, %v407, 0
  %v448 = vsel %vm428, %v408, 0
  %v451 = vsel %vm428, %v409, 0
  %v454 = vsel %vm428, %v424, 0
  %v457 = vsel %vm428, %v425, 0
  %v460 = vsel %vm428, %v426, 0
  %v463 = vsel %vm428, %v427, 0
  %465 = vmatprep.subr.bf16.mxu0 0
  %466 = vmatpush1.bf16.xpose.msra.mxu0 %v454
  %467 = vmatprep.subr.bf16.mxu0 0
  %468 = vmatpush1.bf16.xpose.msra.mxu0 %v457
  %469 = vmatprep.subr.bf16.mxu0 0
  %470 = vmatpush1.bf16.xpose.msra.mxu0 %v460
  %471 = vmatprep.subr.bf16.mxu0 0
  %472 = vmatpush1.bf16.xpose.msra.mxu0 %v463
  %473 = vmatprep.subr.bf16.mxu0 0
  %474 = vmatpush1.bf16.xpose.msra.mxu0 0
  %475 = vmatprep.subr.bf16.mxu0 0
  %476 = vmatpush1.bf16.xpose.msra.mxu0 0
  %477 = vmatprep.subr.bf16.mxu0 0
  %478 = vmatpush1.bf16.xpose.msra.mxu0 0
  %479 = vmatprep.subr.bf16.mxu0 0
  %480 = vmatpush1.bf16.xpose.msra.mxu0 0
  %481 = vmatprep.subr.bf16.mxu0 0
  %482 = vmatpush1.bf16.xpose.msra.mxu0 0
  %483 = vmatprep.subr.bf16.mxu0 0
  %484 = vmatpush1.bf16.xpose.msra.mxu0 0
  %485 = vmatprep.subr.bf16.mxu0 0
  %486 = vmatpush1.bf16.xpose.msra.mxu0 0
  %487 = vmatprep.subr.bf16.mxu0 0
  %488 = vmatpush1.bf16.xpose.msra.mxu0 0
  %489 = vmatprep.subr.bf16.mxu0 0
  %490 = vmatpush1.bf16.xpose.msra.mxu0 0
  %491 = vmatprep.subr.bf16.mxu0 0
  %492 = vmatpush1.bf16.xpose.msra.mxu0 0
  %493 = vmatprep.subr.bf16.mxu0 0
  %494 = vmatpush1.bf16.xpose.msra.mxu0 0
  %495 = vmatprep.subr.bf16.mxu0 0
  %496 = vmatpush1.bf16.xpose.msra.mxu0 0
  %497 = vmatprep.mubr.bf16.mxu0 0
  %498 = vmatmul.mubr.bf16.gmra.mrb[0].mxu0 %v430
  %v499 = vpop.f32.mrb[0].mxu0
  %v500 = vadd.f32 0.0, %v499
  %v501 = vpop.f32.mrb[0].mxu0
  %v502 = vpop.f32.mrb[0].mxu0
  %v503 = vadd.f32 0.0, %v502
  %v504 = vpop.f32.mrb[0].mxu0
  %505 = vmatprep.mubr.bf16.mxu0 0
  %506 = vmatmul.mubr.bf16.gmra.mrb[0].mxu0 %v433
  %v507 = vpop.f32.mrb[0].mxu0
  %v508 = vadd.f32 0.0, %v507
  %v509 = vpop.f32.mrb[0].mxu0
  %v510 = vpop.f32.mrb[0].mxu0
  %v511 = vadd.f32 0.0, %v510
  %v512 = vpop.f32.mrb[0].mxu0
  %513 = vmatprep.mubr.bf16.mxu0 0
  %514 = vmatmul.mubr.bf16.gmra.mrb[0].mxu0 %v436
  %v515 = vpop.f32.mrb[0].mxu0
  %v516 = vadd.f32 0.0, %v515
  %v517 = vpop.f32.mrb[0].mxu0
  %v518 = vpop.f32.mrb[0].mxu0
  %v519 = vadd.f32 0.0, %v518
  %v520 = vpop.f32.mrb[0].mxu0
  %521 = vmatprep.mubr.bf16.mxu0 0
  %522 = vmatmul.mubr.bf16.gmra.mrb[0].mxu0 %v439
  %v523 = vpop.f32.mrb[0].mxu0
  %v524 = vadd.f32 0.0, %v523
  %v525 = vpop.f32.mrb[0].mxu0
  %v526 = vpop.f32.mrb[0].mxu0
  %v527 = vadd.f32 0.0, %v526
  %v528 = vpop.f32.mrb[0].mxu0
  %529 = vmatprep.mubr.bf16.mxu0 0
  %530 = vmatmul.mubr.bf16.gmra.mrb[0].mxu0 %v442
  %v531 = vpop.f32.mrb[0].mxu0
  %v532 = vadd.f32 0.0, %v531
  %v533 = vpop.f32.mrb[0].mxu0
  %v534 = vpop.f32.mrb[0].mxu0
  %v535 = vadd.f32 0.0, %v534
  %v536 = vpop.f32.mrb[0].mxu0
  %537 = vmatprep.mubr.bf16.mxu0 0
  %538 = vmatmul.mubr.bf16.gmra.mrb[0].mxu0 %v445
  %v539 = vpop.f32.mrb[0].mxu0
  %v540 = vadd.f32 0.0, %v539
  %v541 = vpop.f32.mrb[0].mxu0
  %v542 = vpop.f32.mrb[0].mxu0
  %v543 = vadd.f32 0.0, %v542
  %v544 = vpop.f32.mrb[0].mxu0
  %545 = vmatprep.mubr.bf16.mxu0 0
  %546 = vmatmul.mubr.bf16.gmra.mrb[0].mxu0 %v448
  %v547 = vpop.f32.mrb[0].mxu0
  %v548 = vadd.f32 0.0, %v547
  %v549 = vpop.f32.mrb[0].mxu0
  %v550 = vpop.f32.mrb[0].mxu0
  %v551 = vadd.f32 0.0, %v550
  %v552 = vpop.f32.mrb[0].mxu0
  %553 = vmatprep.mubr.bf16.mxu0 0
  %554 = vmatmul.mubr.bf16.gmra.mrb[0].mxu0 %v451
  %v555 = vpop.f32.mrb[0].mxu0
  %v556 = vadd.f32 0.0, %v555
  %v557 = vpop.f32.mrb[0].mxu0
  %v558 = vpop.f32.mrb[0].mxu0
  %v559 = vadd.f32 0.0, %v558
  %v560 = vpop.f32.mrb[0].mxu0
  %561 = vdwg.mxu0
  %v562 = vmax.f32 %v500, 0.0
  %v563 = vmax.f32 %v503, 0.0
  %v564 = vmax.f32 %v508, 0.0
  %v565 = vmax.f32 %v511, 0.0
  %v566 = vmax.f32 %v516, 0.0
  %v567 = vmax.f32 %v519, 0.0
  %v568 = vmax.f32 %v524, 0.0
  %v569 = vmax.f32 %v527, 0.0
  %v570 = vmax.f32 %v532, 0.0
  %v571 = vmax.f32 %v535, 0.0
  %v572 = vmax.f32 %v540, 0.0
  %v573 = vmax.f32 %v543, 0.0
  %v574 = vmax.f32 %v548, 0.0
  %v575 = vmax.f32 %v551, 0.0
  %v576 = vmax.f32 %v556, 0.0
  %v577 = vmax.f32 %v559, 0.0
  %v578 = vld [vmem:[%s1 + $0x58] sm:$0xf]
  %v579 = vld [vmem:[%s1 + $0x5c] sm:$0xf]
  %v580 = vld [vmem:[%s1 + $0x60] sm:$0x1]
  %v581 = vpack.c.bf16 %v563, %v562
  %v582 = vpack.c.bf16 %v565, %v564
  %v583 = vpack.c.bf16 %v567, %v566
  %v584 = vpack.c.bf16 %v569, %v568
  %v585 = vpack.c.bf16 %v571, %v570
  %v586 = vpack.c.bf16 %v573, %v572
  %v587 = vpack.c.bf16 %v575, %v574
  %v588 = vpack.c.bf16 %v577, %v576
  %v592 = vunpack.c.l.b16 %v578
  %v593 = vunpack.c.l.b16 %v579
  %v594 = vunpack.c.l.b16 %v580
  %v595 = vpack.c.b16 %v593, %v592
  %v596 = vpack.c.b16 %v594, %v594
  %vm597 = vcmask 400384
  %v599 = vsel %vm597, %v581, 0
  %v602 = vsel %vm597, %v582, 0
  %v605 = vsel %vm597, %v583, 0
  %v608 = vsel %vm597, %v584, 0
  %v611 = vsel %vm597, %v585, 0
  %v614 = vsel %vm597, %v586, 0
  %v617 = vsel %vm597, %v587, 0
  %v620 = vsel %vm597, %v588, 0
  %v623 = vsel %vm597, %v595, 0
  %v626 = vsel %vm597, %v596, 0
  %628 = vmatprep.subr.bf16.mxu0 0
  %629 = vmatpush1.bf16.xpose.msra.mxu0 %v623
  %630 = vmatprep.subr.bf16.mxu0 0
  %631 = vmatpush1.bf16.xpose.msra.mxu0 %v626
  %632 = vmatprep.subr.bf16.mxu0 0
  %633 = vmatpush1.bf16.xpose.msra.mxu0 0
  %634 = vmatprep.subr.bf16.mxu0 0
  %635 = vmatpush1.bf16.xpose.msra.mxu0 0
  %636 = vmatprep.subr.bf16.mxu0 0
  %637 = vmatpush1.bf16.xpose.msra.mxu0 0
  %638 = vmatprep.subr.bf16.mxu0 0
  %639 = vmatpush1.bf16.xpose.msra.mxu0 0
  %640 = vmatprep.subr.bf16.mxu0 0
  %641 = vmatpush1.bf16.xpose.msra.mxu0 0
  %642 = vmatprep.subr.bf16.mxu0 0
  %643 = vmatpush1.bf16.xpose.msra.mxu0 0
  %644 = vmatprep.subr.bf16.mxu0 0
  %645 = vmatpush1.bf16.xpose.msra.mxu0 0
  %646 = vmatprep.subr.bf16.mxu0 0
  %647 = vmatpush1.bf16.xpose.msra.mxu0 0
  %648 = vmatprep.subr.bf16.mxu0 0
  %649 = vmatpush1.bf16.xpose.msra.mxu0 0
  %650 = vmatprep.subr.bf16.mxu0 0
  %651 = vmatpush1.bf16.xpose.msra.mxu0 0
  %652 = vmatprep.subr.bf16.mxu0 0
  %653 = vmatpush1.bf16.xpose.msra.mxu0 0
  %654 = vmatprep.subr.bf16.mxu0 0
  %655 = vmatpush1.bf16.xpose.msra.mxu0 0
  %656 = vmatprep.subr.bf16.mxu0 0
  %657 = vmatpush1.bf16.xpose.msra.mxu0 0
  %658 = vmatprep.subr.bf16.mxu0 0
  %659 = vmatpush1.bf16.xpose.msra.mxu0 0
  %660 = vmatprep.mubr.bf16.mxu0 0
  %661 = vmatmul.mubr.bf16.gmra.mrb[0].mxu0 %v599
  %v662 = vpop.f32.mrb[0].mxu0
  %v663 = vadd.f32 0.0, %v662
  %v664 = vpop.f32.mrb[0].mxu0
  %v665 = vpop.f32.mrb[0].mxu0
  %v666 = vadd.f32 0.0, %v665
  %v667 = vpop.f32.mrb[0].mxu0
  %668 = vmatprep.mubr.bf16.mxu0 0
  %669 = vmatmul.mubr.bf16.gmra.mrb[0].mxu0 %v602
  %v670 = vpop.f32.mrb[0].mxu0
  %v671 = vadd.f32 0.0, %v670
  %v672 = vpop.f32.mrb[0].mxu0
  %v673 = vpop.f32.mrb[0].mxu0
  %v674 = vadd.f32 0.0, %v673
  %v675 = vpop.f32.mrb[0].mxu0
  %676 = vmatprep.mubr.bf16.mxu0 0
  %677 = vmatmul.mubr.bf16.gmra.mrb[0].mxu0 %v605
  %v678 = vpop.f32.mrb[0].mxu0
  %v679 = vadd.f32 0.0, %v678
  %v680 = vpop.f32.mrb[0].mxu0
  %v681 = vpop.f32.mrb[0].mxu0
  %v682 = vadd.f32 0.0, %v681
  %v683 = vpop.f32.mrb[0].mxu0
  %684 = vmatprep.mubr.bf16.mxu0 0
  %685 = vmatmul.mubr.bf16.gmra.mrb[0].mxu0 %v608
  %v686 = vpop.f32.mrb[0].mxu0
  %v687 = vadd.f32 0.0, %v686
  %v688 = vpop.f32.mrb[0].mxu0
  %v689 = vpop.f32.mrb[0].mxu0
  %v690 = vadd.f32 0.0, %v689
  %v691 = vpop.f32.mrb[0].mxu0
  %692 = vmatprep.mubr.bf16.mxu0 0
  %693 = vmatmul.mubr.bf16.gmra.mrb[0].mxu0 %v611
  %v694 = vpop.f32.mrb[0].mxu0
  %v695 = vadd.f32 0.0, %v694
  %v696 = vpop.f32.mrb[0].mxu0
  %v697 = vpop.f32.mrb[0].mxu0
  %v698 = vadd.f32 0.0, %v697
  %v699 = vpop.f32.mrb[0].mxu0
  %700 = vmatprep.mubr.bf16.mxu0 0
  %701 = vmatmul.mubr.bf16.gmra.mrb[0].mxu0 %v614
  %v702 = vpop.f32.mrb[0].mxu0
  %v703 = vadd.f32 0.0, %v702
  %v704 = vpop.f32.mrb[0].mxu0
  %v705 = vpop.f32.mrb[0].mxu0
  %v706 = vadd.f32 0.0, %v705
  %v707 = vpop.f32.mrb[0].mxu0
  %708 = vmatprep.mubr.bf16.mxu0 0
  %709 = vmatmul.mubr.bf16.gmra.mrb[0].mxu0 %v617
  %v710 = vpop.f32.mrb[0].mxu0
  %v711 = vadd.f32 0.0, %v710
  %v712 = vpop.f32.mrb[0].mxu0
  %v713 = vpop.f32.mrb[0].mxu0
  %v714 = vadd.f32 0.0, %v713
  %v715 = vpop.f32.mrb[0].mxu0
  %716 = vmatprep.mubr.bf16.mxu0 0
  %717 = vmatmul.mubr.bf16.gmra.mrb[0].mxu0 %v620
  %v718 = vpop.f32.mrb[0].mxu0
  %v719 = vadd.f32 0.0, %v718
  %v720 = vpop.f32.mrb[0].mxu0
  %v721 = vpop.f32.mrb[0].mxu0
  %v722 = vadd.f32 0.0, %v721
  %v723 = vpop.f32.mrb[0].mxu0
  %724 = vdwg.mxu0
  %v725 = vmax.f32 %v663, 0.0
  %v726 = vmax.f32 %v666, 0.0
  %v727 = vmax.f32 %v671, 0.0
  %v728 = vmax.f32 %v674, 0.0
  %v729 = vmax.f32 %v679, 0.0
  %v730 = vmax.f32 %v682, 0.0
  %v731 = vmax.f32 %v687, 0.0
  %v732 = vmax.f32 %v690, 0.0
  %v733 = vmax.f32 %v695, 0.0
  %v734 = vmax.f32 %v698, 0.0
  %v735 = vmax.f32 %v703, 0.0
  %v736 = vmax.f32 %v706, 0.0
  %v737 = vmax.f32 %v711, 0.0
  %v738 = vmax.f32 %v714, 0.0
  %v739 = vmax.f32 %v719, 0.0
  %v740 = vmax.f32 %v722, 0.0
  %v741 = vld [vmem:[%s1 + $0x68] sm:$0x3]
  %v742 = vpack.c.bf16 %v726, %v725
  %v743 = vpack.c.bf16 %v728, %v727
  %v744 = vpack.c.bf16 %v730, %v729
  %v745 = vpack.c.bf16 %v732, %v731
  %v746 = vpack.c.bf16 %v734, %v733
  %v747 = vpack.c.bf16 %v736, %v735
  %v748 = vpack.c.bf16 %v738, %v737
  %v749 = vpack.c.bf16 %v740, %v739
  %vm750 = vcmask 138240
  %v752 = vsel %vm750, %v742, 0
  %v755 = vsel %vm750, %v743, 0
  %v758 = vsel %vm750, %v744, 0
  %v761 = vsel %vm750, %v745, 0
  %v764 = vsel %vm750, %v746, 0
  %v767 = vsel %vm750, %v747, 0
  %v770 = vsel %vm750, %v748, 0
  %v773 = vsel %vm750, %v749, 0
  %v776 = vsel %vm750, %v741, 0
  %778 = vmatprep.subr.bf16.mxu0 0
  %779 = vmatpush1.bf16.xpose.msra.mxu0 %v776
  %780 = vmatprep.subr.bf16.mxu0 0
  %781 = vmatpush1.bf16.xpose.msra.mxu0 0
  %782 = vmatprep.subr.bf16.mxu0 0
  %783 = vmatpush1.bf16.xpose.msra.mxu0 0
  %784 = vmatprep.subr.bf16.mxu0 0
  %785 = vmatpush1.bf16.xpose.msra.mxu0 0
  %786 = vmatprep.subr.bf16.mxu0 0
  %787 = vmatpush1.bf16.xpose.msra.mxu0 0
  %788 = vmatprep.subr.bf16.mxu0 0
  %789 = vmatpush1.bf16.xpose.msra.mxu0 0
  %790 = vmatprep.subr.bf16.mxu0 0
  %791 = vmatpush1.bf16.xpose.msra.mxu0 0
  %792 = vmatprep.subr.bf16.mxu0 0
  %793 = vmatpush1.bf16.xpose.msra.mxu0 0
  %794 = vmatprep.subr.bf16.mxu0 0
  %795 = vmatpush1.bf16.xpose.msra.mxu0 0
  %796 = vmatprep.subr.bf16.mxu0 0
  %797 = vmatpush1.bf16.xpose.msra.mxu0 0
  %798 = vmatprep.subr.bf16.mxu0 0
  %799 = vmatpush1.bf16.xpose.msra.mxu0 0
  %800 = vmatprep.subr.bf16.mxu0 0
  %801 = vmatpush1.bf16.xpose.msra.mxu0 0
  %802 = vmatprep.subr.bf16.mxu0 0
  %803 = vmatpush1.bf16.xpose.msra.mxu0 0
  %804 = vmatprep.subr.bf16.mxu0 0
  %805 = vmatpush1.bf16.xpose.msra.mxu0 0
  %806 = vmatprep.subr.bf16.mxu0 0
  %807 = vmatpush1.bf16.xpose.msra.mxu0 0
  %808 = vmatprep.subr.bf16.mxu0 0
  %809 = vmatpush1.bf16.xpose.msra.mxu0 0
  %810 = vmatprep.mubr.bf16.mxu0 0
  %811 = vmatmul.mubr.bf16.gmra.mrb[0].mxu0 %v752
  %v812 = vpop.f32.mrb[0].mxu0
  %v813 = vadd.f32 0.0, %v812
  %v814 = vpop.f32.mrb[0].mxu0
  %v815 = vpop.f32.mrb[0].mxu0
  %v816 = vadd.f32 0.0, %v815
  %v817 = vpop.f32.mrb[0].mxu0
  %818 = vmatprep.mubr.bf16.mxu0 0
  %819 = vmatmul.mubr.bf16.gmra.mrb[0].mxu0 %v755
  %v820 = vpop.f32.mrb[0].mxu0
  %v821 = vadd.f32 0.0, %v820
  %v822 = vpop.f32.mrb[0].mxu0
  %v823 = vpop.f32.mrb[0].mxu0
  %v824 = vadd.f32 0.0, %v823
  %v825 = vpop.f32.mrb[0].mxu0
  %826 = vmatprep.mubr.bf16.mxu0 0
  %827 = vmatmul.mubr.bf16.gmra.mrb[0].mxu0 %v758
  %v828 = vpop.f32.mrb[0].mxu0
  %v829 = vadd.f32 0.0, %v828
  %v830 = vpop.f32.mrb[0].mxu0
  %v831 = vpop.f32.mrb[0].mxu0
  %v832 = vadd.f32 0.0, %v831
  %v833 = vpop.f32.mrb[0].mxu0
  %834 = vmatprep.mubr.bf16.mxu0 0
  %835 = vmatmul.mubr.bf16.gmra.mrb[0].mxu0 %v761
  %v836 = vpop.f32.mrb[0].mxu0
  %v837 = vadd.f32 0.0, %v836
  %v838 = vpop.f32.mrb[0].mxu0
  %v839 = vpop.f32.mrb[0].mxu0
  %v840 = vadd.f32 0.0, %v839
  %v841 = vpop.f32.mrb[0].mxu0
  %842 = vmatprep.mubr.bf16.mxu0 0
  %843 = vmatmul.mubr.bf16.gmra.mrb[0].mxu0 %v764
  %v844 = vpop.f32.mrb[0].mxu0
  %v845 = vadd.f32 0.0, %v844
  %v846 = vpop.f32.mrb[0].mxu0
  %v847 = vpop.f32.mrb[0].mxu0
  %v848 = vadd.f32 0.0, %v847
  %v849 = vpop.f32.mrb[0].mxu0
  %850 = vmatprep.mubr.bf16.mxu0 0
  %851 = vmatmul.mubr.bf16.gmra.mrb[0].mxu0 %v767
  %v852 = vpop.f32.mrb[0].mxu0
  %v853 = vadd.f32 0.0, %v852
  %v854 = vpop.f32.mrb[0].mxu0
  %v855 = vpop.f32.mrb[0].mxu0
  %v856 = vadd.f32 0.0, %v855
  %v857 = vpop.f32.mrb[0].mxu0
  %858 = vmatprep.mubr.bf16.mxu0 0
  %859 = vmatmul.mubr.bf16.gmra.mrb[0].mxu0 %v770
  %v860 = vpop.f32.mrb[0].mxu0
  %v861 = vadd.f32 0.0, %v860
  %v862 = vpop.f32.mrb[0].mxu0
  %v863 = vpop.f32.mrb[0].mxu0
  %v864 = vadd.f32 0.0, %v863
  %v865 = vpop.f32.mrb[0].mxu0
  %866 = vmatprep.mubr.bf16.mxu0 0
  %867 = vmatmul.mubr.bf16.gmra.mrb[0].mxu0 %v773
  %v868 = vpop.f32.mrb[0].mxu0
  %v869 = vadd.f32 0.0, %v868
  %v870 = vpop.f32.mrb[0].mxu0
  %v871 = vpop.f32.mrb[0].mxu0
  %v872 = vadd.f32 0.0, %v871
  %v873 = vpop.f32.mrb[0].mxu0
  %874 = vdwg.mxu0
  %v875 = vmax.f32 %v813, 0.0
  %v876 = vmax.f32 %v816, 0.0
  %v877 = vmax.f32 %v821, 0.0
  %v878 = vmax.f32 %v824, 0.0
  %v879 = vmax.f32 %v829, 0.0
  %v880 = vmax.f32 %v832, 0.0
  %v881 = vmax.f32 %v837, 0.0
  %v882 = vmax.f32 %v840, 0.0
  %v883 = vmax.f32 %v845, 0.0
  %v884 = vmax.f32 %v848, 0.0
  %v885 = vmax.f32 %v853, 0.0
  %v886 = vmax.f32 %v856, 0.0
  %v887 = vmax.f32 %v861, 0.0
  %v888 = vmax.f32 %v864, 0.0
  %v889 = vmax.f32 %v869, 0.0
  %v890 = vmax.f32 %v872, 0.0
  %vm891 = vcmask 23552
  %892 = vst.msk [vmem:[%s3] sm:$0xff] %vm891, %v875
  %893 = vst.msk [vmem:[%s3 + $0x8] sm:$0xff] %vm891, %v876
  %894 = vst.msk [vmem:[%s3 + $0x10] sm:$0xff] %vm891, %v877
  %895 = vst.msk [vmem:[%s3 + $0x18] sm:$0xff] %vm891, %v878
  %896 = vst.msk [vmem:[%s3 + $0x20] sm:$0xff] %vm891, %v879
  %897 = vst.msk [vmem:[%s3 + $0x28] sm:$0xff] %vm891, %v880
  %898 = vst.msk [vmem:[%s3 + $0x30] sm:$0xff] %vm891, %v881
  %899 = vst.msk [vmem:[%s3 + $0x38] sm:$0xff] %vm891, %v882
  %900 = vst.msk [vmem:[%s3 + $0x40] sm:$0xff] %vm891, %v883
  %901 = vst.msk [vmem:[%s3 + $0x48] sm:$0xff] %vm891, %v884
  %902 = vst.msk [vmem:[%s3 + $0x50] sm:$0xff] %vm891, %v885
  %903 = vst.msk [vmem:[%s3 + $0x58] sm:$0xff] %vm891, %v886
  %904 = vst.msk [vmem:[%s3 + $0x60] sm:$0xff] %vm891, %v887
  %905 = vst.msk [vmem:[%s3 + $0x68] sm:$0xff] %vm891, %v888
  %906 = vst.msk [vmem:[%s3 + $0x70] sm:$0xff] %vm891, %v889
  %907 = vst.msk [vmem:[%s3 + $0x78] sm:$0xff] %vm891, %v890
  %v908 = vld [vmem:[%s1 + $0x70] sm:$0xf]
  %v909 = vld [vmem:[%s1 + $0x74] sm:$0xf]
  %v910 = vld [vmem:[%s1 + $0x78] sm:$0x1]
  %v911 = vpack.c.bf16 %v876, %v875
  %v912 = vpack.c.bf16 %v878, %v877
  %v913 = vpack.c.bf16 %v880, %v879
  %v914 = vpack.c.bf16 %v882, %v881
  %v915 = vpack.c.bf16 %v884, %v883
  %v916 = vpack.c.bf16 %v886, %v885
  %v917 = vpack.c.bf16 %v888, %v887
  %v918 = vpack.c.bf16 %v890, %v889
  %v922 = vunpack.c.l.b16 %v908
  %v923 = vunpack.c.l.b16 %v909
  %v924 = vunpack.c.l.b16 %v910
  %v925 = vpack.c.b16 %v923, %v922
  %v926 = vpack.c.b16 %v924, %v924
  %vm927 = vcmask 31744
  %v929 = vsel %vm927, %v911, 0
  %v932 = vsel %vm927, %v912, 0
  %v935 = vsel %vm927, %v913, 0
  %v938 = vsel %vm927, %v914, 0
  %v941 = vsel %vm927, %v915, 0
  %v944 = vsel %vm927, %v916, 0
  %v947 = vsel %vm927, %v917, 0
  %v950 = vsel %vm927, %v918, 0
  %v953 = vsel %vm927, %v925, 0
  %v956 = vsel %vm927, %v926, 0
  %958 = vmatprep.subr.bf16.mxu0 0
  %959 = vmatpush1.bf16.xpose.msra.mxu0 %v953
  %960 = vmatprep.subr.bf16.mxu0 0
  %961 = vmatpush1.bf16.xpose.msra.mxu0 %v956
  %962 = vmatprep.subr.bf16.mxu0 0
  %963 = vmatpush1.bf16.xpose.msra.mxu0 0
  %964 = vmatprep.subr.bf16.mxu0 0
  %965 = vmatpush1.bf16.xpose.msra.mxu0 0
  %966 = vmatprep.subr.bf16.mxu0 0
  %967 = vmatpush1.bf16.xpose.msra.mxu0 0
  %968 = vmatprep.subr.bf16.mxu0 0
  %969 = vmatpush1.bf16.xpose.msra.mxu0 0
  %970 = vmatprep.subr.bf16.mxu0 0
  %971 = vmatpush1.bf16.xpose.msra.mxu0 0
  %972 = vmatprep.subr.bf16.mxu0 0
  %973 = vmatpush1.bf16.xpose.msra.mxu0 0
  %974 = vmatprep.subr.bf16.mxu0 0
  %975 = vmatpush1.bf16.xpose.msra.mxu0 0
  %976 = vmatprep.subr.bf16.mxu0 0
  %977 = vmatpush1.bf16.xpose.msra.mxu0 0
  %978 = vmatprep.subr.bf16.mxu0 0
  %979 = vmatpush1.bf16.xpose.msra.mxu0 0
  %980 = vmatprep.subr.bf16.mxu0 0
  %981 = vmatpush1.bf16.xpose.msra.mxu0 0
  %982 = vmatprep.subr.bf16.mxu0 0
  %983 = vmatpush1.bf16.xpose.msra.mxu0 0
  %984 = vmatprep.subr.bf16.mxu0 0
  %985 = vmatpush1.bf16.xpose.msra.mxu0 0
  %986 = vmatprep.subr.bf16.mxu0 0
  %987 = vmatpush1.bf16.xpose.msra.mxu0 0
  %988 = vmatprep.subr.bf16.mxu0 0
  %989 = vmatpush1.bf16.xpose.msra.mxu0 0
  %990 = vmatprep.mubr.bf16.mxu0 0
  %991 = vmatmul.mubr.bf16.gmra.mrb[0].mxu0 %v929
  %v992 = vpop.f32.mrb[0].mxu0
  %v993 = vadd.f32 0.0, %v992
  %v994 = vpop.f32.mrb[0].mxu0
  %v995 = vpop.f32.mrb[0].mxu0
  %v996 = vadd.f32 0.0, %v995
  %v997 = vpop.f32.mrb[0].mxu0
  %998 = vmatprep.mubr.bf16.mxu0 0
  %999 = vmatmul.mubr.bf16.gmra.mrb[0].mxu0 %v932
  %v1000 = vpop.f32.mrb[0].mxu0
  %v1001 = vadd.f32 0.0, %v1000
  %v1002 = vpop.f32.mrb[0].mxu0
  %v1003 = vpop.f32.mrb[0].mxu0
  %v1004 = vadd.f32 0.0, %v1003
  %v1005 = vpop.f32.mrb[0].mxu0
  %1006 = vmatprep.mubr.bf16.mxu0 0
  %1007 = vmatmul.mubr.bf16.gmra.mrb[0].mxu0 %v935
  %v1008 = vpop.f32.mrb[0].mxu0
  %v1009 = vadd.f32 0.0, %v1008
  %v1010 = vpop.f32.mrb[0].mxu0
  %v1011 = vpop.f32.mrb[0].mxu0
  %v1012 = vadd.f32 0.0, %v1011
  %v1013 = vpop.f32.mrb[0].mxu0
  %1014 = vmatprep.mubr.bf16.mxu0 0
  %1015 = vmatmul.mubr.bf16.gmra.mrb[0].mxu0 %v938
  %v1016 = vpop.f32.mrb[0].mxu0
  %v1017 = vadd.f32 0.0, %v1016
  %v1018 = vpop.f32.mrb[0].mxu0
  %v1019 = vpop.f32.mrb[0].mxu0
  %v1020 = vadd.f32 0.0, %v1019
  %v1021 = vpop.f32.mrb[0].mxu0
  %1022 = vmatprep.mubr.bf16.mxu0 0
  %1023 = vmatmul.mubr.bf16.gmra.mrb[0].mxu0 %v941
  %v1024 = vpop.f32.mrb[0].mxu0
  %v1025 = vadd.f32 0.0, %v1024
  %v1026 = vpop.f32.mrb[0].mxu0
  %v1027 = vpop.f32.mrb[0].mxu0
  %v1028 = vadd.f32 0.0, %v1027
  %v1029 = vpop.f32.mrb[0].mxu0
  %1030 = vmatprep.mubr.bf16.mxu0 0
  %1031 = vmatmul.mubr.bf16.gmra.mrb[0].mxu0 %v944
  %v1032 = vpop.f32.mrb[0].mxu0
  %v1033 = vadd.f32 0.0, %v1032
  %v1034 = vpop.f32.mrb[0].mxu0
  %v1035 = vpop.f32.mrb[0].mxu0
  %v1036 = vadd.f32 0.0, %v1035
  %v1037 = vpop.f32.mrb[0].mxu0
  %1038 = vmatprep.mubr.bf16.mxu0 0
  %1039 = vmatmul.mubr.bf16.gmra.mrb[0].mxu0 %v947
  %v1040 = vpop.f32.mrb[0].mxu0
  %v1041 = vadd.f32 0.0, %v1040
  %v1042 = vpop.f32.mrb[0].mxu0
  %v1043 = vpop.f32.mrb[0].mxu0
  %v1044 = vadd.f32 0.0, %v1043
  %v1045 = vpop.f32.mrb[0].mxu0
  %1046 = vmatprep.mubr.bf16.mxu0 0
  %1047 = vmatmul.mubr.bf16.gmra.mrb[0].mxu0 %v950
  %v1048 = vpop.f32.mrb[0].mxu0
  %v1049 = vadd.f32 0.0, %v1048
  %v1050 = vpop.f32.mrb[0].mxu0
  %v1051 = vpop.f32.mrb[0].mxu0
  %v1052 = vadd.f32 0.0, %v1051
  %v1053 = vpop.f32.mrb[0].mxu0
  %1054 = vdwg.mxu0
  %v1055 = vmax.f32 %v993, 0.0
  %v1056 = vmax.f32 %v996, 0.0
  %v1057 = vmax.f32 %v1001, 0.0
  %v1058 = vmax.f32 %v1004, 0.0
  %v1059 = vmax.f32 %v1009, 0.0
  %v1060 = vmax.f32 %v1012, 0.0
  %v1061 = vmax.f32 %v1017, 0.0
  %v1062 = vmax.f32 %v1020, 0.0
  %v1063 = vmax.f32 %v1025, 0.0
  %v1064 = vmax.f32 %v1028, 0.0
  %v1065 = vmax.f32 %v1033, 0.0
  %v1066 = vmax.f32 %v1036, 0.0
  %v1067 = vmax.f32 %v1041, 0.0
  %v1068 = vmax.f32 %v1044, 0.0
  %v1069 = vmax.f32 %v1049, 0.0
  %v1070 = vmax.f32 %v1052, 0.0
  %v1071 = vld [vmem:[%s1 + $0x80] sm:$0xf]
  %v1072 = vld [vmem:[%s1 + $0x84] sm:$0xf]
  %v1073 = vld [vmem:[%s1 + $0x88] sm:$0xf]
  %v1074 = vld [vmem:[%s1 + $0x8c] sm:$0xf]
  %v1075 = vld [vmem:[%s1 + $0x90] sm:$0xf]
  %v1076 = vld [vmem:[%s1 + $0x94] sm:$0xf]
  %v1077 = vld [vmem:[%s1 + $0x98] sm:$0x1]
  %v1078 = vpack.c.bf16 %v1056, %v1055
  %v1079 = vpack.c.bf16 %v1058, %v1057
  %v1080 = vpack.c.bf16 %v1060, %v1059
  %v1081 = vpack.c.bf16 %v1062, %v1061
  %v1082 = vpack.c.bf16 %v1064, %v1063
  %v1083 = vpack.c.bf16 %v1066, %v1065
  %v1084 = vpack.c.bf16 %v1068, %v1067
  %v1085 = vpack.c.bf16 %v1070, %v1069
  %v1093 = vunpack.c.l.b16 %v1071
  %v1094 = vunpack.c.l.b16 %v1072
  %v1095 = vunpack.c.l.b16 %v1073
  %v1096 = vunpack.c.l.b16 %v1074
  %v1097 = vunpack.c.l.b16 %v1075
  %v1098 = vunpack.c.l.b16 %v1076
  %v1099 = vunpack.c.l.b16 %v1077
  %v1100 = vpack.c.b16 %v1094, %v1093
  %v1101 = vpack.c.b16 %v1096, %v1095
  %v1102 = vpack.c.b16 %v1098, %v1097
  %v1103 = vpack.c.b16 %v1099, %v1099
  %v1105 = vsel %vm750, %v1078, 0
  %v1108 = vsel %vm750, %v1079, 0
  %v1111 = vsel %vm750, %v1080, 0
  %v1114 = vsel %vm750, %v1081, 0
  %v1117 = vsel %vm750, %v1082, 0
  %v1120 = vsel %vm750, %v1083, 0
  %v1123 = vsel %vm750, %v1084, 0
  %v1126 = vsel %vm750, %v1085, 0
  %v1129 = vsel %vm750, %v1100, 0
  %v1132 = vsel %vm750, %v1101, 0
  %v1135 = vsel %vm750, %v1102, 0
  %v1138 = vsel %vm750, %v1103, 0
  %1140 = vmatprep.subr.bf16.mxu0 0
  %1141 = vmatpush1.bf16.xpose.msra.mxu0 %v1129
  %1142 = vmatprep.subr.bf16.mxu0 0
  %1143 = vmatpush1.bf16.xpose.msra.mxu0 %v1132
  %1144 = vmatprep.subr.bf16.mxu0 0
  %1145 = vmatpush1.bf16.xpose.msra.mxu0 %v1135
  %1146 = vmatprep.subr.bf16.mxu0 0
  %1147 = vmatpush1.bf16.xpose.msra.mxu0 %v1138
  %1148 = vmatprep.subr.bf16.mxu0 0
  %1149 = vmatpush1.bf16.xpose.msra.mxu0 0
  %1150 = vmatprep.subr.bf16.mxu0 0
  %1151 = vmatpush1.bf16.xpose.msra.mxu0 0
  %1152 = vmatprep.subr.bf16.mxu0 0
  %1153 = vmatpush1.bf16.xpose.msra.mxu0 0
  %1154 = vmatprep.subr.bf16.mxu0 0
  %1155 = vmatpush1.bf16.xpose.msra.mxu0 0
  %1156 = vmatprep.subr.bf16.mxu0 0
  %1157 = vmatpush1.bf16.xpose.msra.mxu0 0
  %1158 = vmatprep.subr.bf16.mxu0 0
  %1159 = vmatpush1.bf16.xpose.msra.mxu0 0
  %1160 = vmatprep.subr.bf16.mxu0 0
  %1161 = vmatpush1.bf16.xpose.msra.mxu0 0
  %1162 = vmatprep.subr.bf16.mxu0 0
  %1163 = vmatpush1.bf16.xpose.msra.mxu0 0
  %1164 = vmatprep.subr.bf16.mxu0 0
  %1165 = vmatpush1.bf16.xpose.msra.mxu0 0
  %1166 = vmatprep.subr.bf16.mxu0 0
  %1167 = vmatpush1.bf16.xpose.msra.mxu0 0
  %1168 = vmatprep.subr.bf16.mxu0 0
  %1169 = vmatpush1.bf16.xpose.msra.mxu0 0
  %1170 = vmatprep.subr.bf16.mxu0 0
  %1171 = vmatpush1.bf16.xpose.msra.mxu0 0
  %1172 = vmatprep.mubr.bf16.mxu0 0
  %1173 = vmatmul.mubr.bf16.gmra.mrb[0].mxu0 %v1105
  %v1174 = vpop.f32.mrb[0].mxu0
  %v1175 = vadd.f32 0.0, %v1174
  %v1176 = vpop.f32.mrb[0].mxu0
  %v1177 = vpop.f32.mrb[0].mxu0
  %v1178 = vadd.f32 0.0, %v1177
  %v1179 = vpop.f32.mrb[0].mxu0
  %1180 = vmatprep.mubr.bf16.mxu0 0
  %1181 = vmatmul.mubr.bf16.gmra.mrb[0].mxu0 %v1108
  %v1182 = vpop.f32.mrb[0].mxu0
  %v1183 = vadd.f32 0.0, %v1182
  %v1184 = vpop.f32.mrb[0].mxu0
  %v1185 = vpop.f32.mrb[0].mxu0
  %v1186 = vadd.f32 0.0, %v1185
  %v1187 = vpop.f32.mrb[0].mxu0
  %1188 = vmatprep.mubr.bf16.mxu0 0
  %1189 = vmatmul.mubr.bf16.gmra.mrb[0].mxu0 %v1111
  %v1190 = vpop.f32.mrb[0].mxu0
  %v1191 = vadd.f32 0.0, %v1190
  %v1192 = vpop.f32.mrb[0].mxu0
  %v1193 = vpop.f32.mrb[0].mxu0
  %v1194 = vadd.f32 0.0, %v1193
  %v1195 = vpop.f32.mrb[0].mxu0
  %1196 = vmatprep.mubr.bf16.mxu0 0
  %1197 = vmatmul.mubr.bf16.gmra.mrb[0].mxu0 %v1114
  %v1198 = vpop.f32.mrb[0].mxu0
  %v1199 = vadd.f32 0.0, %v1198
  %v1200 = vpop.f32.mrb[0].mxu0
  %v1201 = vpop.f32.mrb[0].mxu0
  %v1202 = vadd.f32 0.0, %v1201
  %v1203 = vpop.f32.mrb[0].mxu0
  %1204 = vmatprep.mubr.bf16.mxu0 0
  %1205 = vmatmul.mubr.bf16.gmra.mrb[0].mxu0 %v1117
  %v1206 = vpop.f32.mrb[0].mxu0
  %v1207 = vadd.f32 0.0, %v1206
  %v1208 = vpop.f32.mrb[0].mxu0
  %v1209 = vpop.f32.mrb[0].mxu0
  %v1210 = vadd.f32 0.0, %v1209
  %v1211 = vpop.f32.mrb[0].mxu0
  %1212 = vmatprep.mubr.bf16.mxu0 0
  %1213 = vmatmul.mubr.bf16.gmra.mrb[0].mxu0 %v1120
  %v1214 = vpop.f32.mrb[0].mxu0
  %v1215 = vadd.f32 0.0, %v1214
  %v1216 = vpop.f32.mrb[0].mxu0
  %v1217 = vpop.f32.mrb[0].mxu0
  %v1218 = vadd.f32 0.0, %v1217
  %v1219 = vpop.f32.mrb[0].mxu0
  %1220 = vmatprep.mubr.bf16.mxu0 0
  %1221 = vmatmul.mubr.bf16.gmra.mrb[0].mxu0 %v1123
  %v1222 = vpop.f32.mrb[0].mxu0
  %v1223 = vadd.f32 0.0, %v1222
  %v1224 = vpop.f32.mrb[0].mxu0
  %v1225 = vpop.f32.mrb[0].mxu0
  %v1226 = vadd.f32 0.0, %v1225
  %v1227 = vpop.f32.mrb[0].mxu0
  %1228 = vmatprep.mubr.bf16.mxu0 0
  %1229 = vmatmul.mubr.bf16.gmra.mrb[0].mxu0 %v1126
  %v1230 = vpop.f32.mrb[0].mxu0
  %v1231 = vadd.f32 0.0, %v1230
  %v1232 = vpop.f32.mrb[0].mxu0
  %v1233 = vpop.f32.mrb[0].mxu0
  %v1234 = vadd.f32 0.0, %v1233
  %v1235 = vpop.f32.mrb[0].mxu0
  %1236 = vdwg.mxu0
  %v1237 = vmax.f32 %v1175, 0.0
  %v1238 = vmax.f32 %v1178, 0.0
  %v1239 = vmax.f32 %v1183, 0.0
  %v1240 = vmax.f32 %v1186, 0.0
  %v1241 = vmax.f32 %v1191, 0.0
  %v1242 = vmax.f32 %v1194, 0.0
  %v1243 = vmax.f32 %v1199, 0.0
  %v1244 = vmax.f32 %v1202, 0.0
  %v1245 = vmax.f32 %v1207, 0.0
  %v1246 = vmax.f32 %v1210, 0.0
  %v1247 = vmax.f32 %v1215, 0.0
  %v1248 = vmax.f32 %v1218, 0.0
  %v1249 = vmax.f32 %v1223, 0.0
  %v1250 = vmax.f32 %v1226, 0.0
  %v1251 = vmax.f32 %v1231, 0.0
  %v1252 = vmax.f32 %v1234, 0.0
  %v1253 = vld [vmem:[%s1 + $0xa0] sm:$0xf]
  %v1254 = vld [vmem:[%s1 + $0xa4] sm:$0xf]
  %v1255 = vld [vmem:[%s1 + $0xa8] sm:$0xf]
  %v1256 = vld [vmem:[%s1 + $0xac] sm:$0xf]
  %v1257 = vld [vmem:[%s1 + $0xb0] sm:$0xf]
  %v1258 = vld [vmem:[%s1 + $0xb4] sm:$0x1]
  %v1259 = vpack.c.bf16 %v1238, %v1237
  %v1260 = vpack.c.bf16 %v1240, %v1239
  %v1261 = vpack.c.bf16 %v1242, %v1241
  %v1262 = vpack.c.bf16 %v1244, %v1243
  %v1263 = vpack.c.bf16 %v1246, %v1245
  %v1264 = vpack.c.bf16 %v1248, %v1247
  %v1265 = vpack.c.bf16 %v1250, %v1249
  %v1266 = vpack.c.bf16 %v1252, %v1251
  %v1273 = vunpack.c.l.b16 %v1253
  %v1274 = vunpack.c.l.b16 %v1254
  %v1275 = vunpack.c.l.b16 %v1255
  %v1276 = vunpack.c.l.b16 %v1256
  %v1277 = vunpack.c.l.b16 %v1257
  %v1278 = vunpack.c.l.b16 %v1258
  %v1279 = vpack.c.b16 %v1274, %v1273
  %v1280 = vpack.c.b16 %v1276, %v1275
  %v1281 = vpack.c.b16 %v1278, %v1277
  %v1283 = vsel %vm597, %v1259, 0
  %v1286 = vsel %vm597, %v1260, 0
  %v1289 = vsel %vm597, %v1261, 0
  %v1292 = vsel %vm597, %v1262, 0
  %v1295 = vsel %vm597, %v1263, 0
  %v1298 = vsel %vm597, %v1264, 0
  %v1301 = vsel %vm597, %v1265, 0
  %v1304 = vsel %vm597, %v1266, 0
  %v1307 = vsel %vm597, %v1279, 0
  %v1310 = vsel %vm597, %v1280, 0
  %v1313 = vsel %vm597, %v1281, 0
  %1315 = vmatprep.subr.bf16.mxu0 0
  %1316 = vmatpush1.bf16.xpose.msra.mxu0 %v1307
  %1317 = vmatprep.subr.bf16.mxu0 0
  %1318 = vmatpush1.bf16.xpose.msra.mxu0 %v1310
  %1319 = vmatprep.subr.bf16.mxu0 0
  %1320 = vmatpush1.bf16.xpose.msra.mxu0 %v1313
  %1321 = vmatprep.subr.bf16.mxu0 0
  %1322 = vmatpush1.bf16.xpose.msra.mxu0 0
  %1323 = vmatprep.subr.bf16.mxu0 0
  %1324 = vmatpush1.bf16.xpose.msra.mxu0 0
  %1325 = vmatprep.subr.bf16.mxu0 0
  %1326 = vmatpush1.bf16.xpose.msra.mxu0 0
  %1327 = vmatprep.subr.bf16.mxu0 0
  %1328 = vmatpush1.bf16.xpose.msra.mxu0 0
  %1329 = vmatprep.subr.bf16.mxu0 0
  %1330 = vmatpush1.bf16.xpose.msra.mxu0 0
  %1331 = vmatprep.subr.bf16.mxu0 0
  %1332 = vmatpush1.bf16.xpose.msra.mxu0 0
  %1333 = vmatprep.subr.bf16.mxu0 0
  %1334 = vmatpush1.bf16.xpose.msra.mxu0 0
  %1335 = vmatprep.subr.bf16.mxu0 0
  %1336 = vmatpush1.bf16.xpose.msra.mxu0 0
  %1337 = vmatprep.subr.bf16.mxu0 0
  %1338 = vmatpush1.bf16.xpose.msra.mxu0 0
  %1339 = vmatprep.subr.bf16.mxu0 0
  %1340 = vmatpush1.bf16.xpose.msra.mxu0 0
  %1341 = vmatprep.subr.bf16.mxu0 0
  %1342 = vmatpush1.bf16.xpose.msra.mxu0 0
  %1343 = vmatprep.subr.bf16.mxu0 0
  %1344 = vmatpush1.bf16.xpose.msra.mxu0 0
  %1345 = vmatprep.subr.bf16.mxu0 0
  %1346 = vmatpush1.bf16.xpose.msra.mxu0 0
  %1347 = vmatprep.mubr.bf16.mxu0 0
  %1348 = vmatmul.mubr.bf16.gmra.mrb[0].mxu0 %v1283
  %v1349 = vpop.f32.mrb[0].mxu0
  %v1350 = vadd.f32 0.0, %v1349
  %v1351 = vpop.f32.mrb[0].mxu0
  %v1352 = vpop.f32.mrb[0].mxu0
  %v1353 = vadd.f32 0.0, %v1352
  %v1354 = vpop.f32.mrb[0].mxu0
  %1355 = vmatprep.mubr.bf16.mxu0 0
  %1356 = vmatmul.mubr.bf16.gmra.mrb[0].mxu0 %v1286
  %v1357 = vpop.f32.mrb[0].mxu0
  %v1358 = vadd.f32 0.0, %v1357
  %v1359 = vpop.f32.mrb[0].mxu0
  %v1360 = vpop.f32.mrb[0].mxu0
  %v1361 = vadd.f32 0.0, %v1360
  %v1362 = vpop.f32.mrb[0].mxu0
  %1363 = vmatprep.mubr.bf16.mxu0 0
  %1364 = vmatmul.mubr.bf16.gmra.mrb[0].mxu0 %v1289
  %v1365 = vpop.f32.mrb[0].mxu0
  %v1366 = vadd.f32 0.0, %v1365
  %v1367 = vpop.f32.mrb[0].mxu0
  %v1368 = vpop.f32.mrb[0].mxu0
  %v1369 = vadd.f32 0.0, %v1368
  %v1370 = vpop.f32.mrb[0].mxu0
  %1371 = vmatprep.mubr.bf16.mxu0 0
  %1372 = vmatmul.mubr.bf16.gmra.mrb[0].mxu0 %v1292
  %v1373 = vpop.f32.mrb[0].mxu0
  %v1374 = vadd.f32 0.0, %v1373
  %v1375 = vpop.f32.mrb[0].mxu0
  %v1376 = vpop.f32.mrb[0].mxu0
  %v1377 = vadd.f32 0.0, %v1376
  %v1378 = vpop.f32.mrb[0].mxu0
  %1379 = vmatprep.mubr.bf16.mxu0 0
  %1380 = vmatmul.mubr.bf16.gmra.mrb[0].mxu0 %v1295
  %v1381 = vpop.f32.mrb[0].mxu0
  %v1382 = vadd.f32 0.0, %v1381
  %v1383 = vpop.f32.mrb[0].mxu0
  %v1384 = vpop.f32.mrb[0].mxu0
  %v1385 = vadd.f32 0.0, %v1384
  %v1386 = vpop.f32.mrb[0].mxu0
  %1387 = vmatprep.mubr.bf16.mxu0 0
  %1388 = vmatmul.mubr.bf16.gmra.mrb[0].mxu0 %v1298
  %v1389 = vpop.f32.mrb[0].mxu0
  %v1390 = vadd.f32 0.0, %v1389
  %v1391 = vpop.f32.mrb[0].mxu0
  %v1392 = vpop.f32.mrb[0].mxu0
  %v1393 = vadd.f32 0.0, %v1392
  %v1394 = vpop.f32.mrb[0].mxu0
  %1395 = vmatprep.mubr.bf16.mxu0 0
  %1396 = vmatmul.mubr.bf16.gmra.mrb[0].mxu0 %v1301
  %v1397 = vpop.f32.mrb[0].mxu0
  %v1398 = vadd.f32 0.0, %v1397
  %v1399 = vpop.f32.mrb[0].mxu0
  %v1400 = vpop.f32.mrb[0].mxu0
  %v1401 = vadd.f32 0.0, %v1400
  %v1402 = vpop.f32.mrb[0].mxu0
  %1403 = vmatprep.mubr.bf16.mxu0 0
  %1404 = vmatmul.mubr.bf16.gmra.mrb[0].mxu0 %v1304
  %v1405 = vpop.f32.mrb[0].mxu0
  %v1406 = vadd.f32 0.0, %v1405
  %v1407 = vpop.f32.mrb[0].mxu0
  %v1408 = vpop.f32.mrb[0].mxu0
  %v1409 = vadd.f32 0.0, %v1408
  %v1410 = vpop.f32.mrb[0].mxu0
  %1411 = vdwg.mxu0
  %v1412 = vmax.f32 %v1350, 0.0
  %v1413 = vmax.f32 %v1353, 0.0
  %v1414 = vmax.f32 %v1358, 0.0
  %v1415 = vmax.f32 %v1361, 0.0
  %v1416 = vmax.f32 %v1366, 0.0
  %v1417 = vmax.f32 %v1369, 0.0
  %v1418 = vmax.f32 %v1374, 0.0
  %v1419 = vmax.f32 %v1377, 0.0
  %v1420 = vmax.f32 %v1382, 0.0
  %v1421 = vmax.f32 %v1385, 0.0
  %v1422 = vmax.f32 %v1390, 0.0
  %v1423 = vmax.f32 %v1393, 0.0
  %v1424 = vmax.f32 %v1398, 0.0
  %v1425 = vmax.f32 %v1401, 0.0
  %v1426 = vmax.f32 %v1406, 0.0
  %v1427 = vmax.f32 %v1409, 0.0
  %v1428 = vld [vmem:[%s1 + $0xb8] sm:$0xf]
  %v1429 = vld [vmem:[%s1 + $0xbc] sm:$0xf]
  %v1430 = vld [vmem:[%s1 + $0xc0] sm:$0xf]
  %v1431 = vld [vmem:[%s1 + $0xc4] sm:$0xf]
  %v1432 = vld [vmem:[%s1 + $0xc8] sm:$0xf]
  %v1433 = vld [vmem:[%s1 + $0xcc] sm:$0xf]
  %v1434 = vld [vmem:[%s1 + $0xd0] sm:$0x7]
  %v1435 = vpack.c.bf16 %v1413, %v1412
  %v1436 = vpack.c.bf16 %v1415, %v1414
  %v1437 = vpack.c.bf16 %v1417, %v1416
  %v1438 = vpack.c.bf16 %v1419, %v1418
  %v1439 = vpack.c.bf16 %v1421, %v1420
  %v1440 = vpack.c.bf16 %v1423, %v1422
  %v1441 = vpack.c.bf16 %v1425, %v1424
  %v1442 = vpack.c.bf16 %v1427, %v1426
  %v1450 = vunpack.c.l.b16 %v1428
  %v1451 = vunpack.c.l.b16 %v1429
  %v1452 = vunpack.c.l.b16 %v1430
  %v1453 = vunpack.c.l.b16 %v1431
  %v1454 = vunpack.c.l.b16 %v1432
  %v1455 = vunpack.c.l.b16 %v1433
  %v1456 = vunpack.c.l.b16 %v1434
  %v1457 = vpack.c.b16 %v1451, %v1450
  %v1458 = vpack.c.b16 %v1453, %v1452
  %v1459 = vpack.c.b16 %v1455, %v1454
  %v1460 = vpack.c.b16 %v1456, %v1456
  %v1462 = vsel %vm428, %v1435, 0
  %v1465 = vsel %vm428, %v1436, 0
  %v1468 = vsel %vm428, %v1437, 0
  %v1471 = vsel %vm428, %v1438, 0
  %v1474 = vsel %vm428, %v1439, 0
  %v1477 = vsel %vm428, %v1440, 0
  %v1480 = vsel %vm428, %v1441, 0
  %v1483 = vsel %vm428, %v1442, 0
  %v1486 = vsel %vm428, %v1457, 0
  %v1489 = vsel %vm428, %v1458, 0
  %v1492 = vsel %vm428, %v1459, 0
  %v1495 = vsel %vm428, %v1460, 0
  %1497 = vmatprep.subr.bf16.mxu0 0
  %1498 = vmatpush1.bf16.xpose.msra.mxu0 %v1486
  %1499 = vmatprep.subr.bf16.mxu0 0
  %1500 = vmatpush1.bf16.xpose.msra.mxu0 %v1489
  %1501 = vmatprep.subr.bf16.mxu0 0
  %1502 = vmatpush1.bf16.xpose.msra.mxu0 %v1492
  %1503 = vmatprep.subr.bf16.mxu0 0
  %1504 = vmatpush1.bf16.xpose.msra.mxu0 %v1495
  %1505 = vmatprep.subr.bf16.mxu0 0
  %1506 = vmatpush1.bf16.xpose.msra.mxu0 0
  %1507 = vmatprep.subr.bf16.mxu0 0
  %1508 = vmatpush1.bf16.xpose.msra.mxu0 0
  %1509 = vmatprep.subr.bf16.mxu0 0
  %1510 = vmatpush1.bf16.xpose.msra.mxu0 0
  %1511 = vmatprep.subr.bf16.mxu0 0
  %1512 = vmatpush1.bf16.xpose.msra.mxu0 0
  %1513 = vmatprep.subr.bf16.mxu0 0
  %1514 = vmatpush1.bf16.xpose.msra.mxu0 0
  %1515 = vmatprep.subr.bf16.mxu0 0
  %1516 = vmatpush1.bf16.xpose.msra.mxu0 0
  %1517 = vmatprep.subr.bf16.mxu0 0
  %1518 = vmatpush1.bf16.xpose.msra.mxu0 0
  %1519 = vmatprep.subr.bf16.mxu0 0
  %1520 = vmatpush1.bf16.xpose.msra.mxu0 0
  %1521 = vmatprep.subr.bf16.mxu0 0
  %1522 = vmatpush1.bf16.xpose.msra.mxu0 0
  %1523 = vmatprep.subr.bf16.mxu0 0
  %1524 = vmatpush1.bf16.xpose.msra.mxu0 0
  %1525 = vmatprep.subr.bf16.mxu0 0
  %1526 = vmatpush1.bf16.xpose.msra.mxu0 0
  %1527 = vmatprep.subr.bf16.mxu0 0
  %1528 = vmatpush1.bf16.xpose.msra.mxu0 0
  %1529 = vmatprep.mubr.bf16.mxu0 0
  %1530 = vmatmul.mubr.bf16.gmra.mrb[0].mxu0 %v1462
  %v1531 = vpop.f32.mrb[0].mxu0
  %v1532 = vadd.f32 0.0, %v1531
  %v1533 = vpop.f32.mrb[0].mxu0
  %v1534 = vpop.f32.mrb[0].mxu0
  %v1535 = vadd.f32 0.0, %v1534
  %v1536 = vpop.f32.mrb[0].mxu0
  %1537 = vmatprep.mubr.bf16.mxu0 0
  %1538 = vmatmul.mubr.bf16.gmra.mrb[0].mxu0 %v1465
  %v1539 = vpop.f32.mrb[0].mxu0
  %v1540 = vadd.f32 0.0, %v1539
  %v1541 = vpop.f32.mrb[0].mxu0
  %v1542 = vpop.f32.mrb[0].mxu0
  %v1543 = vadd.f32 0.0, %v1542
  %v1544 = vpop.f32.mrb[0].mxu0
  %1545 = vmatprep.mubr.bf16.mxu0 0
  %1546 = vmatmul.mubr.bf16.gmra.mrb[0].mxu0 %v1468
  %v1547 = vpop.f32.mrb[0].mxu0
  %v1548 = vadd.f32 0.0, %v1547
  %v1549 = vpop.f32.mrb[0].mxu0
  %v1550 = vpop.f32.mrb[0].mxu0
  %v1551 = vadd.f32 0.0, %v1550
  %v1552 = vpop.f32.mrb[0].mxu0
  %1553 = vmatprep.mubr.bf16.mxu0 0
  %1554 = vmatmul.mubr.bf16.gmra.mrb[0].mxu0 %v1471
  %v1555 = vpop.f32.mrb[0].mxu0
  %v1556 = vadd.f32 0.0, %v1555
  %v1557 = vpop.f32.mrb[0].mxu0
  %v1558 = vpop.f32.mrb[0].mxu0
  %v1559 = vadd.f32 0.0, %v1558
  %v1560 = vpop.f32.mrb[0].mxu0
  %1561 = vmatprep.mubr.bf16.mxu0 0
  %1562 = vmatmul.mubr.bf16.gmra.mrb[0].mxu0 %v1474
  %v1563 = vpop.f32.mrb[0].mxu0
  %v1564 = vadd.f32 0.0, %v1563
  %v1565 = vpop.f32.mrb[0].mxu0
  %v1566 = vpop.f32.mrb[0].mxu0
  %v1567 = vadd.f32 0.0, %v1566
  %v1568 = vpop.f32.mrb[0].mxu0
  %1569 = vmatprep.mubr.bf16.mxu0 0
  %1570 = vmatmul.mubr.bf16.gmra.mrb[0].mxu0 %v1477
  %v1571 = vpop.f32.mrb[0].mxu0
  %v1572 = vadd.f32 0.0, %v1571
  %v1573 = vpop.f32.mrb[0].mxu0
  %v1574 = vpop.f32.mrb[0].mxu0
  %v1575 = vadd.f32 0.0, %v1574
  %v1576 = vpop.f32.mrb[0].mxu0
  %1577 = vmatprep.mubr.bf16.mxu0 0
  %1578 = vmatmul.mubr.bf16.gmra.mrb[0].mxu0 %v1480
  %v1579 = vpop.f32.mrb[0].mxu0
  %v1580 = vadd.f32 0.0, %v1579
  %v1581 = vpop.f32.mrb[0].mxu0
  %v1582 = vpop.f32.mrb[0].mxu0
  %v1583 = vadd.f32 0.0, %v1582
  %v1584 = vpop.f32.mrb[0].mxu0
  %1585 = vmatprep.mubr.bf16.mxu0 0
  %1586 = vmatmul.mubr.bf16.gmra.mrb[0].mxu0 %v1483
  %v1587 = vpop.f32.mrb[0].mxu0
  %v1588 = vadd.f32 0.0, %v1587
  %v1589 = vpop.f32.mrb[0].mxu0
  %v1590 = vpop.f32.mrb[0].mxu0
  %v1591 = vadd.f32 0.0, %v1590
  %v1592 = vpop.f32.mrb[0].mxu0
  %1593 = vdwg.mxu0
  %v1594 = vmax.f32 %v1532, 0.0
  %v1595 = vmax.f32 %v1535, 0.0
  %v1596 = vmax.f32 %v1540, 0.0
  %v1597 = vmax.f32 %v1543, 0.0
  %v1598 = vmax.f32 %v1548, 0.0
  %v1599 = vmax.f32 %v1551, 0.0
  %v1600 = vmax.f32 %v1556, 0.0
  %v1601 = vmax.f32 %v1559, 0.0
  %v1602 = vmax.f32 %v1564, 0.0
  %v1603 = vmax.f32 %v1567, 0.0
  %v1604 = vmax.f32 %v1572, 0.0
  %v1605 = vmax.f32 %v1575, 0.0
  %v1606 = vmax.f32 %v1580, 0.0
  %v1607 = vmax.f32 %v1583, 0.0
  %v1608 = vmax.f32 %v1588, 0.0
  %v1609 = vmax.f32 %v1591, 0.0
  %v1610 = vld [vmem:[%s1 + $0xd8] sm:$0xf]
  %v1611 = vld [vmem:[%s1 + $0xdc] sm:$0xf]
  %v1612 = vld [vmem:[%s1 + $0xe0] sm:$0xf]
  %v1613 = vld [vmem:[%s1 + $0xe4] sm:$0x7]
  %v1614 = vpack.c.bf16 %v1595, %v1594
  %v1615 = vpack.c.bf16 %v1597, %v1596
  %v1616 = vpack.c.bf16 %v1599, %v1598
  %v1617 = vpack.c.bf16 %v1601, %v1600
  %v1618 = vpack.c.bf16 %v1603, %v1602
  %v1619 = vpack.c.bf16 %v1605, %v1604
  %v1620 = vpack.c.bf16 %v1607, %v1606
  %v1621 = vpack.c.bf16 %v1609, %v1608
  %v1626 = vunpack.c.l.b16 %v1610
  %v1627 = vunpack.c.l.b16 %v1611
  %v1628 = vunpack.c.l.b16 %v1612
  %v1629 = vunpack.c.l.b16 %v1613
  %v1630 = vpack.c.b16 %v1627, %v1626
  %v1631 = vpack.c.b16 %v1629, %v1628
  %v1633 = vsel %vm248, %v1614, 0
  %v1636 = vsel %vm248, %v1615, 0
  %v1639 = vsel %vm248, %v1616, 0
  %v1642 = vsel %vm248, %v1617, 0
  %v1645 = vsel %vm248, %v1618, 0
  %v1648 = vsel %vm248, %v1619, 0
  %v1651 = vsel %vm248, %v1620, 0
  %v1654 = vsel %vm248, %v1621, 0
  %v1657 = vsel %vm248, %v1630, 0
  %v1660 = vsel %vm248, %v1631, 0
  %1662 = vmatprep.subr.bf16.mxu0 0
  %1663 = vmatpush1.bf16.xpose.msra.mxu0 %v1657
  %1664 = vmatprep.subr.bf16.mxu0 0
  %1665 = vmatpush1.bf16.xpose.msra.mxu0 %v1660
  %1666 = vmatprep.subr.bf16.mxu0 0
  %1667 = vmatpush1.bf16.xpose.msra.mxu0 0
  %1668 = vmatprep.subr.bf16.mxu0 0
  %1669 = vmatpush1.bf16.xpose.msra.mxu0 0
  %1670 = vmatprep.subr.bf16.mxu0 0
  %1671 = vmatpush1.bf16.xpose.msra.mxu0 0
  %1672 = vmatprep.subr.bf16.mxu0 0
  %1673 = vmatpush1.bf16.xpose.msra.mxu0 0
  %1674 = vmatprep.subr.bf16.mxu0 0
  %1675 = vmatpush1.bf16.xpose.msra.mxu0 0
  %1676 = vmatprep.subr.bf16.mxu0 0
  %1677 = vmatpush1.bf16.xpose.msra.mxu0 0
  %1678 = vmatprep.subr.bf16.mxu0 0
  %1679 = vmatpush1.bf16.xpose.msra.mxu0 0
  %1680 = vmatprep.subr.bf16.mxu0 0
  %1681 = vmatpush1.bf16.xpose.msra.mxu0 0
  %1682 = vmatprep.subr.bf16.mxu0 0
  %1683 = vmatpush1.bf16.xpose.msra.mxu0 0
  %1684 = vmatprep.subr.bf16.mxu0 0
  %1685 = vmatpush1.bf16.xpose.msra.mxu0 0
  %1686 = vmatprep.subr.bf16.mxu0 0
  %1687 = vmatpush1.bf16.xpose.msra.mxu0 0
  %1688 = vmatprep.subr.bf16.mxu0 0
  %1689 = vmatpush1.bf16.xpose.msra.mxu0 0
  %1690 = vmatprep.subr.bf16.mxu0 0
  %1691 = vmatpush1.bf16.xpose.msra.mxu0 0
  %1692 = vmatprep.subr.bf16.mxu0 0
  %1693 = vmatpush1.bf16.xpose.msra.mxu0 0
  %1694 = vmatprep.mubr.bf16.mxu0 0
  %1695 = vmatmul.mubr.bf16.gmra.mrb[0].mxu0 %v1633
  %v1696 = vpop.f32.mrb[0].mxu0
  %v1697 = vadd.f32 0.0, %v1696
  %v1698 = vpop.f32.mrb[0].mxu0
  %v1699 = vpop.f32.mrb[0].mxu0
  %v1700 = vadd.f32 0.0, %v1699
  %v1701 = vpop.f32.mrb[0].mxu0
  %1702 = vmatprep.mubr.bf16.mxu0 0
  %1703 = vmatmul.mubr.bf16.gmra.mrb[0].mxu0 %v1636
  %v1704 = vpop.f32.mrb[0].mxu0
  %v1705 = vadd.f32 0.0, %v1704
  %v1706 = vpop.f32.mrb[0].mxu0
  %v1707 = vpop.f32.mrb[0].mxu0
  %v1708 = vadd.f32 0.0, %v1707
  %v1709 = vpop.f32.mrb[0].mxu0
  %1710 = vmatprep.mubr.bf16.mxu0 0
  %1711 = vmatmul.mubr.bf16.gmra.mrb[0].mxu0 %v1639
  %v1712 = vpop.f32.mrb[0].mxu0
  %v1713 = vadd.f32 0.0, %v1712
  %v1714 = vpop.f32.mrb[0].mxu0
  %v1715 = vpop.f32.mrb[0].mxu0
  %v1716 = vadd.f32 0.0, %v1715
  %v1717 = vpop.f32.mrb[0].mxu0
  %1718 = vmatprep.mubr.bf16.mxu0 0
  %1719 = vmatmul.mubr.bf16.gmra.mrb[0].mxu0 %v1642
  %v1720 = vpop.f32.mrb[0].mxu0
  %v1721 = vadd.f32 0.0, %v1720
  %v1722 = vpop.f32.mrb[0].mxu0
  %v1723 = vpop.f32.mrb[0].mxu0
  %v1724 = vadd.f32 0.0, %v1723
  %v1725 = vpop.f32.mrb[0].mxu0
  %1726 = vmatprep.mubr.bf16.mxu0 0
  %1727 = vmatmul.mubr.bf16.gmra.mrb[0].mxu0 %v1645
  %v1728 = vpop.f32.mrb[0].mxu0
  %v1729 = vadd.f32 0.0, %v1728
  %v1730 = vpop.f32.mrb[0].mxu0
  %v1731 = vpop.f32.mrb[0].mxu0
  %v1732 = vadd.f32 0.0, %v1731
  %v1733 = vpop.f32.mrb[0].mxu0
  %1734 = vmatprep.mubr.bf16.mxu0 0
  %1735 = vmatmul.mubr.bf16.gmra.mrb[0].mxu0 %v1648
  %v1736 = vpop.f32.mrb[0].mxu0
  %v1737 = vadd.f32 0.0, %v1736
  %v1738 = vpop.f32.mrb[0].mxu0
  %v1739 = vpop.f32.mrb[0].mxu0
  %v1740 = vadd.f32 0.0, %v1739
  %v1741 = vpop.f32.mrb[0].mxu0
  %1742 = vmatprep.mubr.bf16.mxu0 0
  %1743 = vmatmul.mubr.bf16.gmra.mrb[0].mxu0 %v1651
  %v1744 = vpop.f32.mrb[0].mxu0
  %v1745 = vadd.f32 0.0, %v1744
  %v1746 = vpop.f32.mrb[0].mxu0
  %v1747 = vpop.f32.mrb[0].mxu0
  %v1748 = vadd.f32 0.0, %v1747
  %v1749 = vpop.f32.mrb[0].mxu0
  %1750 = vmatprep.mubr.bf16.mxu0 0
  %1751 = vmatmul.mubr.bf16.gmra.mrb[0].mxu0 %v1654
  %v1752 = vpop.f32.mrb[0].mxu0
  %v1753 = vadd.f32 0.0, %v1752
  %v1754 = vpop.f32.mrb[0].mxu0
  %v1755 = vpop.f32.mrb[0].mxu0
  %v1756 = vadd.f32 0.0, %v1755
  %v1757 = vpop.f32.mrb[0].mxu0
  %1758 = vdwg.mxu0
  %v1759 = vmul.f32 %v1697, 0.5
  %v1760 = vmul.f32 %v1700, 0.5
  %v1761 = vmul.f32 %v1705, 0.5
  %v1762 = vmul.f32 %v1708, 0.5
  %v1763 = vmul.f32 %v1713, 0.5
  %v1764 = vmul.f32 %v1716, 0.5
  %v1765 = vmul.f32 %v1721, 0.5
  %v1766 = vmul.f32 %v1724, 0.5
  %v1767 = vmul.f32 %v1729, 0.5
  %v1768 = vmul.f32 %v1732, 0.5
  %v1769 = vmul.f32 %v1737, 0.5
  %v1770 = vmul.f32 %v1740, 0.5
  %v1771 = vmul.f32 %v1745, 0.5
  %v1772 = vmul.f32 %v1748, 0.5
  %v1773 = vmul.f32 %v1753, 0.5
  %v1774 = vmul.f32 %v1756, 0.5
  %v1775 = vtanh.pop %v1759
  %v1776 = vtanh.pop %v1760
  %v1777 = vtanh.pop %v1761
  %v1778 = vtanh.pop %v1762
  %v1779 = vtanh.pop %v1763
  %v1780 = vtanh.pop %v1764
  %v1781 = vtanh.pop %v1765
  %v1782 = vtanh.pop %v1766
  %v1783 = vtanh.pop %v1767
  %v1784 = vtanh.pop %v1768
  %v1785 = vtanh.pop %v1769
  %v1786 = vtanh.pop %v1770
  %v1787 = vtanh.pop %v1771
  %v1788 = vtanh.pop %v1772
  %v1789 = vtanh.pop %v1773
  %v1790 = vtanh.pop %v1774
  %v1791 = vmul.f32 %v1775, 0.5
  %v1792 = vmul.f32 %v1776, 0.5
  %v1793 = vmul.f32 %v1777, 0.5
  %v1794 = vmul.f32 %v1778, 0.5
  %v1795 = vmul.f32 %v1779, 0.5
  %v1796 = vmul.f32 %v1780, 0.5
  %v1797 = vmul.f32 %v1781, 0.5
  %v1798 = vmul.f32 %v1782, 0.5
  %v1799 = vmul.f32 %v1783, 0.5
  %v1800 = vmul.f32 %v1784, 0.5
  %v1801 = vmul.f32 %v1785, 0.5
  %v1802 = vmul.f32 %v1786, 0.5
  %v1803 = vmul.f32 %v1787, 0.5
  %v1804 = vmul.f32 %v1788, 0.5
  %v1805 = vmul.f32 %v1789, 0.5
  %v1806 = vmul.f32 %v1790, 0.5
  %v1807 = vadd.f32 %v1791, 0.5
  %v1808 = vadd.f32 %v1792, 0.5
  %v1809 = vadd.f32 %v1793, 0.5
  %v1810 = vadd.f32 %v1794, 0.5
  %v1811 = vadd.f32 %v1795, 0.5
  %v1812 = vadd.f32 %v1796, 0.5
  %v1813 = vadd.f32 %v1797, 0.5
  %v1814 = vadd.f32 %v1798, 0.5
  %v1815 = vadd.f32 %v1799, 0.5
  %v1816 = vadd.f32 %v1800, 0.5
  %v1817 = vadd.f32 %v1801, 0.5
  %v1818 = vadd.f32 %v1802, 0.5
  %v1819 = vadd.f32 %v1803, 0.5
  %v1820 = vadd.f32 %v1804, 0.5
  %v1821 = vadd.f32 %v1805, 0.5
  %v1822 = vadd.f32 %v1806, 0.5
  %1823 = vst.msk [vmem:[%s2] sm:$0xff] %vm69, %v1807
  %1824 = vst.msk [vmem:[%s2 + $0x8] sm:$0xff] %vm69, %v1808
  %1825 = vst.msk [vmem:[%s2 + $0x10] sm:$0xff] %vm69, %v1809
  %1826 = vst.msk [vmem:[%s2 + $0x18] sm:$0xff] %vm69, %v1810
  %1827 = vst.msk [vmem:[%s2 + $0x20] sm:$0xff] %vm69, %v1811
  %1828 = vst.msk [vmem:[%s2 + $0x28] sm:$0xff] %vm69, %v1812
  %1829 = vst.msk [vmem:[%s2 + $0x30] sm:$0xff] %vm69, %v1813
  %1830 = vst.msk [vmem:[%s2 + $0x38] sm:$0xff] %vm69, %v1814
  %1831 = vst.msk [vmem:[%s2 + $0x40] sm:$0xff] %vm69, %v1815
  %1832 = vst.msk [vmem:[%s2 + $0x48] sm:$0xff] %vm69, %v1816
  %1833 = vst.msk [vmem:[%s2 + $0x50] sm:$0xff] %vm69, %v1817
  %1834 = vst.msk [vmem:[%s2 + $0x58] sm:$0xff] %vm69, %v1818
  %1835 = vst.msk [vmem:[%s2 + $0x60] sm:$0xff] %vm69, %v1819
  %1836 = vst.msk [vmem:[%s2 + $0x68] sm:$0xff] %vm69, %v1820
  %1837 = vst.msk [vmem:[%s2 + $0x70] sm:$0xff] %vm69, %v1821
  %1838 = vst.msk [vmem:[%s2 + $0x78] sm:$0xff] %vm69, %v1822
  // Predicated region
  $region10: #{cae2_forward.1} parent=0 // pred_check
    _
  $region11: #{cae2_forward.1} parent=0 // pred_check_branch
    %1840 = sbr.rel (0) target = $region13
  $region12: #{cae2_forward.1} parent=0 // pred_region
    _
  $region13: #{cae2_forward.1} parent=0 // pred_fallthru
    _
  // Predicated region
  $region14: #{cae2_forward.1} parent=0 // pred_check
    _
  $region15: #{cae2_forward.1} parent=0 // pred_check_branch
    %1842 = sbr.rel (0) target = $region17
  $region16: #{cae2_forward.1} parent=0 // pred_region
    _
  $region17: #{cae2_forward.1} parent=0 // pred_fallthru
    _
  // Predicated region
  $region18: #{cae2_forward.1} parent=0 // pred_check
    _
  $region19: #{cae2_forward.1} parent=0 // pred_check_branch
    %1844 = sbr.rel (0) target = $region21
  $region20: #{cae2_forward.1} parent=0 // pred_region
    _
  $region21: #{cae2_forward.1} parent=0 // pred_fallthru
    _
  // Predicated region
  $region22: #{cae2_forward.1} parent=0 // pred_check
    _
  $region23: #{cae2_forward.1} parent=0 // pred_check_branch
    %1846 = sbr.rel (0) target = $region25
  $region24: #{cae2_forward.1} parent=0 // pred_region
    _
  $region25: #{cae2_forward.1} parent=0 // pred_fallthru
    _

</llo_original>
